<compile_context>
chip_gen: v5e
topology: v5e:2x2
jax: 0.10.0
libtpu: 0.0.40
codegen_flags: <defaults>
</compile_context>

<pallas_src>
import functools

import jax
import jax.numpy as jnp
from jax.experimental import pallas as pl
from jax.experimental.pallas import tpu as pltpu


# ----------------------------------------------------------------------------
# Kernel A: downsample -> rfft -> ResNet1D -> irfft -> upsample (per batch)
# ----------------------------------------------------------------------------
def _gen_core_kernel(x_ref,
                     w1_ref, b1_ref, w2_ref, b2_ref, w3_ref, dftc_ref, dfts_ref,
                     wi_re_ref, wi_im_ref, bi_ref,
                     wa_ref, ba_ref, wb_ref, bb_ref, wo_ref,
                     idc_ref, ids_ref,
                     wt1_ref, b1u_ref, wt2_ref, b2u_ref, w3blk_ref,
                     o_ref, *, n_blocks):
    f32, bf16 = jnp.float32, jnp.bfloat16

    # ---- ds[0] Conv1d(1,dim,5,5)+BN+tanh and ds[1] Conv1d(dim,dim,4,4)+BN+tanh
    #      fused into two bf16 matmuls over the (Ld, 20) time-row layout.
    xb = x_ref[...].astype(bf16)                                        # (Ld, 20)
    h1 = jnp.tanh(jnp.dot(xb, w1_ref[...], preferred_element_type=f32)
                  + b1_ref[...]).astype(bf16)                           # (Ld, 4*dim)
    h2 = jnp.tanh(jnp.dot(h1, w2_ref[...], preferred_element_type=f32)
                  + b2_ref[...]).astype(bf16)                           # (Ld, dim)

    # ---- ds[2] Conv1d(dim,1,1) applied FIRST (reassociation), then the rfft
    #      becomes two DFT matvecs on the 1-channel signal.
    s = jnp.dot(h2, w3_ref[...], preferred_element_type=f32).astype(bf16)    # (Ld, 1)
    re_col = jnp.dot(dftc_ref[...], s, preferred_element_type=f32)           # (F, 1)
    im_col = jnp.dot(dfts_ref[...], s, preferred_element_type=f32)           # (F, 1)

    # ---- ResNet1D(2, 2, dim, 8): whole stack fused, activation stays in vregs.
    # TODO(synk): ResNet1D source is not provided upstream; implemented as a
    # 1x1-conv residual stack (in-proj 2->dim, n blocks of conv+BN+tanh with
    # skip, out-proj dim->2).
    r = jnp.tanh(re_col * wi_re_ref[...] + im_col * wi_im_ref[...] + bi_ref[...])
    for i in range(n_blocks):
        hA = jnp.tanh(jnp.dot(r.astype(bf16), wa_ref[i],
                              preferred_element_type=f32) + ba_ref[i]).astype(bf16)
        r = jnp.tanh(jnp.dot(hA, wb_ref[i], preferred_element_type=f32)
                     + bb_ref[i] + r)
    ro = jnp.dot(r.astype(bf16), wo_ref[...], preferred_element_type=f32)    # (F, 2)
    re2 = ro[:, 0:1].astype(bf16)
    im2 = ro[:, 1:2].astype(bf16)

    # ---- onesided irfft back to length Ld (IDFT matvecs).
    ifft_col = (jnp.dot(idc_ref[...], re2, preferred_element_type=f32)
                + jnp.dot(ids_ref[...], im2, preferred_element_type=f32))    # (Ld, 1)

    # ---- us[0] ConvT(1,dim,4,4)+BN+tanh (elementwise outer product),
    #      us[1] ConvT(dim,dim,5,5)+BN+tanh, us[2] Conv1d(dim,1,1).
    #      Written directly in time order: o[t, 5k+j] = up_sample[20 t + 5 k + j].
    for k in range(4):
        u1k = jnp.tanh(ifft_col * wt1_ref[k] + b1u_ref[...]).astype(bf16)    # (Ld, dim)
        u2k = jnp.tanh(jnp.dot(u1k, wt2_ref[...], preferred_element_type=f32)
                       + b2u_ref[...]).astype(bf16)                          # (Ld, 5*dim)
        upk = jnp.dot(u2k, w3blk_ref[...], preferred_element_type=f32)       # (Ld, 5)
        o_ref[:, 5 * k:5 * (k + 1)] = upk.astype(o_ref.dtype)


# ----------------------------------------------------------------------------
# Kernel B: deGibbs Conv1d(1,1,Kd,1,(Kd-1)//2) + tanh as a banded conv over
#           256-wide rows (5 shifted bf16 band matmuls, f32 accumulate).
# ----------------------------------------------------------------------------
def _degibbs_kernel(rows_ref, wd_ref, o_ref, *, Lr, n_shift):
    f32 = jnp.float32
    acc = jnp.dot(rows_ref[0:Lr, :], wd_ref[0], preferred_element_type=f32)
    for d in range(1, n_shift):
        acc = acc + jnp.dot(rows_ref[d:d + Lr, :], wd_ref[d],
                            preferred_element_type=f32)
    o_ref[...] = jnp.tanh(acc).astype(o_ref.dtype)


# ----------------------------------------------------------------------------
# Deterministic raw parameters (shapes from Generator.__init__, all bias=False)
# ----------------------------------------------------------------------------
def init_params(key, dim=32, n_res_blocks=8, degibbs_k=1001):
    keys = jax.random.split(key, 96)
    it = iter(keys)

    def w(shape, s=0.05):
        return s * jax.random.normal(next(it), shape, jnp.float32)

    def bn(c):
        # BatchNorm folded in eval mode: scale = g/sqrt(var+eps), shift = b - mean*scale
        gamma = 1.0 + 0.1 * jax.random.normal(next(it), (c,), jnp.float32)
        beta = 0.05 * jax.random.normal(next(it), (c,), jnp.float32)
        mean = jnp.zeros((c,), jnp.float32)
        var = jnp.ones((c,), jnp.float32)
        s = gamma / jnp.sqrt(var + 1e-5)
        b = beta - mean * s
        return s, b

    p = {}
    p["ds1_w"] = w((dim, 1, 5));   p["ds1_bn"] = bn(dim)
    p["ds2_w"] = w((dim, dim, 4)); p["ds2_bn"] = bn(dim)
    p["ds3_w"] = w((1, dim, 1))
    p["res_in_w"] = w((dim, 2, 1)); p["res_in_bn"] = bn(dim)
    blocks = []
    for _ in range(n_res_blocks):
        blocks.append(dict(w1=w((dim, dim, 1)), bn1=bn(dim),
                           w2=w((dim, dim, 1)), bn2=bn(dim)))
    p["res_blocks"] = blocks
    p["res_out_w"] = w((2, dim, 1))
    p["us1_w"] = w((1, dim, 4));   p["us1_bn"] = bn(dim)
    p["us2_w"] = w((dim, dim, 5)); p["us2_bn"] = bn(dim)
    p["us3_w"] = w((1, dim, 1))
    p["degibbs_w"] = w((1, 1, degibbs_k), s=0.01)
    return p


# ----------------------------------------------------------------------------
# Static precompute (runs ONCE, outside the jitted forward): BN folding,
# block-diagonal ds/us weights, DFT/IDFT matrices (bf16), banded deGibbs weights.
# ----------------------------------------------------------------------------
def prepare_params(p, *, dim, L, band_w=256):
    f32, bf16 = jnp.float32, jnp.bfloat16
    assert L % 20 == 0, "L must be a multiple of 20 (stride-5 then stride-4)"
    Ld = L // 20
    F = Ld // 2 + 1

    s1, b1 = p["ds1_bn"]
    s2, b2 = p["ds2_bn"]
    si, bi = p["res_in_bn"]
    sU1, bU1 = p["us1_bn"]
    sU2, bU2 = p["us2_bn"]

    w = {}
    # ds[0] Conv1d(1,dim,5,5)+BN folded, phase-block-diagonal over the 4 taps of
    # ds[1]: h1[t, k*dim+c] = tanh(sum_j x[20t+5k+j] * w1[c,0,j] * s1[c] + b1[c])
    base1 = p["ds1_w"][:, 0, :].T * s1[None, :]                         # (5, dim)
    w["w1"] = jnp.kron(jnp.eye(4, dtype=f32), base1).astype(bf16)       # (20, 4*dim)
    w["b1"] = jnp.tile(b1, 4).reshape(1, 4 * dim).astype(f32)
    # ds[1] Conv1d(dim,dim,4,4)+BN folded: (4*dim, dim), row index k*dim + c_in.
    w["w2"] = ((jnp.transpose(p["ds2_w"], (2, 1, 0)) * s2[None, None, :])
               .reshape(4 * dim, dim).astype(bf16))
    w["b2"] = b2.reshape(1, dim).astype(f32)
    # ds[2] Conv1d(dim,1,1).
    w["w3"] = p["ds3_w"][0].astype(bf16)                                # (dim, 1)
    # rfft over the last dim (2-D rfft of a (1, Ld) signal == 1-D rfft).
    t = jnp.arange(Ld, dtype=f32)
    f = jnp.arange(F, dtype=f32)
    ang = 2.0 * jnp.pi * f[:, None] * t[None, :] / Ld                   # (F, Ld)
    w["dftc"] = jnp.cos(ang).astype(bf16)
    w["dfts"] = (-jnp.sin(ang)).astype(bf16)
    # ResNet1D placeholder (1x1 convs), BN folded.
    w["wi_re"] = (p["res_in_w"][:, 0, 0] * si).reshape(1, dim).astype(f32)
    w["wi_im"] = (p["res_in_w"][:, 1, 0] * si).reshape(1, dim).astype(f32)
    w["bi"] = bi.reshape(1, dim).astype(f32)
    was, bas, wbs, bbs = [], [], [], []
    for blk in p["res_blocks"]:
        sA, bA = blk["bn1"]
        sB, bB = blk["bn2"]
        was.append(blk["w1"][:, :, 0].T * sA[None, :]); bas.append(bA.reshape(1, dim))
        wbs.append(blk["w2"][:, :, 0].T * sB[None, :]); bbs.append(bB.reshape(1, dim))
    w["wa"] = jnp.stack(was).astype(bf16)                               # (nb, dim, dim)
    w["ba"] = jnp.stack(bas).astype(f32)                                # (nb, 1, dim)
    w["wb"] = jnp.stack(wbs).astype(bf16)
    w["bb"] = jnp.stack(bbs).astype(f32)
    # out-proj dim->2 merged into one matmul: columns = [re, im].
    w["wo"] = jnp.stack([p["res_out_w"][0, :, 0],
                         p["res_out_w"][1, :, 0]], axis=1).astype(bf16)  # (dim, 2)
    # onesided irfft back to length Ld (DC/Nyquist imag parts ignored, C2R style).
    idx = jnp.arange(F)
    wf = jnp.where((idx == 0) | ((Ld % 2 == 0) & (idx == Ld // 2)), 1.0, 2.0).astype(f32)
    iang = 2.0 * jnp.pi * t[:, None] * f[None, :] / Ld                  # (Ld, F)
    w["idc"] = (wf[None, :] * jnp.cos(iang) / Ld).astype(bf16)
    w["ids"] = (-wf[None, :] * jnp.sin(iang) / Ld).astype(bf16)
    # us[0] ConvTranspose1d(1,dim,4,4)+BN folded -> (4, 1, dim) elementwise rows.
    w["wt1"] = (p["us1_w"][0].T * sU1[None, :]).reshape(4, 1, dim).astype(f32)
    w["b1u"] = bU1.reshape(1, dim).astype(f32)
    # us[1] ConvTranspose1d(dim,dim,5,5)+BN folded -> (dim, 5*dim), col j*dim+o.
    w["wt2"] = ((jnp.transpose(p["us2_w"], (0, 2, 1)) * sU2[None, None, :])
                .reshape(dim, 5 * dim).astype(bf16))
    w["b2u"] = jnp.tile(bU2, 5).reshape(1, 5 * dim).astype(f32)
    # us[2] Conv1d(dim,1,1) as a block-diagonal (5*dim, 5) projection.
    w["w3blk"] = jnp.kron(jnp.eye(5, dtype=f32),
                          p["us3_w"][0, :, 0][:, None]).astype(bf16)
    # deGibbs banded weights in the band_w-wide-row layout:
    #   out[W t + c] = sum_d sum_c' rows_padded[t + d, c'] * Wd[d][c', c]
    kw = p["degibbs_w"][0, 0]
    Kd = kw.shape[0]
    pad = (Kd - 1) // 2
    W = band_w
    pad_lo = -(-pad // W)
    pad_hi = ((W - 1) + (Kd - 1) - pad) // W
    n_shift = pad_lo + 1 + pad_hi
    d = (jnp.arange(n_shift) - pad_lo)[:, None, None]
    c_src = jnp.arange(W)[None, :, None]
    c_dst = jnp.arange(W)[None, None, :]
    m = W * d + c_src + pad - c_dst
    valid = (m >= 0) & (m <= Kd - 1)
    w["wd"] = jnp.where(valid, kw[jnp.clip(m, 0, Kd - 1)], 0.0).astype(bf16)

    Lr = -(-L // W)
    cfg = dict(dim=dim, L=L, Ld=Ld, F=F, W=W, Lr=Lr,
               pad_lo=pad_lo, pad_hi=pad_hi, n_shift=n_shift,
               n_blocks=len(p["res_blocks"]))
    return {"w": w, "cfg": cfg}


_WEIGHT_ORDER = ("w1", "b1", "w2", "b2", "w3", "dftc", "dfts",
                 "wi_re", "wi_im", "bi", "wa", "ba", "wb", "bb", "wo",
                 "idc", "ids", "wt1", "b1u", "wt2", "b2u", "w3blk")


def _const_spec(a):
    rank = a.ndim
    return pl.BlockSpec(a.shape, lambda b, _r=rank: (0,) * _r)


# ----------------------------------------------------------------------------
# Generator forward: exactly two fused pallas_calls, no transpose glue.
# ----------------------------------------------------------------------------
def generator_forward(x, prep):
    w, cfg = prep["w"], prep["cfg"]
    L, Ld, W, Lr = cfg["L"], cfg["Ld"], cfg["W"], cfg["Lr"]
    pad_lo, pad_hi, n_shift = cfg["pad_lo"], cfg["pad_hi"], cfg["n_shift"]
    nb = cfg["n_blocks"]
    f32, bf16 = jnp.float32, jnp.bfloat16

    N = x.shape[0]
    assert x.shape == (N, 1, L), x.shape

    # Free, contiguous reshape: row t holds samples 20t .. 20t+19.
    x_rows = x.astype(f32).reshape(N, Ld, 20)

    weight_args = [w[name] for name in _WEIGHT_ORDER]
    in_specs = ([pl.BlockSpec((None, Ld, 20), lambda b: (b, 0, 0))]
                + [_const_spec(a) for a in weight_args])

    up_rows = pl.pallas_call(
        functools.partial(_gen_core_kernel, n_blocks=nb),
        out_shape=jax.ShapeDtypeStruct((N, Ld, 20), bf16),
        grid=(N,),
        in_specs=in_specs,
        out_specs=pl.BlockSpec((None, Ld, 20), lambda b: (b, 0, 0)),
        compiler_params=pltpu.CompilerParams(
            dimension_semantics=("parallel",),
            vmem_limit_bytes=48 * 1024 * 1024),
    )(x_rows, *weight_args)

    # Time-ordered (N, L) view is a free reshape; one cheap pad supplies both the
    # band halo (pad_lo/pad_hi rows) and the tail to a multiple of W, in bf16.
    up = up_rows.reshape(N, L)
    Lpad = Lr * W
    R = Lr + pad_lo + pad_hi
    rows = jnp.pad(up, ((0, 0), (pad_lo * W, (Lpad - L) + pad_hi * W))).reshape(N, R, W)

    outB = pl.pallas_call(
        functools.partial(_degibbs_kernel, Lr=Lr, n_shift=n_shift),
        out_shape=jax.ShapeDtypeStruct((N, Lr, W), f32),
        grid=(N,),
        in_specs=[pl.BlockSpec((None, R, W), lambda b: (b, 0, 0)),
                  _const_spec(w["wd"])],
        out_specs=pl.BlockSpec((None, Lr, W), lambda b: (b, 0, 0)),
        compiler_params=pltpu.CompilerParams(
            dimension_semantics=("parallel",),
            vmem_limit_bytes=48 * 1024 * 1024),
    )(rows, w["wd"])

    return outB.reshape(N, Lpad)[:, :L].reshape(N, 1, L)


if __name__ == "__main__":
    key = jax.random.PRNGKey(0)
    kp, kx = jax.random.split(key)

    dim = 32            # module default is 128; small for the smoke test
    N, L = 2, 1280      # L must be a multiple of 20 (stride-5 then stride-4)

    raw = init_params(kp, dim=dim)
    prep = prepare_params(raw, dim=dim, L=L)     # static precompute, outside jit
    x = jax.random.normal(kx, (N, 1, L), jnp.float32)

    fwd = jax.jit(functools.partial(generator_forward, prep=prep))
    out = jax.block_until_ready(fwd(x))

    assert out.shape == (N, 1, L), out.shape
    assert bool(jnp.all(jnp.isfinite(out)))
    print("KERNEL_OK")
</pallas_src>

<mosaic_0001>
module attributes {stable_mosaic.version = 11 : i64} {
  func.func @_gen_core_kernel(%arg0: i32, %arg1: memref<1x64x20xf32, #tpu.memory_space<vmem>>, %arg2: memref<20x128xbf16, #tpu.memory_space<vmem>>, %arg3: memref<1x128xf32, #tpu.memory_space<vmem>>, %arg4: memref<128x32xbf16, #tpu.memory_space<vmem>>, %arg5: memref<1x32xf32, #tpu.memory_space<vmem>>, %arg6: memref<32x1xbf16, #tpu.memory_space<vmem>>, %arg7: memref<33x64xbf16, #tpu.memory_space<vmem>>, %arg8: memref<33x64xbf16, #tpu.memory_space<vmem>>, %arg9: memref<1x32xf32, #tpu.memory_space<vmem>>, %arg10: memref<1x32xf32, #tpu.memory_space<vmem>>, %arg11: memref<1x32xf32, #tpu.memory_space<vmem>>, %arg12: memref<8x32x32xbf16, #tpu.memory_space<vmem>>, %arg13: memref<8x1x32xf32, #tpu.memory_space<vmem>>, %arg14: memref<8x32x32xbf16, #tpu.memory_space<vmem>>, %arg15: memref<8x1x32xf32, #tpu.memory_space<vmem>>, %arg16: memref<32x2xbf16, #tpu.memory_space<vmem>>, %arg17: memref<64x33xbf16, #tpu.memory_space<vmem>>, %arg18: memref<64x33xbf16, #tpu.memory_space<vmem>>, %arg19: memref<4x1x32xf32, #tpu.memory_space<vmem>>, %arg20: memref<1x32xf32, #tpu.memory_space<vmem>>, %arg21: memref<32x160xbf16, #tpu.memory_space<vmem>>, %arg22: memref<1x160xf32, #tpu.memory_space<vmem>>, %arg23: memref<160x5xbf16, #tpu.memory_space<vmem>>, %arg24: memref<1x64x20xbf16, #tpu.memory_space<vmem>>) attributes {dimension_semantics = [#tpu.dimension_semantics<parallel>], iteration_bounds = array<i64: 2>, scalar_prefetch = 0 : i64, scratch_operands = 0 : i64, tpu.core_type = #tpu.core_type<tc>, window_params = [{transform_indices = @transform_0, window_bounds = array<i64: 1, 64, 20>}, {pipeline_mode = #tpu.pipeline_mode<synchronous>, transform_indices = @transform_1, window_bounds = array<i64: 20, 128>}, {pipeline_mode = #tpu.pipeline_mode<synchronous>, transform_indices = @transform_2, window_bounds = array<i64: 1, 128>}, {pipeline_mode = #tpu.pipeline_mode<synchronous>, transform_indices = @transform_3, window_bounds = array<i64: 128, 32>}, {pipeline_mode = #tpu.pipeline_mode<synchronous>, transform_indices = @transform_4, window_bounds = array<i64: 1, 32>}, {pipeline_mode = #tpu.pipeline_mode<synchronous>, transform_indices = @transform_5, window_bounds = array<i64: 32, 1>}, {pipeline_mode = #tpu.pipeline_mode<synchronous>, transform_indices = @transform_6, window_bounds = array<i64: 33, 64>}, {pipeline_mode = #tpu.pipeline_mode<synchronous>, transform_indices = @transform_7, window_bounds = array<i64: 33, 64>}, {pipeline_mode = #tpu.pipeline_mode<synchronous>, transform_indices = @transform_8, window_bounds = array<i64: 1, 32>}, {pipeline_mode = #tpu.pipeline_mode<synchronous>, transform_indices = @transform_9, window_bounds = array<i64: 1, 32>}, {pipeline_mode = #tpu.pipeline_mode<synchronous>, transform_indices = @transform_10, window_bounds = array<i64: 1, 32>}, {pipeline_mode = #tpu.pipeline_mode<synchronous>, transform_indices = @transform_11, window_bounds = array<i64: 8, 32, 32>}, {pipeline_mode = #tpu.pipeline_mode<synchronous>, transform_indices = @transform_12, window_bounds = array<i64: 8, 1, 32>}, {pipeline_mode = #tpu.pipeline_mode<synchronous>, transform_indices = @transform_13, window_bounds = array<i64: 8, 32, 32>}, {pipeline_mode = #tpu.pipeline_mode<synchronous>, transform_indices = @transform_14, window_bounds = array<i64: 8, 1, 32>}, {pipeline_mode = #tpu.pipeline_mode<synchronous>, transform_indices = @transform_15, window_bounds = array<i64: 32, 2>}, {pipeline_mode = #tpu.pipeline_mode<synchronous>, transform_indices = @transform_16, window_bounds = array<i64: 64, 33>}, {pipeline_mode = #tpu.pipeline_mode<synchronous>, transform_indices = @transform_17, window_bounds = array<i64: 64, 33>}, {pipeline_mode = #tpu.pipeline_mode<synchronous>, transform_indices = @transform_18, window_bounds = array<i64: 4, 1, 32>}, {pipeline_mode = #tpu.pipeline_mode<synchronous>, transform_indices = @transform_19, window_bounds = array<i64: 1, 32>}, {pipeline_mode = #tpu.pipeline_mode<synchronous>, transform_indices = @transform_20, window_bounds = array<i64: 32, 160>}, {pipeline_mode = #tpu.pipeline_mode<synchronous>, transform_indices = @transform_21, window_bounds = array<i64: 1, 160>}, {pipeline_mode = #tpu.pipeline_mode<synchronous>, transform_indices = @transform_22, window_bounds = array<i64: 160, 5>}, {transform_indices = @transform_23, window_bounds = array<i64: 1, 64, 20>}]} {
    %c0 = arith.constant 0 : index
    %c0_0 = arith.constant 0 : index
    %c0_1 = arith.constant 0 : index
    %0 = vector.load %arg1[%c0, %c0_0, %c0_1] : memref<1x64x20xf32, #tpu.memory_space<vmem>>, vector<1x64x20xf32>
    %1 = vector.shape_cast %0 : vector<1x64x20xf32> to vector<64x20xf32>
    %2 = arith.truncf %1 : vector<64x20xf32> to vector<64x20xbf16>
    %c0_2 = arith.constant 0 : index
    %c0_3 = arith.constant 0 : index
    %3 = vector.load %arg2[%c0_2, %c0_3] : memref<20x128xbf16, #tpu.memory_space<vmem>>, vector<20x128xbf16>
    %cst = arith.constant dense<0.000000e+00> : vector<64x128xf32>
    %4 = tpu.matmul %2, %3, %cst {dimension_numbers = #tpu.dot_dimension_numbers<[1], [0], [0], [1], [0, 0, 1, 1], [], []>} : vector<64x20xbf16>, vector<20x128xbf16>, vector<64x128xf32> -> vector<64x128xf32>
    %c0_4 = arith.constant 0 : index
    %c0_5 = arith.constant 0 : index
    %5 = vector.load %arg3[%c0_4, %c0_5] : memref<1x128xf32, #tpu.memory_space<vmem>>, vector<1x128xf32>
    %6 = vector.broadcast %5 : vector<1x128xf32> to vector<64x128xf32>
    %7 = arith.addf %4, %6 : vector<64x128xf32>
    %8 = math.tanh %7 : vector<64x128xf32>
    %9 = arith.truncf %8 : vector<64x128xf32> to vector<64x128xbf16>
    %c0_6 = arith.constant 0 : index
    %c0_7 = arith.constant 0 : index
    %10 = vector.load %arg4[%c0_6, %c0_7] : memref<128x32xbf16, #tpu.memory_space<vmem>>, vector<128x32xbf16>
    %cst_8 = arith.constant dense<0.000000e+00> : vector<64x32xf32>
    %11 = tpu.matmul %9, %10, %cst_8 {dimension_numbers = #tpu.dot_dimension_numbers<[1], [0], [0], [1], [0, 0, 1, 1], [], []>} : vector<64x128xbf16>, vector<128x32xbf16>, vector<64x32xf32> -> vector<64x32xf32>
    %c0_9 = arith.constant 0 : index
    %c0_10 = arith.constant 0 : index
    %12 = vector.load %arg5[%c0_9, %c0_10] : memref<1x32xf32, #tpu.memory_space<vmem>>, vector<1x32xf32>
    %13 = vector.broadcast %12 : vector<1x32xf32> to vector<64x32xf32>
    %14 = arith.addf %11, %13 : vector<64x32xf32>
    %15 = math.tanh %14 : vector<64x32xf32>
    %16 = arith.truncf %15 : vector<64x32xf32> to vector<64x32xbf16>
    %c0_11 = arith.constant 0 : index
    %c0_12 = arith.constant 0 : index
    %17 = vector.load %arg6[%c0_11, %c0_12] : memref<32x1xbf16, #tpu.memory_space<vmem>>, vector<32x1xbf16>
    %cst_13 = arith.constant dense<0.000000e+00> : vector<64x1xf32>
    %18 = tpu.matmul %16, %17, %cst_13 {dimension_numbers = #tpu.dot_dimension_numbers<[1], [0], [0], [1], [0, 0, 1, 1], [], []>} : vector<64x32xbf16>, vector<32x1xbf16>, vector<64x1xf32> -> vector<64x1xf32>
    %19 = arith.truncf %18 : vector<64x1xf32> to vector<64x1xbf16>
    %c0_14 = arith.constant 0 : index
    %c0_15 = arith.constant 0 : index
    %20 = vector.load %arg7[%c0_14, %c0_15] : memref<33x64xbf16, #tpu.memory_space<vmem>>, vector<33x64xbf16>
    %cst_16 = arith.constant dense<0.000000e+00> : vector<33x1xf32>
    %21 = tpu.matmul %20, %19, %cst_16 {dimension_numbers = #tpu.dot_dimension_numbers<[1], [0], [0], [1], [0, 0, 1, 1], [], []>} : vector<33x64xbf16>, vector<64x1xbf16>, vector<33x1xf32> -> vector<33x1xf32>
    %c0_17 = arith.constant 0 : index
    %c0_18 = arith.constant 0 : index
    %22 = vector.load %arg8[%c0_17, %c0_18] : memref<33x64xbf16, #tpu.memory_space<vmem>>, vector<33x64xbf16>
    %cst_19 = arith.constant dense<0.000000e+00> : vector<33x1xf32>
    %23 = tpu.matmul %22, %19, %cst_19 {dimension_numbers = #tpu.dot_dimension_numbers<[1], [0], [0], [1], [0, 0, 1, 1], [], []>} : vector<33x64xbf16>, vector<64x1xbf16>, vector<33x1xf32> -> vector<33x1xf32>
    %c0_20 = arith.constant 0 : index
    %c0_21 = arith.constant 0 : index
    %24 = vector.load %arg9[%c0_20, %c0_21] : memref<1x32xf32, #tpu.memory_space<vmem>>, vector<1x32xf32>
    %25 = vector.broadcast %21 : vector<33x1xf32> to vector<33x32xf32>
    %26 = vector.broadcast %24 : vector<1x32xf32> to vector<33x32xf32>
    %27 = arith.mulf %25, %26 : vector<33x32xf32>
    %c0_22 = arith.constant 0 : index
    %c0_23 = arith.constant 0 : index
    %28 = vector.load %arg10[%c0_22, %c0_23] : memref<1x32xf32, #tpu.memory_space<vmem>>, vector<1x32xf32>
    %29 = vector.broadcast %23 : vector<33x1xf32> to vector<33x32xf32>
    %30 = vector.broadcast %28 : vector<1x32xf32> to vector<33x32xf32>
    %31 = arith.mulf %29, %30 : vector<33x32xf32>
    %32 = arith.addf %27, %31 : vector<33x32xf32>
    %c0_24 = arith.constant 0 : index
    %c0_25 = arith.constant 0 : index
    %33 = vector.load %arg11[%c0_24, %c0_25] : memref<1x32xf32, #tpu.memory_space<vmem>>, vector<1x32xf32>
    %34 = vector.broadcast %33 : vector<1x32xf32> to vector<33x32xf32>
    %35 = arith.addf %32, %34 : vector<33x32xf32>
    %36 = math.tanh %35 : vector<33x32xf32>
    %37 = arith.truncf %36 : vector<33x32xf32> to vector<33x32xbf16>
    %c0_26 = arith.constant 0 : index
    %c0_27 = arith.constant 0 : index
    %c0_28 = arith.constant 0 : index
    %38 = vector.load %arg12[%c0_26, %c0_27, %c0_28] : memref<8x32x32xbf16, #tpu.memory_space<vmem>>, vector<1x32x32xbf16>
    %39 = vector.shape_cast %38 : vector<1x32x32xbf16> to vector<32x32xbf16>
    %cst_29 = arith.constant dense<0.000000e+00> : vector<33x32xf32>
    %40 = tpu.matmul %37, %39, %cst_29 {dimension_numbers = #tpu.dot_dimension_numbers<[1], [0], [0], [1], [0, 0, 1, 1], [], []>} : vector<33x32xbf16>, vector<32x32xbf16>, vector<33x32xf32> -> vector<33x32xf32>
    %c0_30 = arith.constant 0 : index
    %c0_31 = arith.constant 0 : index
    %c0_32 = arith.constant 0 : index
    %41 = vector.load %arg13[%c0_30, %c0_31, %c0_32] : memref<8x1x32xf32, #tpu.memory_space<vmem>>, vector<1x1x32xf32>
    %42 = vector.shape_cast %41 : vector<1x1x32xf32> to vector<1x32xf32>
    %43 = vector.broadcast %42 : vector<1x32xf32> to vector<33x32xf32>
    %44 = arith.addf %40, %43 : vector<33x32xf32>
    %45 = math.tanh %44 : vector<33x32xf32>
    %46 = arith.truncf %45 : vector<33x32xf32> to vector<33x32xbf16>
    %c0_33 = arith.constant 0 : index
    %c0_34 = arith.constant 0 : index
    %c0_35 = arith.constant 0 : index
    %47 = vector.load %arg14[%c0_33, %c0_34, %c0_35] : memref<8x32x32xbf16, #tpu.memory_space<vmem>>, vector<1x32x32xbf16>
    %48 = vector.shape_cast %47 : vector<1x32x32xbf16> to vector<32x32xbf16>
    %cst_36 = arith.constant dense<0.000000e+00> : vector<33x32xf32>
    %49 = tpu.matmul %46, %48, %cst_36 {dimension_numbers = #tpu.dot_dimension_numbers<[1], [0], [0], [1], [0, 0, 1, 1], [], []>} : vector<33x32xbf16>, vector<32x32xbf16>, vector<33x32xf32> -> vector<33x32xf32>
    %c0_37 = arith.constant 0 : index
    %c0_38 = arith.constant 0 : index
    %c0_39 = arith.constant 0 : index
    %50 = vector.load %arg15[%c0_37, %c0_38, %c0_39] : memref<8x1x32xf32, #tpu.memory_space<vmem>>, vector<1x1x32xf32>
    %51 = vector.shape_cast %50 : vector<1x1x32xf32> to vector<1x32xf32>
    %52 = vector.broadcast %51 : vector<1x32xf32> to vector<33x32xf32>
    %53 = arith.addf %49, %52 : vector<33x32xf32>
    %54 = arith.addf %53, %36 : vector<33x32xf32>
    %55 = math.tanh %54 : vector<33x32xf32>
    %56 = arith.truncf %55 : vector<33x32xf32> to vector<33x32xbf16>
    %c1 = arith.constant 1 : index
    %c0_40 = arith.constant 0 : index
    %c0_41 = arith.constant 0 : index
    %57 = vector.load %arg12[%c1, %c0_40, %c0_41] : memref<8x32x32xbf16, #tpu.memory_space<vmem>>, vector<1x32x32xbf16>
    %58 = vector.shape_cast %57 : vector<1x32x32xbf16> to vector<32x32xbf16>
    %cst_42 = arith.constant dense<0.000000e+00> : vector<33x32xf32>
    %59 = tpu.matmul %56, %58, %cst_42 {dimension_numbers = #tpu.dot_dimension_numbers<[1], [0], [0], [1], [0, 0, 1, 1], [], []>} : vector<33x32xbf16>, vector<32x32xbf16>, vector<33x32xf32> -> vector<33x32xf32>
    %c1_43 = arith.constant 1 : index
    %c0_44 = arith.constant 0 : index
    %c0_45 = arith.constant 0 : index
    %60 = vector.load %arg13[%c1_43, %c0_44, %c0_45] : memref<8x1x32xf32, #tpu.memory_space<vmem>>, vector<1x1x32xf32>
    %61 = vector.shape_cast %60 : vector<1x1x32xf32> to vector<1x32xf32>
    %62 = vector.broadcast %61 : vector<1x32xf32> to vector<33x32xf32>
    %63 = arith.addf %59, %62 : vector<33x32xf32>
    %64 = math.tanh %63 : vector<33x32xf32>
    %65 = arith.truncf %64 : vector<33x32xf32> to vector<33x32xbf16>
    %c1_46 = arith.constant 1 : index
    %c0_47 = arith.constant 0 : index
    %c0_48 = arith.constant 0 : index
    %66 = vector.load %arg14[%c1_46, %c0_47, %c0_48] : memref<8x32x32xbf16, #tpu.memory_space<vmem>>, vector<1x32x32xbf16>
    %67 = vector.shape_cast %66 : vector<1x32x32xbf16> to vector<32x32xbf16>
    %cst_49 = arith.constant dense<0.000000e+00> : vector<33x32xf32>
    %68 = tpu.matmul %65, %67, %cst_49 {dimension_numbers = #tpu.dot_dimension_numbers<[1], [0], [0], [1], [0, 0, 1, 1], [], []>} : vector<33x32xbf16>, vector<32x32xbf16>, vector<33x32xf32> -> vector<33x32xf32>
    %c1_50 = arith.constant 1 : index
    %c0_51 = arith.constant 0 : index
    %c0_52 = arith.constant 0 : index
    %69 = vector.load %arg15[%c1_50, %c0_51, %c0_52] : memref<8x1x32xf32, #tpu.memory_space<vmem>>, vector<1x1x32xf32>
    %70 = vector.shape_cast %69 : vector<1x1x32xf32> to vector<1x32xf32>
    %71 = vector.broadcast %70 : vector<1x32xf32> to vector<33x32xf32>
    %72 = arith.addf %68, %71 : vector<33x32xf32>
    %73 = arith.addf %72, %55 : vector<33x32xf32>
    %74 = math.tanh %73 : vector<33x32xf32>
    %75 = arith.truncf %74 : vector<33x32xf32> to vector<33x32xbf16>
    %c2 = arith.constant 2 : index
    %c0_53 = arith.constant 0 : index
    %c0_54 = arith.constant 0 : index
    %76 = vector.load %arg12[%c2, %c0_53, %c0_54] : memref<8x32x32xbf16, #tpu.memory_space<vmem>>, vector<1x32x32xbf16>
    %77 = vector.shape_cast %76 : vector<1x32x32xbf16> to vector<32x32xbf16>
    %cst_55 = arith.constant dense<0.000000e+00> : vector<33x32xf32>
    %78 = tpu.matmul %75, %77, %cst_55 {dimension_numbers = #tpu.dot_dimension_numbers<[1], [0], [0], [1], [0, 0, 1, 1], [], []>} : vector<33x32xbf16>, vector<32x32xbf16>, vector<33x32xf32> -> vector<33x32xf32>
    %c2_56 = arith.constant 2 : index
    %c0_57 = arith.constant 0 : index
    %c0_58 = arith.constant 0 : index
    %79 = vector.load %arg13[%c2_56, %c0_57, %c0_58] : memref<8x1x32xf32, #tpu.memory_space<vmem>>, vector<1x1x32xf32>
    %80 = vector.shape_cast %79 : vector<1x1x32xf32> to vector<1x32xf32>
    %81 = vector.broadcast %80 : vector<1x32xf32> to vector<33x32xf32>
    %82 = arith.addf %78, %81 : vector<33x32xf32>
    %83 = math.tanh %82 : vector<33x32xf32>
    %84 = arith.truncf %83 : vector<33x32xf32> to vector<33x32xbf16>
    %c2_59 = arith.constant 2 : index
    %c0_60 = arith.constant 0 : index
    %c0_61 = arith.constant 0 : index
    %85 = vector.load %arg14[%c2_59, %c0_60, %c0_61] : memref<8x32x32xbf16, #tpu.memory_space<vmem>>, vector<1x32x32xbf16>
    %86 = vector.shape_cast %85 : vector<1x32x32xbf16> to vector<32x32xbf16>
    %cst_62 = arith.constant dense<0.000000e+00> : vector<33x32xf32>
    %87 = tpu.matmul %84, %86, %cst_62 {dimension_numbers = #tpu.dot_dimension_numbers<[1], [0], [0], [1], [0, 0, 1, 1], [], []>} : vector<33x32xbf16>, vector<32x32xbf16>, vector<33x32xf32> -> vector<33x32xf32>
    %c2_63 = arith.constant 2 : index
    %c0_64 = arith.constant 0 : index
    %c0_65 = arith.constant 0 : index
    %88 = vector.load %arg15[%c2_63, %c0_64, %c0_65] : memref<8x1x32xf32, #tpu.memory_space<vmem>>, vector<1x1x32xf32>
    %89 = vector.shape_cast %88 : vector<1x1x32xf32> to vector<1x32xf32>
    %90 = vector.broadcast %89 : vector<1x32xf32> to vector<33x32xf32>
    %91 = arith.addf %87, %90 : vector<33x32xf32>
    %92 = arith.addf %91, %74 : vector<33x32xf32>
    %93 = math.tanh %92 : vector<33x32xf32>
    %94 = arith.truncf %93 : vector<33x32xf32> to vector<33x32xbf16>
    %c3 = arith.constant 3 : index
    %c0_66 = arith.constant 0 : index
    %c0_67 = arith.constant 0 : index
    %95 = vector.load %arg12[%c3, %c0_66, %c0_67] : memref<8x32x32xbf16, #tpu.memory_space<vmem>>, vector<1x32x32xbf16>
    %96 = vector.shape_cast %95 : vector<1x32x32xbf16> to vector<32x32xbf16>
    %cst_68 = arith.constant dense<0.000000e+00> : vector<33x32xf32>
    %97 = tpu.matmul %94, %96, %cst_68 {dimension_numbers = #tpu.dot_dimension_numbers<[1], [0], [0], [1], [0, 0, 1, 1], [], []>} : vector<33x32xbf16>, vector<32x32xbf16>, vector<33x32xf32> -> vector<33x32xf32>
    %c3_69 = arith.constant 3 : index
    %c0_70 = arith.constant 0 : index
    %c0_71 = arith.constant 0 : index
    %98 = vector.load %arg13[%c3_69, %c0_70, %c0_71] : memref<8x1x32xf32, #tpu.memory_space<vmem>>, vector<1x1x32xf32>
    %99 = vector.shape_cast %98 : vector<1x1x32xf32> to vector<1x32xf32>
    %100 = vector.broadcast %99 : vector<1x32xf32> to vector<33x32xf32>
    %101 = arith.addf %97, %100 : vector<33x32xf32>
    %102 = math.tanh %101 : vector<33x32xf32>
    %103 = arith.truncf %102 : vector<33x32xf32> to vector<33x32xbf16>
    %c3_72 = arith.constant 3 : index
    %c0_73 = arith.constant 0 : index
    %c0_74 = arith.constant 0 : index
    %104 = vector.load %arg14[%c3_72, %c0_73, %c0_74] : memref<8x32x32xbf16, #tpu.memory_space<vmem>>, vector<1x32x32xbf16>
    %105 = vector.shape_cast %104 : vector<1x32x32xbf16> to vector<32x32xbf16>
    %cst_75 = arith.constant dense<0.000000e+00> : vector<33x32xf32>
    %106 = tpu.matmul %103, %105, %cst_75 {dimension_numbers = #tpu.dot_dimension_numbers<[1], [0], [0], [1], [0, 0, 1, 1], [], []>} : vector<33x32xbf16>, vector<32x32xbf16>, vector<33x32xf32> -> vector<33x32xf32>
    %c3_76 = arith.constant 3 : index
    %c0_77 = arith.constant 0 : index
    %c0_78 = arith.constant 0 : index
    %107 = vector.load %arg15[%c3_76, %c0_77, %c0_78] : memref<8x1x32xf32, #tpu.memory_space<vmem>>, vector<1x1x32xf32>
    %108 = vector.shape_cast %107 : vector<1x1x32xf32> to vector<1x32xf32>
    %109 = vector.broadcast %108 : vector<1x32xf32> to vector<33x32xf32>
    %110 = arith.addf %106, %109 : vector<33x32xf32>
    %111 = arith.addf %110, %93 : vector<33x32xf32>
    %112 = math.tanh %111 : vector<33x32xf32>
    %113 = arith.truncf %112 : vector<33x32xf32> to vector<33x32xbf16>
    %c4 = arith.constant 4 : index
    %c0_79 = arith.constant 0 : index
    %c0_80 = arith.constant 0 : index
    %114 = vector.load %arg12[%c4, %c0_79, %c0_80] : memref<8x32x32xbf16, #tpu.memory_space<vmem>>, vector<1x32x32xbf16>
    %115 = vector.shape_cast %114 : vector<1x32x32xbf16> to vector<32x32xbf16>
    %cst_81 = arith.constant dense<0.000000e+00> : vector<33x32xf32>
    %116 = tpu.matmul %113, %115, %cst_81 {dimension_numbers = #tpu.dot_dimension_numbers<[1], [0], [0], [1], [0, 0, 1, 1], [], []>} : vector<33x32xbf16>, vector<32x32xbf16>, vector<33x32xf32> -> vector<33x32xf32>
    %c4_82 = arith.constant 4 : index
    %c0_83 = arith.constant 0 : index
    %c0_84 = arith.constant 0 : index
    %117 = vector.load %arg13[%c4_82, %c0_83, %c0_84] : memref<8x1x32xf32, #tpu.memory_space<vmem>>, vector<1x1x32xf32>
    %118 = vector.shape_cast %117 : vector<1x1x32xf32> to vector<1x32xf32>
    %119 = vector.broadcast %118 : vector<1x32xf32> to vector<33x32xf32>
    %120 = arith.addf %116, %119 : vector<33x32xf32>
    %121 = math.tanh %120 : vector<33x32xf32>
    %122 = arith.truncf %121 : vector<33x32xf32> to vector<33x32xbf16>
    %c4_85 = arith.constant 4 : index
    %c0_86 = arith.constant 0 : index
    %c0_87 = arith.constant 0 : index
    %123 = vector.load %arg14[%c4_85, %c0_86, %c0_87] : memref<8x32x32xbf16, #tpu.memory_space<vmem>>, vector<1x32x32xbf16>
    %124 = vector.shape_cast %123 : vector<1x32x32xbf16> to vector<32x32xbf16>
    %cst_88 = arith.constant dense<0.000000e+00> : vector<33x32xf32>
    %125 = tpu.matmul %122, %124, %cst_88 {dimension_numbers = #tpu.dot_dimension_numbers<[1], [0], [0], [1], [0, 0, 1, 1], [], []>} : vector<33x32xbf16>, vector<32x32xbf16>, vector<33x32xf32> -> vector<33x32xf32>
    %c4_89 = arith.constant 4 : index
    %c0_90 = arith.constant 0 : index
    %c0_91 = arith.constant 0 : index
    %126 = vector.load %arg15[%c4_89, %c0_90, %c0_91] : memref<8x1x32xf32, #tpu.memory_space<vmem>>, vector<1x1x32xf32>
    %127 = vector.shape_cast %126 : vector<1x1x32xf32> to vector<1x32xf32>
    %128 = vector.broadcast %127 : vector<1x32xf32> to vector<33x32xf32>
    %129 = arith.addf %125, %128 : vector<33x32xf32>
    %130 = arith.addf %129, %112 : vector<33x32xf32>
    %131 = math.tanh %130 : vector<33x32xf32>
    %132 = arith.truncf %131 : vector<33x32xf32> to vector<33x32xbf16>
    %c5 = arith.constant 5 : index
    %c0_92 = arith.constant 0 : index
    %c0_93 = arith.constant 0 : index
    %133 = vector.load %arg12[%c5, %c0_92, %c0_93] : memref<8x32x32xbf16, #tpu.memory_space<vmem>>, vector<1x32x32xbf16>
    %134 = vector.shape_cast %133 : vector<1x32x32xbf16> to vector<32x32xbf16>
    %cst_94 = arith.constant dense<0.000000e+00> : vector<33x32xf32>
    %135 = tpu.matmul %132, %134, %cst_94 {dimension_numbers = #tpu.dot_dimension_numbers<[1], [0], [0], [1], [0, 0, 1, 1], [], []>} : vector<33x32xbf16>, vector<32x32xbf16>, vector<33x32xf32> -> vector<33x32xf32>
    %c5_95 = arith.constant 5 : index
    %c0_96 = arith.constant 0 : index
    %c0_97 = arith.constant 0 : index
    %136 = vector.load %arg13[%c5_95, %c0_96, %c0_97] : memref<8x1x32xf32, #tpu.memory_space<vmem>>, vector<1x1x32xf32>
    %137 = vector.shape_cast %136 : vector<1x1x32xf32> to vector<1x32xf32>
    %138 = vector.broadcast %137 : vector<1x32xf32> to vector<33x32xf32>
    %139 = arith.addf %135, %138 : vector<33x32xf32>
    %140 = math.tanh %139 : vector<33x32xf32>
    %141 = arith.truncf %140 : vector<33x32xf32> to vector<33x32xbf16>
    %c5_98 = arith.constant 5 : index
    %c0_99 = arith.constant 0 : index
    %c0_100 = arith.constant 0 : index
    %142 = vector.load %arg14[%c5_98, %c0_99, %c0_100] : memref<8x32x32xbf16, #tpu.memory_space<vmem>>, vector<1x32x32xbf16>
    %143 = vector.shape_cast %142 : vector<1x32x32xbf16> to vector<32x32xbf16>
    %cst_101 = arith.constant dense<0.000000e+00> : vector<33x32xf32>
    %144 = tpu.matmul %141, %143, %cst_101 {dimension_numbers = #tpu.dot_dimension_numbers<[1], [0], [0], [1], [0, 0, 1, 1], [], []>} : vector<33x32xbf16>, vector<32x32xbf16>, vector<33x32xf32> -> vector<33x32xf32>
    %c5_102 = arith.constant 5 : index
    %c0_103 = arith.constant 0 : index
    %c0_104 = arith.constant 0 : index
    %145 = vector.load %arg15[%c5_102, %c0_103, %c0_104] : memref<8x1x32xf32, #tpu.memory_space<vmem>>, vector<1x1x32xf32>
    %146 = vector.shape_cast %145 : vector<1x1x32xf32> to vector<1x32xf32>
    %147 = vector.broadcast %146 : vector<1x32xf32> to vector<33x32xf32>
    %148 = arith.addf %144, %147 : vector<33x32xf32>
    %149 = arith.addf %148, %131 : vector<33x32xf32>
    %150 = math.tanh %149 : vector<33x32xf32>
    %151 = arith.truncf %150 : vector<33x32xf32> to vector<33x32xbf16>
    %c6 = arith.constant 6 : index
    %c0_105 = arith.constant 0 : index
    %c0_106 = arith.constant 0 : index
    %152 = vector.load %arg12[%c6, %c0_105, %c0_106] : memref<8x32x32xbf16, #tpu.memory_space<vmem>>, vector<1x32x32xbf16>
    %153 = vector.shape_cast %152 : vector<1x32x32xbf16> to vector<32x32xbf16>
    %cst_107 = arith.constant dense<0.000000e+00> : vector<33x32xf32>
    %154 = tpu.matmul %151, %153, %cst_107 {dimension_numbers = #tpu.dot_dimension_numbers<[1], [0], [0], [1], [0, 0, 1, 1], [], []>} : vector<33x32xbf16>, vector<32x32xbf16>, vector<33x32xf32> -> vector<33x32xf32>
    %c6_108 = arith.constant 6 : index
    %c0_109 = arith.constant 0 : index
    %c0_110 = arith.constant 0 : index
    %155 = vector.load %arg13[%c6_108, %c0_109, %c0_110] : memref<8x1x32xf32, #tpu.memory_space<vmem>>, vector<1x1x32xf32>
    %156 = vector.shape_cast %155 : vector<1x1x32xf32> to vector<1x32xf32>
    %157 = vector.broadcast %156 : vector<1x32xf32> to vector<33x32xf32>
    %158 = arith.addf %154, %157 : vector<33x32xf32>
    %159 = math.tanh %158 : vector<33x32xf32>
    %160 = arith.truncf %159 : vector<33x32xf32> to vector<33x32xbf16>
    %c6_111 = arith.constant 6 : index
    %c0_112 = arith.constant 0 : index
    %c0_113 = arith.constant 0 : index
    %161 = vector.load %arg14[%c6_111, %c0_112, %c0_113] : memref<8x32x32xbf16, #tpu.memory_space<vmem>>, vector<1x32x32xbf16>
    %162 = vector.shape_cast %161 : vector<1x32x32xbf16> to vector<32x32xbf16>
    %cst_114 = arith.constant dense<0.000000e+00> : vector<33x32xf32>
    %163 = tpu.matmul %160, %162, %cst_114 {dimension_numbers = #tpu.dot_dimension_numbers<[1], [0], [0], [1], [0, 0, 1, 1], [], []>} : vector<33x32xbf16>, vector<32x32xbf16>, vector<33x32xf32> -> vector<33x32xf32>
    %c6_115 = arith.constant 6 : index
    %c0_116 = arith.constant 0 : index
    %c0_117 = arith.constant 0 : index
    %164 = vector.load %arg15[%c6_115, %c0_116, %c0_117] : memref<8x1x32xf32, #tpu.memory_space<vmem>>, vector<1x1x32xf32>
    %165 = vector.shape_cast %164 : vector<1x1x32xf32> to vector<1x32xf32>
    %166 = vector.broadcast %165 : vector<1x32xf32> to vector<33x32xf32>
    %167 = arith.addf %163, %166 : vector<33x32xf32>
    %168 = arith.addf %167, %150 : vector<33x32xf32>
    %169 = math.tanh %168 : vector<33x32xf32>
    %170 = arith.truncf %169 : vector<33x32xf32> to vector<33x32xbf16>
    %c7 = arith.constant 7 : index
    %c0_118 = arith.constant 0 : index
    %c0_119 = arith.constant 0 : index
    %171 = vector.load %arg12[%c7, %c0_118, %c0_119] : memref<8x32x32xbf16, #tpu.memory_space<vmem>>, vector<1x32x32xbf16>
    %172 = vector.shape_cast %171 : vector<1x32x32xbf16> to vector<32x32xbf16>
    %cst_120 = arith.constant dense<0.000000e+00> : vector<33x32xf32>
    %173 = tpu.matmul %170, %172, %cst_120 {dimension_numbers = #tpu.dot_dimension_numbers<[1], [0], [0], [1], [0, 0, 1, 1], [], []>} : vector<33x32xbf16>, vector<32x32xbf16>, vector<33x32xf32> -> vector<33x32xf32>
    %c7_121 = arith.constant 7 : index
    %c0_122 = arith.constant 0 : index
    %c0_123 = arith.constant 0 : index
    %174 = vector.load %arg13[%c7_121, %c0_122, %c0_123] : memref<8x1x32xf32, #tpu.memory_space<vmem>>, vector<1x1x32xf32>
    %175 = vector.shape_cast %174 : vector<1x1x32xf32> to vector<1x32xf32>
    %176 = vector.broadcast %175 : vector<1x32xf32> to vector<33x32xf32>
    %177 = arith.addf %173, %176 : vector<33x32xf32>
    %178 = math.tanh %177 : vector<33x32xf32>
    %179 = arith.truncf %178 : vector<33x32xf32> to vector<33x32xbf16>
    %c7_124 = arith.constant 7 : index
    %c0_125 = arith.constant 0 : index
    %c0_126 = arith.constant 0 : index
    %180 = vector.load %arg14[%c7_124, %c0_125, %c0_126] : memref<8x32x32xbf16, #tpu.memory_space<vmem>>, vector<1x32x32xbf16>
    %181 = vector.shape_cast %180 : vector<1x32x32xbf16> to vector<32x32xbf16>
    %cst_127 = arith.constant dense<0.000000e+00> : vector<33x32xf32>
    %182 = tpu.matmul %179, %181, %cst_127 {dimension_numbers = #tpu.dot_dimension_numbers<[1], [0], [0], [1], [0, 0, 1, 1], [], []>} : vector<33x32xbf16>, vector<32x32xbf16>, vector<33x32xf32> -> vector<33x32xf32>
    %c7_128 = arith.constant 7 : index
    %c0_129 = arith.constant 0 : index
    %c0_130 = arith.constant 0 : index
    %183 = vector.load %arg15[%c7_128, %c0_129, %c0_130] : memref<8x1x32xf32, #tpu.memory_space<vmem>>, vector<1x1x32xf32>
    %184 = vector.shape_cast %183 : vector<1x1x32xf32> to vector<1x32xf32>
    %185 = vector.broadcast %184 : vector<1x32xf32> to vector<33x32xf32>
    %186 = arith.addf %182, %185 : vector<33x32xf32>
    %187 = arith.addf %186, %169 : vector<33x32xf32>
    %188 = math.tanh %187 : vector<33x32xf32>
    %189 = arith.truncf %188 : vector<33x32xf32> to vector<33x32xbf16>
    %c0_131 = arith.constant 0 : index
    %c0_132 = arith.constant 0 : index
    %190 = vector.load %arg16[%c0_131, %c0_132] : memref<32x2xbf16, #tpu.memory_space<vmem>>, vector<32x2xbf16>
    %cst_133 = arith.constant dense<0.000000e+00> : vector<33x2xf32>
    %191 = tpu.matmul %189, %190, %cst_133 {dimension_numbers = #tpu.dot_dimension_numbers<[1], [0], [0], [1], [0, 0, 1, 1], [], []>} : vector<33x32xbf16>, vector<32x2xbf16>, vector<33x2xf32> -> vector<33x2xf32>
    %192 = vector.extract_strided_slice %191 {offsets = [0, 0], sizes = [33, 1], strides = [1, 1]} : vector<33x2xf32> to vector<33x1xf32>
    %193 = arith.truncf %192 : vector<33x1xf32> to vector<33x1xbf16>
    %194 = vector.extract_strided_slice %191 {offsets = [0, 1], sizes = [33, 1], strides = [1, 1]} : vector<33x2xf32> to vector<33x1xf32>
    %195 = arith.truncf %194 : vector<33x1xf32> to vector<33x1xbf16>
    %c0_134 = arith.constant 0 : index
    %c0_135 = arith.constant 0 : index
    %196 = vector.load %arg17[%c0_134, %c0_135] : memref<64x33xbf16, #tpu.memory_space<vmem>>, vector<64x33xbf16>
    %cst_136 = arith.constant dense<0.000000e+00> : vector<64x1xf32>
    %197 = tpu.matmul %196, %193, %cst_136 {dimension_numbers = #tpu.dot_dimension_numbers<[1], [0], [0], [1], [0, 0, 1, 1], [], []>} : vector<64x33xbf16>, vector<33x1xbf16>, vector<64x1xf32> -> vector<64x1xf32>
    %c0_137 = arith.constant 0 : index
    %c0_138 = arith.constant 0 : index
    %198 = vector.load %arg18[%c0_137, %c0_138] : memref<64x33xbf16, #tpu.memory_space<vmem>>, vector<64x33xbf16>
    %cst_139 = arith.constant dense<0.000000e+00> : vector<64x1xf32>
    %199 = tpu.matmul %198, %195, %cst_139 {dimension_numbers = #tpu.dot_dimension_numbers<[1], [0], [0], [1], [0, 0, 1, 1], [], []>} : vector<64x33xbf16>, vector<33x1xbf16>, vector<64x1xf32> -> vector<64x1xf32>
    %200 = arith.addf %197, %199 : vector<64x1xf32>
    %c0_140 = arith.constant 0 : index
    %c0_141 = arith.constant 0 : index
    %c0_142 = arith.constant 0 : index
    %201 = vector.load %arg19[%c0_140, %c0_141, %c0_142] : memref<4x1x32xf32, #tpu.memory_space<vmem>>, vector<1x1x32xf32>
    %202 = vector.shape_cast %201 : vector<1x1x32xf32> to vector<1x32xf32>
    %203 = vector.broadcast %200 : vector<64x1xf32> to vector<64x32xf32>
    %204 = vector.broadcast %202 : vector<1x32xf32> to vector<64x32xf32>
    %205 = arith.mulf %203, %204 : vector<64x32xf32>
    %c0_143 = arith.constant 0 : index
    %c0_144 = arith.constant 0 : index
    %206 = vector.load %arg20[%c0_143, %c0_144] : memref<1x32xf32, #tpu.memory_space<vmem>>, vector<1x32xf32>
    %207 = vector.broadcast %206 : vector<1x32xf32> to vector<64x32xf32>
    %208 = arith.addf %205, %207 : vector<64x32xf32>
    %209 = math.tanh %208 : vector<64x32xf32>
    %210 = arith.truncf %209 : vector<64x32xf32> to vector<64x32xbf16>
    %c0_145 = arith.constant 0 : index
    %c0_146 = arith.constant 0 : index
    %211 = vector.load %arg21[%c0_145, %c0_146] : memref<32x160xbf16, #tpu.memory_space<vmem>>, vector<32x160xbf16>
    %cst_147 = arith.constant dense<0.000000e+00> : vector<64x160xf32>
    %212 = tpu.matmul %210, %211, %cst_147 {dimension_numbers = #tpu.dot_dimension_numbers<[1], [0], [0], [1], [0, 0, 1, 1], [], []>} : vector<64x32xbf16>, vector<32x160xbf16>, vector<64x160xf32> -> vector<64x160xf32>
    %c0_148 = arith.constant 0 : index
    %c0_149 = arith.constant 0 : index
    %213 = vector.load %arg22[%c0_148, %c0_149] : memref<1x160xf32, #tpu.memory_space<vmem>>, vector<1x160xf32>
    %214 = vector.broadcast %213 : vector<1x160xf32> to vector<64x160xf32>
    %215 = arith.addf %212, %214 : vector<64x160xf32>
    %216 = math.tanh %215 : vector<64x160xf32>
    %217 = arith.truncf %216 : vector<64x160xf32> to vector<64x160xbf16>
    %c0_150 = arith.constant 0 : index
    %c0_151 = arith.constant 0 : index
    %218 = vector.load %arg23[%c0_150, %c0_151] : memref<160x5xbf16, #tpu.memory_space<vmem>>, vector<160x5xbf16>
    %cst_152 = arith.constant dense<0.000000e+00> : vector<64x5xf32>
    %219 = tpu.matmul %217, %218, %cst_152 {dimension_numbers = #tpu.dot_dimension_numbers<[1], [0], [0], [1], [0, 0, 1, 1], [], []>} : vector<64x160xbf16>, vector<160x5xbf16>, vector<64x5xf32> -> vector<64x5xf32>
    %220 = arith.truncf %219 : vector<64x5xf32> to vector<64x5xbf16>
    %c0_153 = arith.constant 0 : index
    %c0_154 = arith.constant 0 : index
    %c0_155 = arith.constant 0 : index
    %221 = vector.load %arg24[%c0_153, %c0_154, %c0_155] : memref<1x64x20xbf16, #tpu.memory_space<vmem>>, vector<1x64x5xbf16>
    %222 = vector.shape_cast %221 : vector<1x64x5xbf16> to vector<64x5xbf16>
    %223 = vector.shape_cast %220 : vector<64x5xbf16> to vector<1x64x5xbf16>
    tpu.vector_store %arg24[%c0_153, %c0_154, %c0_155], %223 {strides = array<i32>} : memref<1x64x20xbf16, #tpu.memory_space<vmem>>, vector<1x64x5xbf16>,
    %c1_156 = arith.constant 1 : index
    %c0_157 = arith.constant 0 : index
    %c0_158 = arith.constant 0 : index
    %224 = vector.load %arg19[%c1_156, %c0_157, %c0_158] : memref<4x1x32xf32, #tpu.memory_space<vmem>>, vector<1x1x32xf32>
    %225 = vector.shape_cast %224 : vector<1x1x32xf32> to vector<1x32xf32>
    %226 = vector.broadcast %200 : vector<64x1xf32> to vector<64x32xf32>
    %227 = vector.broadcast %225 : vector<1x32xf32> to vector<64x32xf32>
    %228 = arith.mulf %226, %227 : vector<64x32xf32>
    %c0_159 = arith.constant 0 : index
    %c0_160 = arith.constant 0 : index
    %229 = vector.load %arg20[%c0_159, %c0_160] : memref<1x32xf32, #tpu.memory_space<vmem>>, vector<1x32xf32>
    %230 = vector.broadcast %229 : vector<1x32xf32> to vector<64x32xf32>
    %231 = arith.addf %228, %230 : vector<64x32xf32>
    %232 = math.tanh %231 : vector<64x32xf32>
    %233 = arith.truncf %232 : vector<64x32xf32> to vector<64x32xbf16>
    %c0_161 = arith.constant 0 : index
    %c0_162 = arith.constant 0 : index
    %234 = vector.load %arg21[%c0_161, %c0_162] : memref<32x160xbf16, #tpu.memory_space<vmem>>, vector<32x160xbf16>
    %cst_163 = arith.constant dense<0.000000e+00> : vector<64x160xf32>
    %235 = tpu.matmul %233, %234, %cst_163 {dimension_numbers = #tpu.dot_dimension_numbers<[1], [0], [0], [1], [0, 0, 1, 1], [], []>} : vector<64x32xbf16>, vector<32x160xbf16>, vector<64x160xf32> -> vector<64x160xf32>
    %c0_164 = arith.constant 0 : index
    %c0_165 = arith.constant 0 : index
    %236 = vector.load %arg22[%c0_164, %c0_165] : memref<1x160xf32, #tpu.memory_space<vmem>>, vector<1x160xf32>
    %237 = vector.broadcast %236 : vector<1x160xf32> to vector<64x160xf32>
    %238 = arith.addf %235, %237 : vector<64x160xf32>
    %239 = math.tanh %238 : vector<64x160xf32>
    %240 = arith.truncf %239 : vector<64x160xf32> to vector<64x160xbf16>
    %c0_166 = arith.constant 0 : index
    %c0_167 = arith.constant 0 : index
    %241 = vector.load %arg23[%c0_166, %c0_167] : memref<160x5xbf16, #tpu.memory_space<vmem>>, vector<160x5xbf16>
    %cst_168 = arith.constant dense<0.000000e+00> : vector<64x5xf32>
    %242 = tpu.matmul %240, %241, %cst_168 {dimension_numbers = #tpu.dot_dimension_numbers<[1], [0], [0], [1], [0, 0, 1, 1], [], []>} : vector<64x160xbf16>, vector<160x5xbf16>, vector<64x5xf32> -> vector<64x5xf32>
    %243 = arith.truncf %242 : vector<64x5xf32> to vector<64x5xbf16>
    %c0_169 = arith.constant 0 : index
    %c0_170 = arith.constant 0 : index
    %c5_171 = arith.constant 5 : index
    %244 = vector.load %arg24[%c0_169, %c0_170, %c5_171] : memref<1x64x20xbf16, #tpu.memory_space<vmem>>, vector<1x64x5xbf16>
    %245 = vector.shape_cast %244 : vector<1x64x5xbf16> to vector<64x5xbf16>
    %246 = vector.shape_cast %243 : vector<64x5xbf16> to vector<1x64x5xbf16>
    tpu.vector_store %arg24[%c0_169, %c0_170, %c5_171], %246 {strides = array<i32>} : memref<1x64x20xbf16, #tpu.memory_space<vmem>>, vector<1x64x5xbf16>,
    %c2_172 = arith.constant 2 : index
    %c0_173 = arith.constant 0 : index
    %c0_174 = arith.constant 0 : index
    %247 = vector.load %arg19[%c2_172, %c0_173, %c0_174] : memref<4x1x32xf32, #tpu.memory_space<vmem>>, vector<1x1x32xf32>
    %248 = vector.shape_cast %247 : vector<1x1x32xf32> to vector<1x32xf32>
    %249 = vector.broadcast %200 : vector<64x1xf32> to vector<64x32xf32>
    %250 = vector.broadcast %248 : vector<1x32xf32> to vector<64x32xf32>
    %251 = arith.mulf %249, %250 : vector<64x32xf32>
    %c0_175 = arith.constant 0 : index
    %c0_176 = arith.constant 0 : index
    %252 = vector.load %arg20[%c0_175, %c0_176] : memref<1x32xf32, #tpu.memory_space<vmem>>, vector<1x32xf32>
    %253 = vector.broadcast %252 : vector<1x32xf32> to vector<64x32xf32>
    %254 = arith.addf %251, %253 : vector<64x32xf32>
    %255 = math.tanh %254 : vector<64x32xf32>
    %256 = arith.truncf %255 : vector<64x32xf32> to vector<64x32xbf16>
    %c0_177 = arith.constant 0 : index
    %c0_178 = arith.constant 0 : index
    %257 = vector.load %arg21[%c0_177, %c0_178] : memref<32x160xbf16, #tpu.memory_space<vmem>>, vector<32x160xbf16>
    %cst_179 = arith.constant dense<0.000000e+00> : vector<64x160xf32>
    %258 = tpu.matmul %256, %257, %cst_179 {dimension_numbers = #tpu.dot_dimension_numbers<[1], [0], [0], [1], [0, 0, 1, 1], [], []>} : vector<64x32xbf16>, vector<32x160xbf16>, vector<64x160xf32> -> vector<64x160xf32>
    %c0_180 = arith.constant 0 : index
    %c0_181 = arith.constant 0 : index
    %259 = vector.load %arg22[%c0_180, %c0_181] : memref<1x160xf32, #tpu.memory_space<vmem>>, vector<1x160xf32>
    %260 = vector.broadcast %259 : vector<1x160xf32> to vector<64x160xf32>
    %261 = arith.addf %258, %260 : vector<64x160xf32>
    %262 = math.tanh %261 : vector<64x160xf32>
    %263 = arith.truncf %262 : vector<64x160xf32> to vector<64x160xbf16>
    %c0_182 = arith.constant 0 : index
    %c0_183 = arith.constant 0 : index
    %264 = vector.load %arg23[%c0_182, %c0_183] : memref<160x5xbf16, #tpu.memory_space<vmem>>, vector<160x5xbf16>
    %cst_184 = arith.constant dense<0.000000e+00> : vector<64x5xf32>
    %265 = tpu.matmul %263, %264, %cst_184 {dimension_numbers = #tpu.dot_dimension_numbers<[1], [0], [0], [1], [0, 0, 1, 1], [], []>} : vector<64x160xbf16>, vector<160x5xbf16>, vector<64x5xf32> -> vector<64x5xf32>
    %266 = arith.truncf %265 : vector<64x5xf32> to vector<64x5xbf16>
    %c0_185 = arith.constant 0 : index
    %c0_186 = arith.constant 0 : index
    %c10 = arith.constant 10 : index
    %267 = vector.load %arg24[%c0_185, %c0_186, %c10] : memref<1x64x20xbf16, #tpu.memory_space<vmem>>, vector<1x64x5xbf16>
    %268 = vector.shape_cast %267 : vector<1x64x5xbf16> to vector<64x5xbf16>
    %269 = vector.shape_cast %266 : vector<64x5xbf16> to vector<1x64x5xbf16>
    tpu.vector_store %arg24[%c0_185, %c0_186, %c10], %269 {strides = array<i32>} : memref<1x64x20xbf16, #tpu.memory_space<vmem>>, vector<1x64x5xbf16>,
    %c3_187 = arith.constant 3 : index
    %c0_188 = arith.constant 0 : index
    %c0_189 = arith.constant 0 : index
    %270 = vector.load %arg19[%c3_187, %c0_188, %c0_189] : memref<4x1x32xf32, #tpu.memory_space<vmem>>, vector<1x1x32xf32>
    %271 = vector.shape_cast %270 : vector<1x1x32xf32> to vector<1x32xf32>
    %272 = vector.broadcast %200 : vector<64x1xf32> to vector<64x32xf32>
    %273 = vector.broadcast %271 : vector<1x32xf32> to vector<64x32xf32>
    %274 = arith.mulf %272, %273 : vector<64x32xf32>
    %c0_190 = arith.constant 0 : index
    %c0_191 = arith.constant 0 : index
    %275 = vector.load %arg20[%c0_190, %c0_191] : memref<1x32xf32, #tpu.memory_space<vmem>>, vector<1x32xf32>
    %276 = vector.broadcast %275 : vector<1x32xf32> to vector<64x32xf32>
    %277 = arith.addf %274, %276 : vector<64x32xf32>
    %278 = math.tanh %277 : vector<64x32xf32>
    %279 = arith.truncf %278 : vector<64x32xf32> to vector<64x32xbf16>
    %c0_192 = arith.constant 0 : index
    %c0_193 = arith.constant 0 : index
    %280 = vector.load %arg21[%c0_192, %c0_193] : memref<32x160xbf16, #tpu.memory_space<vmem>>, vector<32x160xbf16>
    %cst_194 = arith.constant dense<0.000000e+00> : vector<64x160xf32>
    %281 = tpu.matmul %279, %280, %cst_194 {dimension_numbers = #tpu.dot_dimension_numbers<[1], [0], [0], [1], [0, 0, 1, 1], [], []>} : vector<64x32xbf16>, vector<32x160xbf16>, vector<64x160xf32> -> vector<64x160xf32>
    %c0_195 = arith.constant 0 : index
    %c0_196 = arith.constant 0 : index
    %282 = vector.load %arg22[%c0_195, %c0_196] : memref<1x160xf32, #tpu.memory_space<vmem>>, vector<1x160xf32>
    %283 = vector.broadcast %282 : vector<1x160xf32> to vector<64x160xf32>
    %284 = arith.addf %281, %283 : vector<64x160xf32>
    %285 = math.tanh %284 : vector<64x160xf32>
    %286 = arith.truncf %285 : vector<64x160xf32> to vector<64x160xbf16>
    %c0_197 = arith.constant 0 : index
    %c0_198 = arith.constant 0 : index
    %287 = vector.load %arg23[%c0_197, %c0_198] : memref<160x5xbf16, #tpu.memory_space<vmem>>, vector<160x5xbf16>
    %cst_199 = arith.constant dense<0.000000e+00> : vector<64x5xf32>
    %288 = tpu.matmul %286, %287, %cst_199 {dimension_numbers = #tpu.dot_dimension_numbers<[1], [0], [0], [1], [0, 0, 1, 1], [], []>} : vector<64x160xbf16>, vector<160x5xbf16>, vector<64x5xf32> -> vector<64x5xf32>
    %289 = arith.truncf %288 : vector<64x5xf32> to vector<64x5xbf16>
    %c0_200 = arith.constant 0 : index
    %c0_201 = arith.constant 0 : index
    %c15 = arith.constant 15 : index
    %290 = vector.load %arg24[%c0_200, %c0_201, %c15] : memref<1x64x20xbf16, #tpu.memory_space<vmem>>, vector<1x64x5xbf16>
    %291 = vector.shape_cast %290 : vector<1x64x5xbf16> to vector<64x5xbf16>
    %292 = vector.shape_cast %289 : vector<64x5xbf16> to vector<1x64x5xbf16>
    tpu.vector_store %arg24[%c0_200, %c0_201, %c15], %292 {strides = array<i32>} : memref<1x64x20xbf16, #tpu.memory_space<vmem>>, vector<1x64x5xbf16>,
    return
  }
  func.func @transform_0(%arg0: i32) -> (i32, i32, i32) {
    %c0_i32 = arith.constant 0 : i32
    %c0_i32_0 = arith.constant 0 : i32
    %c0_i32_1 = arith.constant 0 : i32
    return %arg0, %c0_i32, %c0_i32_0 : i32, i32, i32
  }
  func.func @transform_1(%arg0: i32) -> (i32, i32) {
    %c0_i32 = arith.constant 0 : i32
    %c0_i32_0 = arith.constant 0 : i32
    %c0_i32_1 = arith.constant 0 : i32
    return %c0_i32, %c0_i32_0 : i32, i32
  }
  func.func @transform_2(%arg0: i32) -> (i32, i32) {
    %c0_i32 = arith.constant 0 : i32
    %c0_i32_0 = arith.constant 0 : i32
    %c0_i32_1 = arith.constant 0 : i32
    return %c0_i32, %c0_i32_0 : i32, i32
  }
  func.func @transform_3(%arg0: i32) -> (i32, i32) {
    %c0_i32 = arith.constant 0 : i32
    %c0_i32_0 = arith.constant 0 : i32
    %c0_i32_1 = arith.constant 0 : i32
    return %c0_i32, %c0_i32_0 : i32, i32
  }
  func.func @transform_4(%arg0: i32) -> (i32, i32) {
    %c0_i32 = arith.constant 0 : i32
    %c0_i32_0 = arith.constant 0 : i32
    %c0_i32_1 = arith.constant 0 : i32
    return %c0_i32, %c0_i32_0 : i32, i32
  }
  func.func @transform_5(%arg0: i32) -> (i32, i32) {
    %c0_i32 = arith.constant 0 : i32
    %c0_i32_0 = arith.constant 0 : i32
    %c0_i32_1 = arith.constant 0 : i32
    return %c0_i32, %c0_i32_0 : i32, i32
  }
  func.func @transform_6(%arg0: i32) -> (i32, i32) {
    %c0_i32 = arith.constant 0 : i32
    %c0_i32_0 = arith.constant 0 : i32
    %c0_i32_1 = arith.constant 0 : i32
    return %c0_i32, %c0_i32_0 : i32, i32
  }
  func.func @transform_7(%arg0: i32) -> (i32, i32) {
    %c0_i32 = arith.constant 0 : i32
    %c0_i32_0 = arith.constant 0 : i32
    %c0_i32_1 = arith.constant 0 : i32
    return %c0_i32, %c0_i32_0 : i32, i32
  }
  func.func @transform_8(%arg0: i32) -> (i32, i32) {
    %c0_i32 = arith.constant 0 : i32
    %c0_i32_0 = arith.constant 0 : i32
    %c0_i32_1 = arith.constant 0 : i32
    return %c0_i32, %c0_i32_0 : i32, i32
  }
  func.func @transform_9(%arg0: i32) -> (i32, i32) {
    %c0_i32 = arith.constant 0 : i32
    %c0_i32_0 = arith.constant 0 : i32
    %c0_i32_1 = arith.constant 0 : i32
    return %c0_i32, %c0_i32_0 : i32, i32
  }
  func.func @transform_10(%arg0: i32) -> (i32, i32) {
    %c0_i32 = arith.constant 0 : i32
    %c0_i32_0 = arith.constant 0 : i32
    %c0_i32_1 = arith.constant 0 : i32
    return %c0_i32, %c0_i32_0 : i32, i32
  }
  func.func @transform_11(%arg0: i32) -> (i32, i32, i32) {
    %c0_i32 = arith.constant 0 : i32
    %c0_i32_0 = arith.constant 0 : i32
    %c0_i32_1 = arith.constant 0 : i32
    %c0_i32_2 = arith.constant 0 : i32
    return %c0_i32, %c0_i32_0, %c0_i32_1 : i32, i32, i32
  }
  func.func @transform_12(%arg0: i32) -> (i32, i32, i32) {
    %c0_i32 = arith.constant 0 : i32
    %c0_i32_0 = arith.constant 0 : i32
    %c0_i32_1 = arith.constant 0 : i32
    %c0_i32_2 = arith.constant 0 : i32
    return %c0_i32, %c0_i32_0, %c0_i32_1 : i32, i32, i32
  }
  func.func @transform_13(%arg0: i32) -> (i32, i32, i32) {
    %c0_i32 = arith.constant 0 : i32
    %c0_i32_0 = arith.constant 0 : i32
    %c0_i32_1 = arith.constant 0 : i32
    %c0_i32_2 = arith.constant 0 : i32
    return %c0_i32, %c0_i32_0, %c0_i32_1 : i32, i32, i32
  }
  func.func @transform_14(%arg0: i32) -> (i32, i32, i32) {
    %c0_i32 = arith.constant 0 : i32
    %c0_i32_0 = arith.constant 0 : i32
    %c0_i32_1 = arith.constant 0 : i32
    %c0_i32_2 = arith.constant 0 : i32
    return %c0_i32, %c0_i32_0, %c0_i32_1 : i32, i32, i32
  }
  func.func @transform_15(%arg0: i32) -> (i32, i32) {
    %c0_i32 = arith.constant 0 : i32
    %c0_i32_0 = arith.constant 0 : i32
    %c0_i32_1 = arith.constant 0 : i32
    return %c0_i32, %c0_i32_0 : i32, i32
  }
  func.func @transform_16(%arg0: i32) -> (i32, i32) {
    %c0_i32 = arith.constant 0 : i32
    %c0_i32_0 = arith.constant 0 : i32
    %c0_i32_1 = arith.constant 0 : i32
    return %c0_i32, %c0_i32_0 : i32, i32
  }
  func.func @transform_17(%arg0: i32) -> (i32, i32) {
    %c0_i32 = arith.constant 0 : i32
    %c0_i32_0 = arith.constant 0 : i32
    %c0_i32_1 = arith.constant 0 : i32
    return %c0_i32, %c0_i32_0 : i32, i32
  }
  func.func @transform_18(%arg0: i32) -> (i32, i32, i32) {
    %c0_i32 = arith.constant 0 : i32
    %c0_i32_0 = arith.constant 0 : i32
    %c0_i32_1 = arith.constant 0 : i32
    %c0_i32_2 = arith.constant 0 : i32
    return %c0_i32, %c0_i32_0, %c0_i32_1 : i32, i32, i32
  }
  func.func @transform_19(%arg0: i32) -> (i32, i32) {
    %c0_i32 = arith.constant 0 : i32
    %c0_i32_0 = arith.constant 0 : i32
    %c0_i32_1 = arith.constant 0 : i32
    return %c0_i32, %c0_i32_0 : i32, i32
  }
  func.func @transform_20(%arg0: i32) -> (i32, i32) {
    %c0_i32 = arith.constant 0 : i32
    %c0_i32_0 = arith.constant 0 : i32
    %c0_i32_1 = arith.constant 0 : i32
    return %c0_i32, %c0_i32_0 : i32, i32
  }
  func.func @transform_21(%arg0: i32) -> (i32, i32) {
    %c0_i32 = arith.constant 0 : i32
    %c0_i32_0 = arith.constant 0 : i32
    %c0_i32_1 = arith.constant 0 : i32
    return %c0_i32, %c0_i32_0 : i32, i32
  }
  func.func @transform_22(%arg0: i32) -> (i32, i32) {
    %c0_i32 = arith.constant 0 : i32
    %c0_i32_0 = arith.constant 0 : i32
    %c0_i32_1 = arith.constant 0 : i32
    return %c0_i32, %c0_i32_0 : i32, i32
  }
  func.func @transform_23(%arg0: i32) -> (i32, i32, i32) {
    %c0_i32 = arith.constant 0 : i32
    %c0_i32_0 = arith.constant 0 : i32
    %c0_i32_1 = arith.constant 0 : i32
    return %arg0, %c0_i32, %c0_i32_0 : i32, i32, i32
  }
}

module attributes {stable_mosaic.version = 11 : i64} {
  func.func @_degibbs_kernel(%arg0: i32, %arg1: memref<1x9x256xbf16, #tpu.memory_space<vmem>>, %arg2: memref<5x256x256xbf16, #tpu.memory_space<vmem>>, %arg3: memref<1x5x256xf32, #tpu.memory_space<vmem>>) attributes {dimension_semantics = [#tpu.dimension_semantics<parallel>], iteration_bounds = array<i64: 2>, scalar_prefetch = 0 : i64, scratch_operands = 0 : i64, tpu.core_type = #tpu.core_type<tc>, window_params = [{transform_indices = @transform_0, window_bounds = array<i64: 1, 9, 256>}, {pipeline_mode = #tpu.pipeline_mode<synchronous>, transform_indices = @transform_1, window_bounds = array<i64: 5, 256, 256>}, {transform_indices = @transform_2, window_bounds = array<i64: 1, 5, 256>}]} {
    %c0 = arith.constant 0 : index
    %c0_0 = arith.constant 0 : index
    %c0_1 = arith.constant 0 : index
    %0 = vector.load %arg1[%c0, %c0_0, %c0_1] : memref<1x9x256xbf16, #tpu.memory_space<vmem>>, vector<1x5x256xbf16>
    %1 = vector.shape_cast %0 : vector<1x5x256xbf16> to vector<5x256xbf16>
    %c0_2 = arith.constant 0 : index
    %c0_3 = arith.constant 0 : index
    %c0_4 = arith.constant 0 : index
    %2 = vector.load %arg2[%c0_2, %c0_3, %c0_4] : memref<5x256x256xbf16, #tpu.memory_space<vmem>>, vector<1x256x256xbf16>
    %3 = vector.shape_cast %2 : vector<1x256x256xbf16> to vector<256x256xbf16>
    %cst = arith.constant dense<0.000000e+00> : vector<5x256xf32>
    %4 = tpu.matmul %1, %3, %cst {dimension_numbers = #tpu.dot_dimension_numbers<[1], [0], [0], [1], [0, 0, 1, 1], [], []>} : vector<5x256xbf16>, vector<256x256xbf16>, vector<5x256xf32> -> vector<5x256xf32>
    %c0_5 = arith.constant 0 : index
    %c1 = arith.constant 1 : index
    %c0_6 = arith.constant 0 : index
    %5 = vector.load %arg1[%c0_5, %c1, %c0_6] : memref<1x9x256xbf16, #tpu.memory_space<vmem>>, vector<1x5x256xbf16>
    %6 = vector.shape_cast %5 : vector<1x5x256xbf16> to vector<5x256xbf16>
    %c1_7 = arith.constant 1 : index
    %c0_8 = arith.constant 0 : index
    %c0_9 = arith.constant 0 : index
    %7 = vector.load %arg2[%c1_7, %c0_8, %c0_9] : memref<5x256x256xbf16, #tpu.memory_space<vmem>>, vector<1x256x256xbf16>
    %8 = vector.shape_cast %7 : vector<1x256x256xbf16> to vector<256x256xbf16>
    %cst_10 = arith.constant dense<0.000000e+00> : vector<5x256xf32>
    %9 = tpu.matmul %6, %8, %cst_10 {dimension_numbers = #tpu.dot_dimension_numbers<[1], [0], [0], [1], [0, 0, 1, 1], [], []>} : vector<5x256xbf16>, vector<256x256xbf16>, vector<5x256xf32> -> vector<5x256xf32>
    %10 = arith.addf %4, %9 : vector<5x256xf32>
    %c0_11 = arith.constant 0 : index
    %c2 = arith.constant 2 : index
    %c0_12 = arith.constant 0 : index
    %11 = vector.load %arg1[%c0_11, %c2, %c0_12] : memref<1x9x256xbf16, #tpu.memory_space<vmem>>, vector<1x5x256xbf16>
    %12 = vector.shape_cast %11 : vector<1x5x256xbf16> to vector<5x256xbf16>
    %c2_13 = arith.constant 2 : index
    %c0_14 = arith.constant 0 : index
    %c0_15 = arith.constant 0 : index
    %13 = vector.load %arg2[%c2_13, %c0_14, %c0_15] : memref<5x256x256xbf16, #tpu.memory_space<vmem>>, vector<1x256x256xbf16>
    %14 = vector.shape_cast %13 : vector<1x256x256xbf16> to vector<256x256xbf16>
    %cst_16 = arith.constant dense<0.000000e+00> : vector<5x256xf32>
    %15 = tpu.matmul %12, %14, %cst_16 {dimension_numbers = #tpu.dot_dimension_numbers<[1], [0], [0], [1], [0, 0, 1, 1], [], []>} : vector<5x256xbf16>, vector<256x256xbf16>, vector<5x256xf32> -> vector<5x256xf32>
    %16 = arith.addf %10, %15 : vector<5x256xf32>
    %c0_17 = arith.constant 0 : index
    %c3 = arith.constant 3 : index
    %c0_18 = arith.constant 0 : index
    %17 = vector.load %arg1[%c0_17, %c3, %c0_18] : memref<1x9x256xbf16, #tpu.memory_space<vmem>>, vector<1x5x256xbf16>
    %18 = vector.shape_cast %17 : vector<1x5x256xbf16> to vector<5x256xbf16>
    %c3_19 = arith.constant 3 : index
    %c0_20 = arith.constant 0 : index
    %c0_21 = arith.constant 0 : index
    %19 = vector.load %arg2[%c3_19, %c0_20, %c0_21] : memref<5x256x256xbf16, #tpu.memory_space<vmem>>, vector<1x256x256xbf16>
    %20 = vector.shape_cast %19 : vector<1x256x256xbf16> to vector<256x256xbf16>
    %cst_22 = arith.constant dense<0.000000e+00> : vector<5x256xf32>
    %21 = tpu.matmul %18, %20, %cst_22 {dimension_numbers = #tpu.dot_dimension_numbers<[1], [0], [0], [1], [0, 0, 1, 1], [], []>} : vector<5x256xbf16>, vector<256x256xbf16>, vector<5x256xf32> -> vector<5x256xf32>
    %22 = arith.addf %16, %21 : vector<5x256xf32>
    %c0_23 = arith.constant 0 : index
    %c4 = arith.constant 4 : index
    %c0_24 = arith.constant 0 : index
    %23 = vector.load %arg1[%c0_23, %c4, %c0_24] : memref<1x9x256xbf16, #tpu.memory_space<vmem>>, vector<1x5x256xbf16>
    %24 = vector.shape_cast %23 : vector<1x5x256xbf16> to vector<5x256xbf16>
    %c4_25 = arith.constant 4 : index
    %c0_26 = arith.constant 0 : index
    %c0_27 = arith.constant 0 : index
    %25 = vector.load %arg2[%c4_25, %c0_26, %c0_27] : memref<5x256x256xbf16, #tpu.memory_space<vmem>>, vector<1x256x256xbf16>
    %26 = vector.shape_cast %25 : vector<1x256x256xbf16> to vector<256x256xbf16>
    %cst_28 = arith.constant dense<0.000000e+00> : vector<5x256xf32>
    %27 = tpu.matmul %24, %26, %cst_28 {dimension_numbers = #tpu.dot_dimension_numbers<[1], [0], [0], [1], [0, 0, 1, 1], [], []>} : vector<5x256xbf16>, vector<256x256xbf16>, vector<5x256xf32> -> vector<5x256xf32>
    %28 = arith.addf %22, %27 : vector<5x256xf32>
    %29 = math.tanh %28 : vector<5x256xf32>
    %c0_29 = arith.constant 0 : index
    %c0_30 = arith.constant 0 : index
    %c0_31 = arith.constant 0 : index
    %30 = vector.load %arg3[%c0_29, %c0_30, %c0_31] : memref<1x5x256xf32, #tpu.memory_space<vmem>>, vector<1x5x256xf32>
    %31 = vector.shape_cast %30 : vector<1x5x256xf32> to vector<5x256xf32>
    %32 = vector.shape_cast %29 : vector<5x256xf32> to vector<1x5x256xf32>
    tpu.vector_store %arg3[%c0_29, %c0_30, %c0_31], %32 {strides = array<i32>} : memref<1x5x256xf32, #tpu.memory_space<vmem>>, vector<1x5x256xf32>,
    return
  }
  func.func @transform_0(%arg0: i32) -> (i32, i32, i32) {
    %c0_i32 = arith.constant 0 : i32
    %c0_i32_0 = arith.constant 0 : i32
    %c0_i32_1 = arith.constant 0 : i32
    return %arg0, %c0_i32, %c0_i32_0 : i32, i32, i32
  }
  func.func @transform_1(%arg0: i32) -> (i32, i32, i32) {
    %c0_i32 = arith.constant 0 : i32
    %c0_i32_0 = arith.constant 0 : i32
    %c0_i32_1 = arith.constant 0 : i32
    %c0_i32_2 = arith.constant 0 : i32
    return %c0_i32, %c0_i32_0, %c0_i32_1 : i32, i32, i32
  }
  func.func @transform_2(%arg0: i32) -> (i32, i32, i32) {
    %c0_i32 = arith.constant 0 : i32
    %c0_i32_0 = arith.constant 0 : i32
    %c0_i32_1 = arith.constant 0 : i32
    return %arg0, %c0_i32, %c0_i32_0 : i32, i32, i32
  }
}

</mosaic_0001>

<llo_original>
// kernel: generator_forward.3
$region0: #{generator_forward.3}
  #allocation0 [shape = 'u32[]', space=smem, size = 0x4, offset = 0x4, fixed_abs, tag = 'smem constant byte address 0x4 - core index']
  #allocation1 [shape = 'u32[72,128]{1,0:T(1,128)}', space=vmem, size = 0x9000, scoped, tag = 'internal scratch']
  %s0 = inlined_call_operand.vmem [shape: bf16[2,9,256], index: 0, kind: input, shape index: {}]
  %s1 = inlined_call_operand.hbm [shape: bf16[5,256,256], index: 1, kind: input, shape index: {}]
  %s2 = inlined_call_operand.vmem [shape: f32[2,5,256], index: 2, kind: output, shape index: {}]
  %s3 = sld [smem:[#allocation0]]
  $region45: #{generator_forward.3} parent=0
    _
  %s5 = ssub.s32 1, %s3
  %s6 = scalar_select 0, %s5, %s3
  $region1: #{generator_forward.3} parent=0
    #allocation2 [shape = 'u8[655360]{0}', space=vmem, size = 0xa0000, scoped, tag = 'input window, operand 1, single buffered']
    #allocation3 [shape = 's32[2]{0}', space=sflag, size = 0x8, scoped, tag = 'scoped memory for generator_forward.3']
    %7 = vsyncpa [#allocation3], 0
    loop: start=0, step=1, limit=4
    $region2: #{generator_forward.3} parent=1 // loop_pre_header
      _
    $region3: #{generator_forward.3} parent=1 // loop_header
      %s9 = sphi 0, %s13
      %p10 = scmp.ge.s32.totalorder %s9, 4
      %s19 = sphi 0, %s21
      %s22 = sphi 0, %s19
      %s23 = sphi 0, %s22
      %s39 = sphi 0, %s23
      %s43 = sphi 0, %s43
      %s45 = sphi 0, %s43
      %s46 = sphi 0, %s45
      %s60 = sphi 0, %s46
      %s66 = sphi 0, %s68
      %s69 = sphi 0, %s66
      %s70 = sphi 0, %s69
      %s86 = sphi 0, %s70
    $region4: #{generator_forward.3} parent=1 // loop_header_branch
      %12 = sbr.rel (%p10) target = $region8
    $region5: #{generator_forward.3} parent=1 // loop_body
      %s14 = ssub.s32 %s9, 1
      %s15 = ssub.s32 %s9, 2
      %s16 = sadd.s32 %s9, 1
      %s17 = ssub.s32 %s9, %s16
      %p18 = scmp.eq.s32.totalorder %s17, 0
      %s20 = sadd.s32 %s19, 1
      %s21 = scalar_select %p18, %s19, %s20
      %p24 = pneg %p18
      %p25 = scmp.eq.s32.totalorder %s9, 1
      %p26 = por %p24, %p25
      %p27 = scmp.ne.s32.totalorder %s19, %s22
      %p28 = scmp.eq.s32.totalorder %s9, 0
      %p29 = por %p27, %p28
      %p30 = scmp.ne.s32.totalorder %s19, %s22
      %p31 = scmp.eq.s32.totalorder %s14, 1
      %p32 = por %p30, %p31
      %p33 = scmp.ne.s32.totalorder %s22, %s23
      %p34 = scmp.eq.s32.totalorder %s14, 0
      %p35 = por %p33, %p34
      %p36 = scmp.ne.s32.totalorder %s22, %s23
      %p37 = scmp.eq.s32.totalorder %s15, 1
      %p38 = por %p36, %p37
      %p40 = scmp.ne.s32.totalorder %s23, %s39
      %p41 = scmp.eq.s32.totalorder %s15, 0
      %p42 = por %p40, %p41
      %s44 = sadd.s32 %s43, 1
      %p47 = scmp.eq.s32.totalorder %s9, 1
      %p48 = scmp.ne.s32.totalorder %s43, %s45
      %p49 = scmp.eq.s32.totalorder %s9, 0
      %p50 = por %p48, %p49
      %p51 = scmp.ne.s32.totalorder %s43, %s45
      %p52 = scmp.eq.s32.totalorder %s14, 1
      %p53 = por %p51, %p52
      %p54 = scmp.ne.s32.totalorder %s45, %s46
      %p55 = scmp.eq.s32.totalorder %s14, 0
      %p56 = por %p54, %p55
      %p57 = scmp.ne.s32.totalorder %s45, %s46
      %p58 = scmp.eq.s32.totalorder %s15, 1
      %p59 = por %p57, %p58
      %p61 = scmp.ne.s32.totalorder %s46, %s60
      %p62 = scmp.eq.s32.totalorder %s15, 0
      %p63 = por %p61, %p62
      %s64 = ssub.s32 %s9, %s16
      %p65 = scmp.eq.s32.totalorder %s64, 0
      %s67 = sadd.s32 %s66, 1
      %s68 = scalar_select %p65, %s66, %s67
      %p71 = pneg %p65
      %p72 = scmp.eq.s32.totalorder %s9, 1
      %p73 = por %p71, %p72
      %p74 = scmp.ne.s32.totalorder %s66, %s69
      %p75 = scmp.eq.s32.totalorder %s9, 0
      %p76 = por %p74, %p75
      %p77 = scmp.ne.s32.totalorder %s66, %s69
      %p78 = scmp.eq.s32.totalorder %s14, 1
      %p79 = por %p77, %p78
      %p80 = scmp.ne.s32.totalorder %s69, %s70
      %p81 = scmp.eq.s32.totalorder %s14, 0
      %p82 = por %p80, %p81
      %p83 = scmp.ne.s32.totalorder %s69, %s70
      %p84 = scmp.eq.s32.totalorder %s15, 1
      %p85 = por %p83, %p84
      %p87 = scmp.ne.s32.totalorder %s70, %s86
      %p88 = scmp.eq.s32.totalorder %s15, 0
      %p89 = por %p87, %p88
      %p90 = scmp.le.s32.totalorder 1, %s9
      %p91 = scmp.lt.s32.totalorder %s9, 3
      %p92 = pnand %p90, %p91
      %p93 = pneg %p92
      // Predicated region
      $region9: #{generator_forward.3} parent=5 // pred_check
        _
      $region10: #{generator_forward.3} parent=5 // pred_check_branch
        %95 = sbr.rel (%p92) target = $region12
      $region11: #{generator_forward.3} parent=5 // pred_region
        %s96 = ssub.s32 %s9, 1
        // Predicated region
        $region13: #{generator_forward.3} parent=11 // pred_check
          %p97 = pneg %p56
        $region14: #{generator_forward.3} parent=11 // pred_check_branch
          %99 = sbr.rel (%p97) target = $region16
        $region15: #{generator_forward.3} parent=11 // pred_region
          %101 = vsyncadd [#allocation3], 0
          %s102 = sshll.u32 %s1, 4
          %s103 = int_to_ptr.hbm [resolvable:$true] %s102
          %s104 = sshll.u32 [#allocation2], 4
          %s105 = int_to_ptr.vmem [resolvable:$true] %s104
          %110 = dma.hbm_to_vmem [thread:$0]  %s103, 20480, %s105, [#allocation3], 128, 128, 8
        $region16: #{generator_forward.3} parent=11 // pred_fallthru
          _
      $region12: #{generator_forward.3} parent=5 // pred_fallthru
        _
      %p111 = scmp.lt.s32.totalorder %s9, 2
      // Predicated region
      $region17: #{generator_forward.3} parent=5 // pred_check
        %p112 = pneg %p111
      $region18: #{generator_forward.3} parent=5 // pred_check_branch
        %114 = sbr.rel (%p112) target = $region20
      $region19: #{generator_forward.3} parent=5 // pred_region
        // Predicated region
        $region21: #{generator_forward.3} parent=19 // pred_check
          %p115 = pneg %p29
        $region22: #{generator_forward.3} parent=19 // pred_check_branch
          %117 = sbr.rel (%p115) target = $region24
        $region23: #{generator_forward.3} parent=19 // pred_region
          %p118 = scmp.lt.s32.totalorder %s9, 1
          %s119 = scalar_select %p118, %s9, 1
          %s120 = smul.addr %s119, 4
          %s121 = smul.addr %s120, 4
          %s122 = scalar_lea.vmem %s0, %s121
        $region24: #{generator_forward.3} parent=19 // pred_fallthru
          _
      $region20: #{generator_forward.3} parent=5 // pred_fallthru
        _
      %p123 = scmp.le.s32.totalorder 1, %s9
      %p124 = scmp.lt.s32.totalorder %s9, 3
      %p125 = pnand %p123, %p124
      %p126 = pneg %p125
      // Predicated region
      $region25: #{generator_forward.3} parent=5 // pred_check
        _
      $region26: #{generator_forward.3} parent=5 // pred_check_branch
        %128 = sbr.rel (%p125) target = $region28
      $region27: #{generator_forward.3} parent=5 // pred_region
        %s129 = ssub.s32 %s9, 1
        // Predicated region
        $region29: #{generator_forward.3} parent=27 // pred_check
          %p130 = pneg %p56
        $region30: #{generator_forward.3} parent=27 // pred_check_branch
          %132 = sbr.rel (%p130) target = $region32
        $region31: #{generator_forward.3} parent=27 // pred_region
          %134 = dma.done [#allocation3], 20480
        $region32: #{generator_forward.3} parent=27 // pred_fallthru
          _
        %p135 = scmp.lt.s32.totalorder %s14, 1
        %s136 = scalar_select %p135, %s14, 1
        %s137 = smul.addr %s136, 4
        %s138 = smul.addr %s137, 4
        %s139 = scalar_lea.vmem %s0, %s138
        %p140 = pneg %p35
        %p141 = pneg %p32
        %p142 = pneg %p56
        %p143 = pneg %p53
        %p144 = pneg %p82
        %p145 = pneg %p79
        %p146 = scmp.lt.s32.totalorder %s14, 1
        %s147 = scalar_select %p146, %s14, 1
        %s148 = smul.addr %s147, 2
        %s149 = smul.addr %s148, 8
        %s150 = scalar_lea.vmem %s2, %s149
        %p151 = scmp.lt.s32.totalorder %s14, 1
        %s152 = scalar_select %p151, %s14, 1
        %s153 = smul.addr %s152, 4
        %s154 = smul.addr %s153, 4
        %s155 = scalar_lea.vmem %s0, %s154
        %p156 = scmp.lt.s32.totalorder %s14, 1
        %s157 = scalar_select %p156, %s14, 1
        %s158 = smul.addr %s157, 2
        %s159 = smul.addr %s158, 8
        %s160 = scalar_lea.vmem %s2, %s159
        %v161 = vld [vmem:[%s155] sm:$0x77]
        %v162 = vld [vmem:[#allocation2] sm:$0xff]
        %v163 = vld [vmem:[#allocation2 + $0x8] sm:$0xff]
        %v164 = vld [vmem:[#allocation2 + $0x10] sm:$0xff]
        %v165 = vld [vmem:[#allocation2 + $0x18] sm:$0xff]
        %v166 = vld [vmem:[#allocation2 + $0x20] sm:$0xff]
        %v167 = vld [vmem:[#allocation2 + $0x28] sm:$0xff]
        %v168 = vld [vmem:[#allocation2 + $0x30] sm:$0xff]
        %v169 = vld [vmem:[#allocation2 + $0x38] sm:$0xff]
        %v170 = vld [vmem:[#allocation2 + $0x40] sm:$0xff]
        %v171 = vld [vmem:[#allocation2 + $0x48] sm:$0xff]
        %v172 = vld [vmem:[#allocation2 + $0x50] sm:$0xff]
        %v173 = vld [vmem:[#allocation2 + $0x58] sm:$0xff]
        %v174 = vld [vmem:[#allocation2 + $0x60] sm:$0xff]
        %v175 = vld [vmem:[#allocation2 + $0x68] sm:$0xff]
        %v176 = vld [vmem:[#allocation2 + $0x70] sm:$0xff]
        %v177 = vld [vmem:[#allocation2 + $0x78] sm:$0xff]
        %v178 = vld [vmem:[#allocation2 + $0x80] sm:$0xff]
        %v179 = vld [vmem:[#allocation2 + $0x88] sm:$0xff]
        %v180 = vld [vmem:[#allocation2 + $0x90] sm:$0xff]
        %v181 = vld [vmem:[#allocation2 + $0x98] sm:$0xff]
        %v182 = vld [vmem:[#allocation2 + $0xa0] sm:$0xff]
        %v183 = vld [vmem:[#allocation2 + $0xa8] sm:$0xff]
        %v184 = vld [vmem:[#allocation2 + $0xb0] sm:$0xff]
        %v185 = vld [vmem:[#allocation2 + $0xb8] sm:$0xff]
        %v186 = vld [vmem:[#allocation2 + $0xc0] sm:$0xff]
        %v187 = vld [vmem:[#allocation2 + $0xc8] sm:$0xff]
        %v188 = vld [vmem:[#allocation2 + $0xd0] sm:$0xff]
        %v189 = vld [vmem:[#allocation2 + $0xd8] sm:$0xff]
        %v190 = vld [vmem:[#allocation2 + $0xe0] sm:$0xff]
        %v191 = vld [vmem:[#allocation2 + $0xe8] sm:$0xff]
        %v192 = vld [vmem:[#allocation2 + $0xf0] sm:$0xff]
        %v193 = vld [vmem:[#allocation2 + $0xf8] sm:$0xff]
        %s194 = scalar_lea.vmem [#allocation2], 256
        %v195 = vld [vmem:[%s194] sm:$0xff]
        %v196 = vld [vmem:[%s194 + $0x8] sm:$0xff]
        %v197 = vld [vmem:[%s194 + $0x10] sm:$0xff]
        %v198 = vld [vmem:[%s194 + $0x18] sm:$0xff]
        %v199 = vld [vmem:[%s194 + $0x20] sm:$0xff]
        %v200 = vld [vmem:[%s194 + $0x28] sm:$0xff]
        %v201 = vld [vmem:[%s194 + $0x30] sm:$0xff]
        %v202 = vld [vmem:[%s194 + $0x38] sm:$0xff]
        %v203 = vld [vmem:[%s194 + $0x40] sm:$0xff]
        %v204 = vld [vmem:[%s194 + $0x48] sm:$0xff]
        %v205 = vld [vmem:[%s194 + $0x50] sm:$0xff]
        %v206 = vld [vmem:[%s194 + $0x58] sm:$0xff]
        %v207 = vld [vmem:[%s194 + $0x60] sm:$0xff]
        %v208 = vld [vmem:[%s194 + $0x68] sm:$0xff]
        %v209 = vld [vmem:[%s194 + $0x70] sm:$0xff]
        %v210 = vld [vmem:[%s194 + $0x78] sm:$0xff]
        %v211 = vld [vmem:[%s194 + $0x80] sm:$0xff]
        %v212 = vld [vmem:[%s194 + $0x88] sm:$0xff]
        %v213 = vld [vmem:[%s194 + $0x90] sm:$0xff]
        %v214 = vld [vmem:[%s194 + $0x98] sm:$0xff]
        %v215 = vld [vmem:[%s194 + $0xa0] sm:$0xff]
        %v216 = vld [vmem:[%s194 + $0xa8] sm:$0xff]
        %v217 = vld [vmem:[%s194 + $0xb0] sm:$0xff]
        %v218 = vld [vmem:[%s194 + $0xb8] sm:$0xff]
        %v219 = vld [vmem:[%s194 + $0xc0] sm:$0xff]
        %v220 = vld [vmem:[%s194 + $0xc8] sm:$0xff]
        %v221 = vld [vmem:[%s194 + $0xd0] sm:$0xff]
        %v222 = vld [vmem:[%s194 + $0xd8] sm:$0xff]
        %v223 = vld [vmem:[%s194 + $0xe0] sm:$0xff]
        %v224 = vld [vmem:[%s194 + $0xe8] sm:$0xff]
        %v225 = vld [vmem:[%s194 + $0xf0] sm:$0xff]
        %v226 = vld [vmem:[%s194 + $0xf8] sm:$0xff]
        %v228 = vunpack.c.l.b16 %v161
        %v229 = vunpack.c.h.b16 %v161
        %v230 = vpack.c.b16 %v228, %v228
        %v231 = vpack.c.b16 %v229, %v229
        %v233 = vshrl.u32 %v230, 16
        %v235 = vshll.u32 %v230, 16
        %v237 = vrot.slane %v235, 1
        %v238 = vor.u32 %v233, %v237
        %v240 = vshrl.u32 %v231, 16
        %v242 = vshll.u32 %v231, 16
        %v244 = vrot.slane %v242, 1
        %v245 = vor.u32 %v240, %v244
        %v280 = vunpack.c.l.b16 %v195
        %v281 = vunpack.c.h.b16 %v195
        %v282 = vunpack.c.l.b16 %v196
        %v283 = vunpack.c.h.b16 %v196
        %v284 = vunpack.c.l.b16 %v197
        %v285 = vunpack.c.h.b16 %v197
        %v286 = vunpack.c.l.b16 %v198
        %v287 = vunpack.c.h.b16 %v198
        %v288 = vunpack.c.l.b16 %v199
        %v289 = vunpack.c.h.b16 %v199
        %v290 = vunpack.c.l.b16 %v200
        %v291 = vunpack.c.h.b16 %v200
        %v292 = vunpack.c.l.b16 %v201
        %v293 = vunpack.c.h.b16 %v201
        %v294 = vunpack.c.l.b16 %v202
        %v295 = vunpack.c.h.b16 %v202
        %v296 = vunpack.c.l.b16 %v203
        %v297 = vunpack.c.h.b16 %v203
        %v298 = vunpack.c.l.b16 %v204
        %v299 = vunpack.c.h.b16 %v204
        %v300 = vunpack.c.l.b16 %v205
        %v301 = vunpack.c.h.b16 %v205
        %v302 = vunpack.c.l.b16 %v206
        %v303 = vunpack.c.h.b16 %v206
        %v304 = vunpack.c.l.b16 %v207
        %v305 = vunpack.c.h.b16 %v207
        %v306 = vunpack.c.l.b16 %v208
        %v307 = vunpack.c.h.b16 %v208
        %v308 = vunpack.c.l.b16 %v209
        %v309 = vunpack.c.h.b16 %v209
        %v310 = vunpack.c.l.b16 %v210
        %v311 = vunpack.c.h.b16 %v210
        %v312 = vunpack.c.l.b16 %v211
        %v313 = vunpack.c.h.b16 %v211
        %v314 = vunpack.c.l.b16 %v212
        %v315 = vunpack.c.h.b16 %v212
        %v316 = vunpack.c.l.b16 %v213
        %v317 = vunpack.c.h.b16 %v213
        %v318 = vunpack.c.l.b16 %v214
        %v319 = vunpack.c.h.b16 %v214
        %v320 = vunpack.c.l.b16 %v215
        %v321 = vunpack.c.h.b16 %v215
        %v322 = vunpack.c.l.b16 %v216
        %v323 = vunpack.c.h.b16 %v216
        %v324 = vunpack.c.l.b16 %v217
        %v325 = vunpack.c.h.b16 %v217
        %v326 = vunpack.c.l.b16 %v218
        %v327 = vunpack.c.h.b16 %v218
        %v328 = vunpack.c.l.b16 %v219
        %v329 = vunpack.c.h.b16 %v219
        %v330 = vunpack.c.l.b16 %v220
        %v331 = vunpack.c.h.b16 %v220
        %v332 = vunpack.c.l.b16 %v221
        %v333 = vunpack.c.h.b16 %v221
        %v334 = vunpack.c.l.b16 %v222
        %v335 = vunpack.c.h.b16 %v222
        %v336 = vunpack.c.l.b16 %v223
        %v337 = vunpack.c.h.b16 %v223
        %v338 = vunpack.c.l.b16 %v224
        %v339 = vunpack.c.h.b16 %v224
        %v340 = vunpack.c.l.b16 %v225
        %v341 = vunpack.c.h.b16 %v225
        %v342 = vunpack.c.l.b16 %v226
        %v343 = vunpack.c.h.b16 %v226
        %v344 = vpack.c.b16 %v282, %v280
        %v345 = vpack.c.b16 %v283, %v281
        %v346 = vpack.c.b16 %v286, %v284
        %v347 = vpack.c.b16 %v287, %v285
        %v348 = vpack.c.b16 %v290, %v288
        %v349 = vpack.c.b16 %v291, %v289
        %v350 = vpack.c.b16 %v294, %v292
        %v351 = vpack.c.b16 %v295, %v293
        %v352 = vpack.c.b16 %v298, %v296
        %v353 = vpack.c.b16 %v299, %v297
        %v354 = vpack.c.b16 %v302, %v300
        %v355 = vpack.c.b16 %v303, %v301
        %v356 = vpack.c.b16 %v306, %v304
        %v357 = vpack.c.b16 %v307, %v305
        %v358 = vpack.c.b16 %v310, %v308
        %v359 = vpack.c.b16 %v311, %v309
        %v360 = vpack.c.b16 %v314, %v312
        %v361 = vpack.c.b16 %v315, %v313
        %v362 = vpack.c.b16 %v318, %v316
        %v363 = vpack.c.b16 %v319, %v317
        %v364 = vpack.c.b16 %v322, %v320
        %v365 = vpack.c.b16 %v323, %v321
        %v366 = vpack.c.b16 %v326, %v324
        %v367 = vpack.c.b16 %v327, %v325
        %v368 = vpack.c.b16 %v330, %v328
        %v369 = vpack.c.b16 %v331, %v329
        %v370 = vpack.c.b16 %v334, %v332
        %v371 = vpack.c.b16 %v335, %v333
        %v372 = vpack.c.b16 %v338, %v336
        %v373 = vpack.c.b16 %v339, %v337
        %v374 = vpack.c.b16 %v342, %v340
        %v375 = vpack.c.b16 %v343, %v341
        %408 = vmatpush.bf16.msra.mxu0 %v358
        %409 = vmatpush.bf16.msra.mxu0 %v356
        %410 = vmatpush.bf16.msra.mxu0 %v354
        %411 = vmatpush.bf16.msra.mxu0 %v352
        %412 = vmatpush.bf16.msra.mxu0 %v350
        %413 = vmatpush.bf16.msra.mxu0 %v348
        %414 = vmatpush.bf16.msra.mxu0 %v346
        %415 = vmatpush.bf16.msra.mxu0 %v344
        %416 = vmatmul.bf16.gmra.mxu0 %v238
        %v417 = vpop.f32.mrf.mxu0
        %v418 = vadd.f32 0.0, %v417
        %v419 = vpop.f32.mrf.mxu0
        %420 = vdwg.mxu0
        %421 = vmatpush.bf16.msra.mxu0 %v374
        %422 = vmatpush.bf16.msra.mxu0 %v372
        %423 = vmatpush.bf16.msra.mxu0 %v370
        %424 = vmatpush.bf16.msra.mxu0 %v368
        %425 = vmatpush.bf16.msra.mxu0 %v366
        %426 = vmatpush.bf16.msra.mxu0 %v364
        %427 = vmatpush.bf16.msra.mxu0 %v362
        %428 = vmatpush.bf16.msra.mxu0 %v360
        %429 = vmatmul.bf16.gmra.mxu0 %v245
        %v430 = vpop.f32.mrf.mxu0
        %v431 = vadd.f32 %v418, %v430
        %v432 = vpop.f32.mrf.mxu0
        %433 = vdwg.mxu0
        %434 = vmatpush.bf16.msra.mxu0 %v359
        %435 = vmatpush.bf16.msra.mxu0 %v357
        %436 = vmatpush.bf16.msra.mxu0 %v355
        %437 = vmatpush.bf16.msra.mxu0 %v353
        %438 = vmatpush.bf16.msra.mxu0 %v351
        %439 = vmatpush.bf16.msra.mxu0 %v349
        %440 = vmatpush.bf16.msra.mxu0 %v347
        %441 = vmatpush.bf16.msra.mxu0 %v345
        %442 = vmatmul.bf16.gmra.mxu0 %v238
        %v443 = vpop.f32.mrf.mxu0
        %v444 = vadd.f32 0.0, %v443
        %v445 = vpop.f32.mrf.mxu0
        %446 = vdwg.mxu0
        %447 = vmatpush.bf16.msra.mxu0 %v375
        %448 = vmatpush.bf16.msra.mxu0 %v373
        %449 = vmatpush.bf16.msra.mxu0 %v371
        %450 = vmatpush.bf16.msra.mxu0 %v369
        %451 = vmatpush.bf16.msra.mxu0 %v367
        %452 = vmatpush.bf16.msra.mxu0 %v365
        %453 = vmatpush.bf16.msra.mxu0 %v363
        %454 = vmatpush.bf16.msra.mxu0 %v361
        %455 = vmatmul.bf16.gmra.mxu0 %v245
        %v456 = vpop.f32.mrf.mxu0
        %v457 = vadd.f32 %v444, %v456
        %v458 = vpop.f32.mrf.mxu0
        %459 = vdwg.mxu0
        %v494 = vunpack.c.l.b16 %v162
        %v495 = vunpack.c.h.b16 %v162
        %v496 = vunpack.c.l.b16 %v163
        %v497 = vunpack.c.h.b16 %v163
        %v498 = vunpack.c.l.b16 %v164
        %v499 = vunpack.c.h.b16 %v164
        %v500 = vunpack.c.l.b16 %v165
        %v501 = vunpack.c.h.b16 %v165
        %v502 = vunpack.c.l.b16 %v166
        %v503 = vunpack.c.h.b16 %v166
        %v504 = vunpack.c.l.b16 %v167
        %v505 = vunpack.c.h.b16 %v167
        %v506 = vunpack.c.l.b16 %v168
        %v507 = vunpack.c.h.b16 %v168
        %v508 = vunpack.c.l.b16 %v169
        %v509 = vunpack.c.h.b16 %v169
        %v510 = vunpack.c.l.b16 %v170
        %v511 = vunpack.c.h.b16 %v170
        %v512 = vunpack.c.l.b16 %v171
        %v513 = vunpack.c.h.b16 %v171
        %v514 = vunpack.c.l.b16 %v172
        %v515 = vunpack.c.h.b16 %v172
        %v516 = vunpack.c.l.b16 %v173
        %v517 = vunpack.c.h.b16 %v173
        %v518 = vunpack.c.l.b16 %v174
        %v519 = vunpack.c.h.b16 %v174
        %v520 = vunpack.c.l.b16 %v175
        %v521 = vunpack.c.h.b16 %v175
        %v522 = vunpack.c.l.b16 %v176
        %v523 = vunpack.c.h.b16 %v176
        %v524 = vunpack.c.l.b16 %v177
        %v525 = vunpack.c.h.b16 %v177
        %v526 = vunpack.c.l.b16 %v178
        %v527 = vunpack.c.h.b16 %v178
        %v528 = vunpack.c.l.b16 %v179
        %v529 = vunpack.c.h.b16 %v179
        %v530 = vunpack.c.l.b16 %v180
        %v531 = vunpack.c.h.b16 %v180
        %v532 = vunpack.c.l.b16 %v181
        %v533 = vunpack.c.h.b16 %v181
        %v534 = vunpack.c.l.b16 %v182
        %v535 = vunpack.c.h.b16 %v182
        %v536 = vunpack.c.l.b16 %v183
        %v537 = vunpack.c.h.b16 %v183
        %v538 = vunpack.c.l.b16 %v184
        %v539 = vunpack.c.h.b16 %v184
        %v540 = vunpack.c.l.b16 %v185
        %v541 = vunpack.c.h.b16 %v185
        %v542 = vunpack.c.l.b16 %v186
        %v543 = vunpack.c.h.b16 %v186
        %v544 = vunpack.c.l.b16 %v187
        %v545 = vunpack.c.h.b16 %v187
        %v546 = vunpack.c.l.b16 %v188
        %v547 = vunpack.c.h.b16 %v188
        %v548 = vunpack.c.l.b16 %v189
        %v549 = vunpack.c.h.b16 %v189
        %v550 = vunpack.c.l.b16 %v190
        %v551 = vunpack.c.h.b16 %v190
        %v552 = vunpack.c.l.b16 %v191
        %v553 = vunpack.c.h.b16 %v191
        %v554 = vunpack.c.l.b16 %v192
        %v555 = vunpack.c.h.b16 %v192
        %v556 = vunpack.c.l.b16 %v193
        %v557 = vunpack.c.h.b16 %v193
        %v558 = vpack.c.b16 %v496, %v494
        %v559 = vpack.c.b16 %v497, %v495
        %v560 = vpack.c.b16 %v500, %v498
        %v561 = vpack.c.b16 %v501, %v499
        %v562 = vpack.c.b16 %v504, %v502
        %v563 = vpack.c.b16 %v505, %v503
        %v564 = vpack.c.b16 %v508, %v506
        %v565 = vpack.c.b16 %v509, %v507
        %v566 = vpack.c.b16 %v512, %v510
        %v567 = vpack.c.b16 %v513, %v511
        %v568 = vpack.c.b16 %v516, %v514
        %v569 = vpack.c.b16 %v517, %v515
        %v570 = vpack.c.b16 %v520, %v518
        %v571 = vpack.c.b16 %v521, %v519
        %v572 = vpack.c.b16 %v524, %v522
        %v573 = vpack.c.b16 %v525, %v523
        %v574 = vpack.c.b16 %v528, %v526
        %v575 = vpack.c.b16 %v529, %v527
        %v576 = vpack.c.b16 %v532, %v530
        %v577 = vpack.c.b16 %v533, %v531
        %v578 = vpack.c.b16 %v536, %v534
        %v579 = vpack.c.b16 %v537, %v535
        %v580 = vpack.c.b16 %v540, %v538
        %v581 = vpack.c.b16 %v541, %v539
        %v582 = vpack.c.b16 %v544, %v542
        %v583 = vpack.c.b16 %v545, %v543
        %v584 = vpack.c.b16 %v548, %v546
        %v585 = vpack.c.b16 %v549, %v547
        %v586 = vpack.c.b16 %v552, %v550
        %v587 = vpack.c.b16 %v553, %v551
        %v588 = vpack.c.b16 %v556, %v554
        %v589 = vpack.c.b16 %v557, %v555
        %622 = vmatpush.bf16.msra.mxu0 %v572
        %623 = vmatpush.bf16.msra.mxu0 %v570
        %624 = vmatpush.bf16.msra.mxu0 %v568
        %625 = vmatpush.bf16.msra.mxu0 %v566
        %626 = vmatpush.bf16.msra.mxu0 %v564
        %627 = vmatpush.bf16.msra.mxu0 %v562
        %628 = vmatpush.bf16.msra.mxu0 %v560
        %629 = vmatpush.bf16.msra.mxu0 %v558
        %630 = vmatmul.bf16.gmra.mxu0 %v230
        %v631 = vpop.f32.mrf.mxu0
        %v632 = vadd.f32 %v431, %v631
        %v633 = vpop.f32.mrf.mxu0
        %634 = vdwg.mxu0
        %635 = vmatpush.bf16.msra.mxu0 %v588
        %636 = vmatpush.bf16.msra.mxu0 %v586
        %637 = vmatpush.bf16.msra.mxu0 %v584
        %638 = vmatpush.bf16.msra.mxu0 %v582
        %639 = vmatpush.bf16.msra.mxu0 %v580
        %640 = vmatpush.bf16.msra.mxu0 %v578
        %641 = vmatpush.bf16.msra.mxu0 %v576
        %642 = vmatpush.bf16.msra.mxu0 %v574
        %643 = vmatmul.bf16.gmra.mxu0 %v231
        %v644 = vpop.f32.mrf.mxu0
        %v645 = vadd.f32 %v632, %v644
        %v646 = vpop.f32.mrf.mxu0
        %647 = vdwg.mxu0
        %648 = vmatpush.bf16.msra.mxu0 %v573
        %649 = vmatpush.bf16.msra.mxu0 %v571
        %650 = vmatpush.bf16.msra.mxu0 %v569
        %651 = vmatpush.bf16.msra.mxu0 %v567
        %652 = vmatpush.bf16.msra.mxu0 %v565
        %653 = vmatpush.bf16.msra.mxu0 %v563
        %654 = vmatpush.bf16.msra.mxu0 %v561
        %655 = vmatpush.bf16.msra.mxu0 %v559
        %656 = vmatmul.bf16.gmra.mxu0 %v230
        %v657 = vpop.f32.mrf.mxu0
        %v658 = vadd.f32 %v457, %v657
        %v659 = vpop.f32.mrf.mxu0
        %660 = vdwg.mxu0
        %661 = vmatpush.bf16.msra.mxu0 %v589
        %662 = vmatpush.bf16.msra.mxu0 %v587
        %663 = vmatpush.bf16.msra.mxu0 %v585
        %664 = vmatpush.bf16.msra.mxu0 %v583
        %665 = vmatpush.bf16.msra.mxu0 %v581
        %666 = vmatpush.bf16.msra.mxu0 %v579
        %667 = vmatpush.bf16.msra.mxu0 %v577
        %668 = vmatpush.bf16.msra.mxu0 %v575
        %669 = vmatmul.bf16.gmra.mxu0 %v231
        %v670 = vpop.f32.mrf.mxu0
        %v671 = vadd.f32 %v658, %v670
        %v672 = vpop.f32.mrf.mxu0
        %673 = vdwg.mxu0
        %v674 = vld [vmem:[%s155] sm:$0xee]
        %s675 = scalar_lea.vmem [#allocation2], 512
        %v676 = vld [vmem:[%s675] sm:$0xff]
        %v677 = vld [vmem:[%s675 + $0x8] sm:$0xff]
        %v678 = vld [vmem:[%s675 + $0x10] sm:$0xff]
        %v679 = vld [vmem:[%s675 + $0x18] sm:$0xff]
        %v680 = vld [vmem:[%s675 + $0x20] sm:$0xff]
        %v681 = vld [vmem:[%s675 + $0x28] sm:$0xff]
        %v682 = vld [vmem:[%s675 + $0x30] sm:$0xff]
        %v683 = vld [vmem:[%s675 + $0x38] sm:$0xff]
        %v684 = vld [vmem:[%s675 + $0x40] sm:$0xff]
        %v685 = vld [vmem:[%s675 + $0x48] sm:$0xff]
        %v686 = vld [vmem:[%s675 + $0x50] sm:$0xff]
        %v687 = vld [vmem:[%s675 + $0x58] sm:$0xff]
        %v688 = vld [vmem:[%s675 + $0x60] sm:$0xff]
        %v689 = vld [vmem:[%s675 + $0x68] sm:$0xff]
        %v690 = vld [vmem:[%s675 + $0x70] sm:$0xff]
        %v691 = vld [vmem:[%s675 + $0x78] sm:$0xff]
        %v692 = vld [vmem:[%s675 + $0x80] sm:$0xff]
        %v693 = vld [vmem:[%s675 + $0x88] sm:$0xff]
        %v694 = vld [vmem:[%s675 + $0x90] sm:$0xff]
        %v695 = vld [vmem:[%s675 + $0x98] sm:$0xff]
        %v696 = vld [vmem:[%s675 + $0xa0] sm:$0xff]
        %v697 = vld [vmem:[%s675 + $0xa8] sm:$0xff]
        %v698 = vld [vmem:[%s675 + $0xb0] sm:$0xff]
        %v699 = vld [vmem:[%s675 + $0xb8] sm:$0xff]
        %v700 = vld [vmem:[%s675 + $0xc0] sm:$0xff]
        %v701 = vld [vmem:[%s675 + $0xc8] sm:$0xff]
        %v702 = vld [vmem:[%s675 + $0xd0] sm:$0xff]
        %v703 = vld [vmem:[%s675 + $0xd8] sm:$0xff]
        %v704 = vld [vmem:[%s675 + $0xe0] sm:$0xff]
        %v705 = vld [vmem:[%s675 + $0xe8] sm:$0xff]
        %v706 = vld [vmem:[%s675 + $0xf0] sm:$0xff]
        %v707 = vld [vmem:[%s675 + $0xf8] sm:$0xff]
        %v709 = vunpack.c.l.b16 %v674
        %v710 = vunpack.c.h.b16 %v674
        %v711 = vpack.c.b16 %v709, %v709
        %v712 = vpack.c.b16 %v710, %v710
        %v713 = vrot.slane %v711, 1
        %v714 = vrot.slane %v712, 1
        %v749 = vunpack.c.l.b16 %v676
        %v750 = vunpack.c.h.b16 %v676
        %v751 = vunpack.c.l.b16 %v677
        %v752 = vunpack.c.h.b16 %v677
        %v753 = vunpack.c.l.b16 %v678
        %v754 = vunpack.c.h.b16 %v678
        %v755 = vunpack.c.l.b16 %v679
        %v756 = vunpack.c.h.b16 %v679
        %v757 = vunpack.c.l.b16 %v680
        %v758 = vunpack.c.h.b16 %v680
        %v759 = vunpack.c.l.b16 %v681
        %v760 = vunpack.c.h.b16 %v681
        %v761 = vunpack.c.l.b16 %v682
        %v762 = vunpack.c.h.b16 %v682
        %v763 = vunpack.c.l.b16 %v683
        %v764 = vunpack.c.h.b16 %v683
        %v765 = vunpack.c.l.b16 %v684
        %v766 = vunpack.c.h.b16 %v684
        %v767 = vunpack.c.l.b16 %v685
        %v768 = vunpack.c.h.b16 %v685
        %v769 = vunpack.c.l.b16 %v686
        %v770 = vunpack.c.h.b16 %v686
        %v771 = vunpack.c.l.b16 %v687
        %v772 = vunpack.c.h.b16 %v687
        %v773 = vunpack.c.l.b16 %v688
        %v774 = vunpack.c.h.b16 %v688
        %v775 = vunpack.c.l.b16 %v689
        %v776 = vunpack.c.h.b16 %v689
        %v777 = vunpack.c.l.b16 %v690
        %v778 = vunpack.c.h.b16 %v690
        %v779 = vunpack.c.l.b16 %v691
        %v780 = vunpack.c.h.b16 %v691
        %v781 = vunpack.c.l.b16 %v692
        %v782 = vunpack.c.h.b16 %v692
        %v783 = vunpack.c.l.b16 %v693
        %v784 = vunpack.c.h.b16 %v693
        %v785 = vunpack.c.l.b16 %v694
        %v786 = vunpack.c.h.b16 %v694
        %v787 = vunpack.c.l.b16 %v695
        %v788 = vunpack.c.h.b16 %v695
        %v789 = vunpack.c.l.b16 %v696
        %v790 = vunpack.c.h.b16 %v696
        %v791 = vunpack.c.l.b16 %v697
        %v792 = vunpack.c.h.b16 %v697
        %v793 = vunpack.c.l.b16 %v698
        %v794 = vunpack.c.h.b16 %v698
        %v795 = vunpack.c.l.b16 %v699
        %v796 = vunpack.c.h.b16 %v699
        %v797 = vunpack.c.l.b16 %v700
        %v798 = vunpack.c.h.b16 %v700
        %v799 = vunpack.c.l.b16 %v701
        %v800 = vunpack.c.h.b16 %v701
        %v801 = vunpack.c.l.b16 %v702
        %v802 = vunpack.c.h.b16 %v702
        %v803 = vunpack.c.l.b16 %v703
        %v804 = vunpack.c.h.b16 %v703
        %v805 = vunpack.c.l.b16 %v704
        %v806 = vunpack.c.h.b16 %v704
        %v807 = vunpack.c.l.b16 %v705
        %v808 = vunpack.c.h.b16 %v705
        %v809 = vunpack.c.l.b16 %v706
        %v810 = vunpack.c.h.b16 %v706
        %v811 = vunpack.c.l.b16 %v707
        %v812 = vunpack.c.h.b16 %v707
        %v813 = vpack.c.b16 %v751, %v749
        %v814 = vpack.c.b16 %v752, %v750
        %v815 = vpack.c.b16 %v755, %v753
        %v816 = vpack.c.b16 %v756, %v754
        %v817 = vpack.c.b16 %v759, %v757
        %v818 = vpack.c.b16 %v760, %v758
        %v819 = vpack.c.b16 %v763, %v761
        %v820 = vpack.c.b16 %v764, %v762
        %v821 = vpack.c.b16 %v767, %v765
        %v822 = vpack.c.b16 %v768, %v766
        %v823 = vpack.c.b16 %v771, %v769
        %v824 = vpack.c.b16 %v772, %v770
        %v825 = vpack.c.b16 %v775, %v773
        %v826 = vpack.c.b16 %v776, %v774
        %v827 = vpack.c.b16 %v779, %v777
        %v828 = vpack.c.b16 %v780, %v778
        %v829 = vpack.c.b16 %v783, %v781
        %v830 = vpack.c.b16 %v784, %v782
        %v831 = vpack.c.b16 %v787, %v785
        %v832 = vpack.c.b16 %v788, %v786
        %v833 = vpack.c.b16 %v791, %v789
        %v834 = vpack.c.b16 %v792, %v790
        %v835 = vpack.c.b16 %v795, %v793
        %v836 = vpack.c.b16 %v796, %v794
        %v837 = vpack.c.b16 %v799, %v797
        %v838 = vpack.c.b16 %v800, %v798
        %v839 = vpack.c.b16 %v803, %v801
        %v840 = vpack.c.b16 %v804, %v802
        %v841 = vpack.c.b16 %v807, %v805
        %v842 = vpack.c.b16 %v808, %v806
        %v843 = vpack.c.b16 %v811, %v809
        %v844 = vpack.c.b16 %v812, %v810
        %877 = vmatpush.bf16.msra.mxu0 %v827
        %878 = vmatpush.bf16.msra.mxu0 %v825
        %879 = vmatpush.bf16.msra.mxu0 %v823
        %880 = vmatpush.bf16.msra.mxu0 %v821
        %881 = vmatpush.bf16.msra.mxu0 %v819
        %882 = vmatpush.bf16.msra.mxu0 %v817
        %883 = vmatpush.bf16.msra.mxu0 %v815
        %884 = vmatpush.bf16.msra.mxu0 %v813
        %885 = vmatmul.bf16.gmra.mxu0 %v713
        %v886 = vpop.f32.mrf.mxu0
        %v887 = vadd.f32 0.0, %v886
        %v888 = vpop.f32.mrf.mxu0
        %889 = vdwg.mxu0
        %890 = vmatpush.bf16.msra.mxu0 %v843
        %891 = vmatpush.bf16.msra.mxu0 %v841
        %892 = vmatpush.bf16.msra.mxu0 %v839
        %893 = vmatpush.bf16.msra.mxu0 %v837
        %894 = vmatpush.bf16.msra.mxu0 %v835
        %895 = vmatpush.bf16.msra.mxu0 %v833
        %896 = vmatpush.bf16.msra.mxu0 %v831
        %897 = vmatpush.bf16.msra.mxu0 %v829
        %898 = vmatmul.bf16.gmra.mxu0 %v714
        %v899 = vpop.f32.mrf.mxu0
        %v900 = vadd.f32 %v887, %v899
        %v901 = vpop.f32.mrf.mxu0
        %902 = vdwg.mxu0
        %903 = vmatpush.bf16.msra.mxu0 %v828
        %904 = vmatpush.bf16.msra.mxu0 %v826
        %905 = vmatpush.bf16.msra.mxu0 %v824
        %906 = vmatpush.bf16.msra.mxu0 %v822
        %907 = vmatpush.bf16.msra.mxu0 %v820
        %908 = vmatpush.bf16.msra.mxu0 %v818
        %909 = vmatpush.bf16.msra.mxu0 %v816
        %910 = vmatpush.bf16.msra.mxu0 %v814
        %911 = vmatmul.bf16.gmra.mxu0 %v713
        %v912 = vpop.f32.mrf.mxu0
        %v913 = vadd.f32 0.0, %v912
        %v914 = vpop.f32.mrf.mxu0
        %915 = vdwg.mxu0
        %916 = vmatpush.bf16.msra.mxu0 %v844
        %917 = vmatpush.bf16.msra.mxu0 %v842
        %918 = vmatpush.bf16.msra.mxu0 %v840
        %919 = vmatpush.bf16.msra.mxu0 %v838
        %920 = vmatpush.bf16.msra.mxu0 %v836
        %921 = vmatpush.bf16.msra.mxu0 %v834
        %922 = vmatpush.bf16.msra.mxu0 %v832
        %923 = vmatpush.bf16.msra.mxu0 %v830
        %924 = vmatmul.bf16.gmra.mxu0 %v714
        %v925 = vpop.f32.mrf.mxu0
        %v926 = vadd.f32 %v913, %v925
        %v927 = vpop.f32.mrf.mxu0
        %928 = vdwg.mxu0
        %v929 = vadd.f32 %v645, %v900
        %v930 = vadd.f32 %v671, %v926
        %s931 = scalar_lea.vmem [#allocation2], 768
        %v932 = vld [vmem:[%s931] sm:$0xff]
        %v933 = vld [vmem:[%s931 + $0x8] sm:$0xff]
        %v934 = vld [vmem:[%s931 + $0x10] sm:$0xff]
        %v935 = vld [vmem:[%s931 + $0x18] sm:$0xff]
        %v936 = vld [vmem:[%s931 + $0x20] sm:$0xff]
        %v937 = vld [vmem:[%s931 + $0x28] sm:$0xff]
        %v938 = vld [vmem:[%s931 + $0x30] sm:$0xff]
        %v939 = vld [vmem:[%s931 + $0x38] sm:$0xff]
        %v940 = vld [vmem:[%s931 + $0x40] sm:$0xff]
        %v941 = vld [vmem:[%s931 + $0x48] sm:$0xff]
        %v942 = vld [vmem:[%s931 + $0x50] sm:$0xff]
        %v943 = vld [vmem:[%s931 + $0x58] sm:$0xff]
        %v944 = vld [vmem:[%s931 + $0x60] sm:$0xff]
        %v945 = vld [vmem:[%s931 + $0x68] sm:$0xff]
        %v946 = vld [vmem:[%s931 + $0x70] sm:$0xff]
        %v947 = vld [vmem:[%s931 + $0x78] sm:$0xff]
        %v948 = vld [vmem:[%s931 + $0x80] sm:$0xff]
        %v949 = vld [vmem:[%s931 + $0x88] sm:$0xff]
        %v950 = vld [vmem:[%s931 + $0x90] sm:$0xff]
        %v951 = vld [vmem:[%s931 + $0x98] sm:$0xff]
        %v952 = vld [vmem:[%s931 + $0xa0] sm:$0xff]
        %v953 = vld [vmem:[%s931 + $0xa8] sm:$0xff]
        %v954 = vld [vmem:[%s931 + $0xb0] sm:$0xff]
        %v955 = vld [vmem:[%s931 + $0xb8] sm:$0xff]
        %v956 = vld [vmem:[%s931 + $0xc0] sm:$0xff]
        %v957 = vld [vmem:[%s931 + $0xc8] sm:$0xff]
        %v958 = vld [vmem:[%s931 + $0xd0] sm:$0xff]
        %v959 = vld [vmem:[%s931 + $0xd8] sm:$0xff]
        %v960 = vld [vmem:[%s931 + $0xe0] sm:$0xff]
        %v961 = vld [vmem:[%s931 + $0xe8] sm:$0xff]
        %v962 = vld [vmem:[%s931 + $0xf0] sm:$0xff]
        %v963 = vld [vmem:[%s931 + $0xf8] sm:$0xff]
        %v965 = vshrl.u32 %v711, 16
        %v967 = vrot.slane %v965, 1
        %v968 = vshll.u32 %v711, 16
        %v970 = vrot.slane %v968, 2
        %v971 = vor.u32 %v967, %v970
        %v973 = vshrl.u32 %v712, 16
        %v975 = vrot.slane %v973, 1
        %v976 = vshll.u32 %v712, 16
        %v978 = vrot.slane %v976, 2
        %v979 = vor.u32 %v975, %v978
        %v1014 = vunpack.c.l.b16 %v932
        %v1015 = vunpack.c.h.b16 %v932
        %v1016 = vunpack.c.l.b16 %v933
        %v1017 = vunpack.c.h.b16 %v933
        %v1018 = vunpack.c.l.b16 %v934
        %v1019 = vunpack.c.h.b16 %v934
        %v1020 = vunpack.c.l.b16 %v935
        %v1021 = vunpack.c.h.b16 %v935
        %v1022 = vunpack.c.l.b16 %v936
        %v1023 = vunpack.c.h.b16 %v936
        %v1024 = vunpack.c.l.b16 %v937
        %v1025 = vunpack.c.h.b16 %v937
        %v1026 = vunpack.c.l.b16 %v938
        %v1027 = vunpack.c.h.b16 %v938
        %v1028 = vunpack.c.l.b16 %v939
        %v1029 = vunpack.c.h.b16 %v939
        %v1030 = vunpack.c.l.b16 %v940
        %v1031 = vunpack.c.h.b16 %v940
        %v1032 = vunpack.c.l.b16 %v941
        %v1033 = vunpack.c.h.b16 %v941
        %v1034 = vunpack.c.l.b16 %v942
        %v1035 = vunpack.c.h.b16 %v942
        %v1036 = vunpack.c.l.b16 %v943
        %v1037 = vunpack.c.h.b16 %v943
        %v1038 = vunpack.c.l.b16 %v944
        %v1039 = vunpack.c.h.b16 %v944
        %v1040 = vunpack.c.l.b16 %v945
        %v1041 = vunpack.c.h.b16 %v945
        %v1042 = vunpack.c.l.b16 %v946
        %v1043 = vunpack.c.h.b16 %v946
        %v1044 = vunpack.c.l.b16 %v947
        %v1045 = vunpack.c.h.b16 %v947
        %v1046 = vunpack.c.l.b16 %v948
        %v1047 = vunpack.c.h.b16 %v948
        %v1048 = vunpack.c.l.b16 %v949
        %v1049 = vunpack.c.h.b16 %v949
        %v1050 = vunpack.c.l.b16 %v950
        %v1051 = vunpack.c.h.b16 %v950
        %v1052 = vunpack.c.l.b16 %v951
        %v1053 = vunpack.c.h.b16 %v951
        %v1054 = vunpack.c.l.b16 %v952
        %v1055 = vunpack.c.h.b16 %v952
        %v1056 = vunpack.c.l.b16 %v953
        %v1057 = vunpack.c.h.b16 %v953
        %v1058 = vunpack.c.l.b16 %v954
        %v1059 = vunpack.c.h.b16 %v954
        %v1060 = vunpack.c.l.b16 %v955
        %v1061 = vunpack.c.h.b16 %v955
        %v1062 = vunpack.c.l.b16 %v956
        %v1063 = vunpack.c.h.b16 %v956
        %v1064 = vunpack.c.l.b16 %v957
        %v1065 = vunpack.c.h.b16 %v957
        %v1066 = vunpack.c.l.b16 %v958
        %v1067 = vunpack.c.h.b16 %v958
        %v1068 = vunpack.c.l.b16 %v959
        %v1069 = vunpack.c.h.b16 %v959
        %v1070 = vunpack.c.l.b16 %v960
        %v1071 = vunpack.c.h.b16 %v960
        %v1072 = vunpack.c.l.b16 %v961
        %v1073 = vunpack.c.h.b16 %v961
        %v1074 = vunpack.c.l.b16 %v962
        %v1075 = vunpack.c.h.b16 %v962
        %v1076 = vunpack.c.l.b16 %v963
        %v1077 = vunpack.c.h.b16 %v963
        %v1078 = vpack.c.b16 %v1016, %v1014
        %v1079 = vpack.c.b16 %v1017, %v1015
        %v1080 = vpack.c.b16 %v1020, %v1018
        %v1081 = vpack.c.b16 %v1021, %v1019
        %v1082 = vpack.c.b16 %v1024, %v1022
        %v1083 = vpack.c.b16 %v1025, %v1023
        %v1084 = vpack.c.b16 %v1028, %v1026
        %v1085 = vpack.c.b16 %v1029, %v1027
        %v1086 = vpack.c.b16 %v1032, %v1030
        %v1087 = vpack.c.b16 %v1033, %v1031
        %v1088 = vpack.c.b16 %v1036, %v1034
        %v1089 = vpack.c.b16 %v1037, %v1035
        %v1090 = vpack.c.b16 %v1040, %v1038
        %v1091 = vpack.c.b16 %v1041, %v1039
        %v1092 = vpack.c.b16 %v1044, %v1042
        %v1093 = vpack.c.b16 %v1045, %v1043
        %v1094 = vpack.c.b16 %v1048, %v1046
        %v1095 = vpack.c.b16 %v1049, %v1047
        %v1096 = vpack.c.b16 %v1052, %v1050
        %v1097 = vpack.c.b16 %v1053, %v1051
        %v1098 = vpack.c.b16 %v1056, %v1054
        %v1099 = vpack.c.b16 %v1057, %v1055
        %v1100 = vpack.c.b16 %v1060, %v1058
        %v1101 = vpack.c.b16 %v1061, %v1059
        %v1102 = vpack.c.b16 %v1064, %v1062
        %v1103 = vpack.c.b16 %v1065, %v1063
        %v1104 = vpack.c.b16 %v1068, %v1066
        %v1105 = vpack.c.b16 %v1069, %v1067
        %v1106 = vpack.c.b16 %v1072, %v1070
        %v1107 = vpack.c.b16 %v1073, %v1071
        %v1108 = vpack.c.b16 %v1076, %v1074
        %v1109 = vpack.c.b16 %v1077, %v1075
        %1142 = vmatpush.bf16.msra.mxu0 %v1092
        %1143 = vmatpush.bf16.msra.mxu0 %v1090
        %1144 = vmatpush.bf16.msra.mxu0 %v1088
        %1145 = vmatpush.bf16.msra.mxu0 %v1086
        %1146 = vmatpush.bf16.msra.mxu0 %v1084
        %1147 = vmatpush.bf16.msra.mxu0 %v1082
        %1148 = vmatpush.bf16.msra.mxu0 %v1080
        %1149 = vmatpush.bf16.msra.mxu0 %v1078
        %1150 = vmatmul.bf16.gmra.mxu0 %v971
        %v1151 = vpop.f32.mrf.mxu0
        %v1152 = vadd.f32 0.0, %v1151
        %v1153 = vpop.f32.mrf.mxu0
        %1154 = vdwg.mxu0
        %1155 = vmatpush.bf16.msra.mxu0 %v1108
        %1156 = vmatpush.bf16.msra.mxu0 %v1106
        %1157 = vmatpush.bf16.msra.mxu0 %v1104
        %1158 = vmatpush.bf16.msra.mxu0 %v1102
        %1159 = vmatpush.bf16.msra.mxu0 %v1100
        %1160 = vmatpush.bf16.msra.mxu0 %v1098
        %1161 = vmatpush.bf16.msra.mxu0 %v1096
        %1162 = vmatpush.bf16.msra.mxu0 %v1094
        %1163 = vmatmul.bf16.gmra.mxu0 %v979
        %v1164 = vpop.f32.mrf.mxu0
        %v1165 = vadd.f32 %v1152, %v1164
        %v1166 = vpop.f32.mrf.mxu0
        %1167 = vdwg.mxu0
        %1168 = vmatpush.bf16.msra.mxu0 %v1093
        %1169 = vmatpush.bf16.msra.mxu0 %v1091
        %1170 = vmatpush.bf16.msra.mxu0 %v1089
        %1171 = vmatpush.bf16.msra.mxu0 %v1087
        %1172 = vmatpush.bf16.msra.mxu0 %v1085
        %1173 = vmatpush.bf16.msra.mxu0 %v1083
        %1174 = vmatpush.bf16.msra.mxu0 %v1081
        %1175 = vmatpush.bf16.msra.mxu0 %v1079
        %1176 = vmatmul.bf16.gmra.mxu0 %v971
        %v1177 = vpop.f32.mrf.mxu0
        %v1178 = vadd.f32 0.0, %v1177
        %v1179 = vpop.f32.mrf.mxu0
        %1180 = vdwg.mxu0
        %1181 = vmatpush.bf16.msra.mxu0 %v1109
        %1182 = vmatpush.bf16.msra.mxu0 %v1107
        %1183 = vmatpush.bf16.msra.mxu0 %v1105
        %1184 = vmatpush.bf16.msra.mxu0 %v1103
        %1185 = vmatpush.bf16.msra.mxu0 %v1101
        %1186 = vmatpush.bf16.msra.mxu0 %v1099
        %1187 = vmatpush.bf16.msra.mxu0 %v1097
        %1188 = vmatpush.bf16.msra.mxu0 %v1095
        %1189 = vmatmul.bf16.gmra.mxu0 %v979
        %v1190 = vpop.f32.mrf.mxu0
        %v1191 = vadd.f32 %v1178, %v1190
        %v1192 = vpop.f32.mrf.mxu0
        %1193 = vdwg.mxu0
        %v1194 = vadd.f32 %v929, %v1165
        %v1195 = vadd.f32 %v930, %v1191
        %v1196 = vld [vmem:[%s155] sm:$0xcc]
        %v1197 = vld [vmem:[%s155 + $0x8] sm:$0x11]
        %s1198 = scalar_lea.vmem [#allocation2], 1024
        %v1199 = vld [vmem:[%s1198] sm:$0xff]
        %v1200 = vld [vmem:[%s1198 + $0x8] sm:$0xff]
        %v1201 = vld [vmem:[%s1198 + $0x10] sm:$0xff]
        %v1202 = vld [vmem:[%s1198 + $0x18] sm:$0xff]
        %v1203 = vld [vmem:[%s1198 + $0x20] sm:$0xff]
        %v1204 = vld [vmem:[%s1198 + $0x28] sm:$0xff]
        %v1205 = vld [vmem:[%s1198 + $0x30] sm:$0xff]
        %v1206 = vld [vmem:[%s1198 + $0x38] sm:$0xff]
        %v1207 = vld [vmem:[%s1198 + $0x40] sm:$0xff]
        %v1208 = vld [vmem:[%s1198 + $0x48] sm:$0xff]
        %v1209 = vld [vmem:[%s1198 + $0x50] sm:$0xff]
        %v1210 = vld [vmem:[%s1198 + $0x58] sm:$0xff]
        %v1211 = vld [vmem:[%s1198 + $0x60] sm:$0xff]
        %v1212 = vld [vmem:[%s1198 + $0x68] sm:$0xff]
        %v1213 = vld [vmem:[%s1198 + $0x70] sm:$0xff]
        %v1214 = vld [vmem:[%s1198 + $0x78] sm:$0xff]
        %v1215 = vld [vmem:[%s1198 + $0x80] sm:$0xff]
        %v1216 = vld [vmem:[%s1198 + $0x88] sm:$0xff]
        %v1217 = vld [vmem:[%s1198 + $0x90] sm:$0xff]
        %v1218 = vld [vmem:[%s1198 + $0x98] sm:$0xff]
        %v1219 = vld [vmem:[%s1198 + $0xa0] sm:$0xff]
        %v1220 = vld [vmem:[%s1198 + $0xa8] sm:$0xff]
        %v1221 = vld [vmem:[%s1198 + $0xb0] sm:$0xff]
        %v1222 = vld [vmem:[%s1198 + $0xb8] sm:$0xff]
        %v1223 = vld [vmem:[%s1198 + $0xc0] sm:$0xff]
        %v1224 = vld [vmem:[%s1198 + $0xc8] sm:$0xff]
        %v1225 = vld [vmem:[%s1198 + $0xd0] sm:$0xff]
        %v1226 = vld [vmem:[%s1198 + $0xd8] sm:$0xff]
        %v1227 = vld [vmem:[%s1198 + $0xe0] sm:$0xff]
        %v1228 = vld [vmem:[%s1198 + $0xe8] sm:$0xff]
        %v1229 = vld [vmem:[%s1198 + $0xf0] sm:$0xff]
        %v1230 = vld [vmem:[%s1198 + $0xf8] sm:$0xff]
        %v1233 = vunpack.c.l.b16 %v1196
        %v1234 = vunpack.c.h.b16 %v1196
        %v1235 = vunpack.c.l.b16 %v1197
        %v1236 = vunpack.c.h.b16 %v1197
        %v1237 = vpack.c.b16 %v1235, %v1233
        %v1238 = vpack.c.b16 %v1236, %v1234
        %v1239 = vrot.slane %v1237, 2
        %v1240 = vrot.slane %v1238, 2
        %v1275 = vunpack.c.l.b16 %v1199
        %v1276 = vunpack.c.h.b16 %v1199
        %v1277 = vunpack.c.l.b16 %v1200
        %v1278 = vunpack.c.h.b16 %v1200
        %v1279 = vunpack.c.l.b16 %v1201
        %v1280 = vunpack.c.h.b16 %v1201
        %v1281 = vunpack.c.l.b16 %v1202
        %v1282 = vunpack.c.h.b16 %v1202
        %v1283 = vunpack.c.l.b16 %v1203
        %v1284 = vunpack.c.h.b16 %v1203
        %v1285 = vunpack.c.l.b16 %v1204
        %v1286 = vunpack.c.h.b16 %v1204
        %v1287 = vunpack.c.l.b16 %v1205
        %v1288 = vunpack.c.h.b16 %v1205
        %v1289 = vunpack.c.l.b16 %v1206
        %v1290 = vunpack.c.h.b16 %v1206
        %v1291 = vunpack.c.l.b16 %v1207
        %v1292 = vunpack.c.h.b16 %v1207
        %v1293 = vunpack.c.l.b16 %v1208
        %v1294 = vunpack.c.h.b16 %v1208
        %v1295 = vunpack.c.l.b16 %v1209
        %v1296 = vunpack.c.h.b16 %v1209
        %v1297 = vunpack.c.l.b16 %v1210
        %v1298 = vunpack.c.h.b16 %v1210
        %v1299 = vunpack.c.l.b16 %v1211
        %v1300 = vunpack.c.h.b16 %v1211
        %v1301 = vunpack.c.l.b16 %v1212
        %v1302 = vunpack.c.h.b16 %v1212
        %v1303 = vunpack.c.l.b16 %v1213
        %v1304 = vunpack.c.h.b16 %v1213
        %v1305 = vunpack.c.l.b16 %v1214
        %v1306 = vunpack.c.h.b16 %v1214
        %v1307 = vunpack.c.l.b16 %v1215
        %v1308 = vunpack.c.h.b16 %v1215
        %v1309 = vunpack.c.l.b16 %v1216
        %v1310 = vunpack.c.h.b16 %v1216
        %v1311 = vunpack.c.l.b16 %v1217
        %v1312 = vunpack.c.h.b16 %v1217
        %v1313 = vunpack.c.l.b16 %v1218
        %v1314 = vunpack.c.h.b16 %v1218
        %v1315 = vunpack.c.l.b16 %v1219
        %v1316 = vunpack.c.h.b16 %v1219
        %v1317 = vunpack.c.l.b16 %v1220
        %v1318 = vunpack.c.h.b16 %v1220
        %v1319 = vunpack.c.l.b16 %v1221
        %v1320 = vunpack.c.h.b16 %v1221
        %v1321 = vunpack.c.l.b16 %v1222
        %v1322 = vunpack.c.h.b16 %v1222
        %v1323 = vunpack.c.l.b16 %v1223
        %v1324 = vunpack.c.h.b16 %v1223
        %v1325 = vunpack.c.l.b16 %v1224
        %v1326 = vunpack.c.h.b16 %v1224
        %v1327 = vunpack.c.l.b16 %v1225
        %v1328 = vunpack.c.h.b16 %v1225
        %v1329 = vunpack.c.l.b16 %v1226
        %v1330 = vunpack.c.h.b16 %v1226
        %v1331 = vunpack.c.l.b16 %v1227
        %v1332 = vunpack.c.h.b16 %v1227
        %v1333 = vunpack.c.l.b16 %v1228
        %v1334 = vunpack.c.h.b16 %v1228
        %v1335 = vunpack.c.l.b16 %v1229
        %v1336 = vunpack.c.h.b16 %v1229
        %v1337 = vunpack.c.l.b16 %v1230
        %v1338 = vunpack.c.h.b16 %v1230
        %v1339 = vpack.c.b16 %v1277, %v1275
        %v1340 = vpack.c.b16 %v1278, %v1276
        %v1341 = vpack.c.b16 %v1281, %v1279
        %v1342 = vpack.c.b16 %v1282, %v1280
        %v1343 = vpack.c.b16 %v1285, %v1283
        %v1344 = vpack.c.b16 %v1286, %v1284
        %v1345 = vpack.c.b16 %v1289, %v1287
        %v1346 = vpack.c.b16 %v1290, %v1288
        %v1347 = vpack.c.b16 %v1293, %v1291
        %v1348 = vpack.c.b16 %v1294, %v1292
        %v1349 = vpack.c.b16 %v1297, %v1295
        %v1350 = vpack.c.b16 %v1298, %v1296
        %v1351 = vpack.c.b16 %v1301, %v1299
        %v1352 = vpack.c.b16 %v1302, %v1300
        %v1353 = vpack.c.b16 %v1305, %v1303
        %v1354 = vpack.c.b16 %v1306, %v1304
        %v1355 = vpack.c.b16 %v1309, %v1307
        %v1356 = vpack.c.b16 %v1310, %v1308
        %v1357 = vpack.c.b16 %v1313, %v1311
        %v1358 = vpack.c.b16 %v1314, %v1312
        %v1359 = vpack.c.b16 %v1317, %v1315
        %v1360 = vpack.c.b16 %v1318, %v1316
        %v1361 = vpack.c.b16 %v1321, %v1319
        %v1362 = vpack.c.b16 %v1322, %v1320
        %v1363 = vpack.c.b16 %v1325, %v1323
        %v1364 = vpack.c.b16 %v1326, %v1324
        %v1365 = vpack.c.b16 %v1329, %v1327
        %v1366 = vpack.c.b16 %v1330, %v1328
        %v1367 = vpack.c.b16 %v1333, %v1331
        %v1368 = vpack.c.b16 %v1334, %v1332
        %v1369 = vpack.c.b16 %v1337, %v1335
        %v1370 = vpack.c.b16 %v1338, %v1336
        %1403 = vmatpush.bf16.msra.mxu0 %v1353
        %1404 = vmatpush.bf16.msra.mxu0 %v1351
        %1405 = vmatpush.bf16.msra.mxu0 %v1349
        %1406 = vmatpush.bf16.msra.mxu0 %v1347
        %1407 = vmatpush.bf16.msra.mxu0 %v1345
        %1408 = vmatpush.bf16.msra.mxu0 %v1343
        %1409 = vmatpush.bf16.msra.mxu0 %v1341
        %1410 = vmatpush.bf16.msra.mxu0 %v1339
        %1411 = vmatmul.bf16.gmra.mxu0 %v1239
        %v1412 = vpop.f32.mrf.mxu0
        %v1413 = vadd.f32 0.0, %v1412
        %v1414 = vpop.f32.mrf.mxu0
        %1415 = vdwg.mxu0
        %1416 = vmatpush.bf16.msra.mxu0 %v1369
        %1417 = vmatpush.bf16.msra.mxu0 %v1367
        %1418 = vmatpush.bf16.msra.mxu0 %v1365
        %1419 = vmatpush.bf16.msra.mxu0 %v1363
        %1420 = vmatpush.bf16.msra.mxu0 %v1361
        %1421 = vmatpush.bf16.msra.mxu0 %v1359
        %1422 = vmatpush.bf16.msra.mxu0 %v1357
        %1423 = vmatpush.bf16.msra.mxu0 %v1355
        %1424 = vmatmul.bf16.gmra.mxu0 %v1240
        %v1425 = vpop.f32.mrf.mxu0
        %v1426 = vadd.f32 %v1413, %v1425
        %v1427 = vpop.f32.mrf.mxu0
        %1428 = vdwg.mxu0
        %1429 = vmatpush.bf16.msra.mxu0 %v1354
        %1430 = vmatpush.bf16.msra.mxu0 %v1352
        %1431 = vmatpush.bf16.msra.mxu0 %v1350
        %1432 = vmatpush.bf16.msra.mxu0 %v1348
        %1433 = vmatpush.bf16.msra.mxu0 %v1346
        %1434 = vmatpush.bf16.msra.mxu0 %v1344
        %1435 = vmatpush.bf16.msra.mxu0 %v1342
        %1436 = vmatpush.bf16.msra.mxu0 %v1340
        %1437 = vmatmul.bf16.gmra.mxu0 %v1239
        %v1438 = vpop.f32.mrf.mxu0
        %v1439 = vadd.f32 0.0, %v1438
        %v1440 = vpop.f32.mrf.mxu0
        %1441 = vdwg.mxu0
        %1442 = vmatpush.bf16.msra.mxu0 %v1370
        %1443 = vmatpush.bf16.msra.mxu0 %v1368
        %1444 = vmatpush.bf16.msra.mxu0 %v1366
        %1445 = vmatpush.bf16.msra.mxu0 %v1364
        %1446 = vmatpush.bf16.msra.mxu0 %v1362
        %1447 = vmatpush.bf16.msra.mxu0 %v1360
        %1448 = vmatpush.bf16.msra.mxu0 %v1358
        %1449 = vmatpush.bf16.msra.mxu0 %v1356
        %1450 = vmatmul.bf16.gmra.mxu0 %v1240
        %v1451 = vpop.f32.mrf.mxu0
        %v1452 = vadd.f32 %v1439, %v1451
        %v1453 = vpop.f32.mrf.mxu0
        %1454 = vdwg.mxu0
        %v1455 = vadd.f32 %v1194, %v1426
        %v1456 = vadd.f32 %v1195, %v1452
        %v1457 = vtanh.pop %v1455
        %v1458 = vtanh.pop %v1456
        %1459 = vst [vmem:[%s160] sm:$0x1f] %v1457
        %1460 = vst [vmem:[%s160 + $0x8] sm:$0x1f] %v1458
        %p1461 = scmp.lt.s32.totalorder %s14, 1
        %s1462 = scalar_select %p1461, %s14, 1
        %s1463 = smul.addr %s1462, 2
        %s1464 = smul.addr %s1463, 8
        %s1465 = scalar_lea.vmem %s2, %s1464
        // Predicated region
        $region33: #{generator_forward.3} parent=27 // pred_check
          %p1466 = pneg %p79
        $region34: #{generator_forward.3} parent=27 // pred_check_branch
          %1468 = sbr.rel (%p1466) target = $region36
        $region35: #{generator_forward.3} parent=27 // pred_region
          _
        $region36: #{generator_forward.3} parent=27 // pred_fallthru
          _
      $region28: #{generator_forward.3} parent=5 // pred_fallthru
        _
      %p1469 = scmp.le.s32.totalorder 2, %s9
      // Predicated region
      $region37: #{generator_forward.3} parent=5 // pred_check
        %p1470 = pneg %p1469
      $region38: #{generator_forward.3} parent=5 // pred_check_branch
        %1472 = sbr.rel (%p1470) target = $region40
      $region39: #{generator_forward.3} parent=5 // pred_region
        %s1473 = ssub.s32 %s9, 2
        // Predicated region
        $region41: #{generator_forward.3} parent=39 // pred_check
          %p1474 = pneg %p85
        $region42: #{generator_forward.3} parent=39 // pred_check_branch
          %1476 = sbr.rel (%p1474) target = $region44
        $region43: #{generator_forward.3} parent=39 // pred_region
          %p1477 = scmp.lt.s32.totalorder %s15, 1
          %s1478 = scalar_select %p1477, %s15, 1
          %s1479 = smul.addr %s1478, 2
          %s1480 = smul.addr %s1479, 8
          %s1481 = scalar_lea.vmem %s2, %s1480
        $region44: #{generator_forward.3} parent=39 // pred_fallthru
          _
      $region40: #{generator_forward.3} parent=5 // pred_fallthru
        _
    $region6: #{generator_forward.3} parent=1 // loop_footer
      %s13 = sadd.s32 1, %s9
    $region7: #{generator_forward.3} parent=1 // loop_footer_branch
      %8 = sbr.rel target = $region3
    $region8: #{generator_forward.3} parent=1 // loop_exit
      _
    %1482 = vsyncpa [#allocation3], 1
    %s1483 = scalar_lea.sflag [#allocation3], 1
    %1484 = vsyncpa %s1483, 1

// kernel: generator_forward.2
$region0: #{generator_forward.2}
  #allocation0 [shape = 'u32[]', space=smem, size = 0x4, offset = 0x4, fixed_abs, tag = 'smem constant byte address 0x4 - core index']
  #allocation1 [shape = 'u32[72,128]{1,0:T(1,128)}', space=vmem, size = 0x9000, scoped, tag = 'internal scratch']
  %s0 = inlined_call_operand.vmem [shape: f32[2,64,20], index: 0, kind: input, shape index: {}]
  %s1 = inlined_call_operand.hbm [shape: bf16[20,128], index: 1, kind: input, shape index: {}]
  %s2 = inlined_call_operand.hbm [shape: f32[1,128], index: 2, kind: input, shape index: {}]
  %s3 = inlined_call_operand.hbm [shape: bf16[128,32], index: 3, kind: input, shape index: {}]
  %s4 = inlined_call_operand.hbm [shape: f32[1,32], index: 4, kind: input, shape index: {}]
  %s5 = inlined_call_operand.hbm [shape: bf16[32,1], index: 5, kind: input, shape index: {}]
  %s6 = inlined_call_operand.hbm [shape: bf16[33,64], index: 6, kind: input, shape index: {}]
  %s7 = inlined_call_operand.hbm [shape: bf16[33,64], index: 7, kind: input, shape index: {}]
  %s8 = inlined_call_operand.hbm [shape: f32[1,32], index: 8, kind: input, shape index: {}]
  %s9 = inlined_call_operand.hbm [shape: f32[1,32], index: 9, kind: input, shape index: {}]
  %s10 = inlined_call_operand.hbm [shape: f32[1,32], index: 10, kind: input, shape index: {}]
  %s11 = inlined_call_operand.hbm [shape: bf16[8,32,32], index: 11, kind: input, shape index: {}]
  %s12 = inlined_call_operand.hbm [shape: f32[8,1,32], index: 12, kind: input, shape index: {}]
  %s13 = inlined_call_operand.vmem [shape: bf16[8,32,32], index: 13, kind: input, shape index: {}]
  %s14 = inlined_call_operand.hbm [shape: f32[8,1,32], index: 14, kind: input, shape index: {}]
  %s15 = inlined_call_operand.hbm [shape: bf16[32,2], index: 15, kind: input, shape index: {}]
  %s16 = inlined_call_operand.hbm [shape: bf16[64,33], index: 16, kind: input, shape index: {}]
  %s17 = inlined_call_operand.hbm [shape: bf16[64,33], index: 17, kind: input, shape index: {}]
  %s18 = inlined_call_operand.hbm [shape: f32[4,1,32], index: 18, kind: input, shape index: {}]
  %s19 = inlined_call_operand.vmem [shape: f32[1,32], index: 19, kind: input, shape index: {}]
  %s20 = inlined_call_operand.hbm [shape: bf16[32,160], index: 20, kind: input, shape index: {}]
  %s21 = inlined_call_operand.hbm [shape: f32[1,160], index: 21, kind: input, shape index: {}]
  %s22 = inlined_call_operand.vmem [shape: bf16[160,5], index: 22, kind: input, shape index: {}]
  %s23 = inlined_call_operand.vmem [shape: bf16[2,64,20], index: 23, kind: output, shape index: {}]
  %s24 = sld [smem:[#allocation0]]
  $region201: #{generator_forward.2} parent=0
    _
  %s26 = ssub.s32 1, %s24
  %s27 = scalar_select 0, %s26, %s24
  $region1: #{generator_forward.2} parent=0
    #allocation2 [shape = 'u8[6144]{0}', space=vmem, size = 0x1800, scoped, tag = 'input window, operand 1, single buffered']
    #allocation3 [shape = 's32[2]{0}', space=sflag, size = 0x8, scoped, tag = 'scoped memory for generator_forward.2']
    #allocation4 [shape = 'u8[512]{0}', space=vmem, size = 0x400, scoped, tag = 'input window, operand 2, single buffered']
    #allocation5 [shape = 's32[1]{0}', space=sflag, size = 0x4, scoped, tag = 'scoped memory for generator_forward.2']
    #allocation6 [shape = 'u8[32768]{0}', space=vmem, size = 0x8000, scoped, tag = 'input window, operand 3, single buffered']
    #allocation7 [shape = 'u8[512]{0}', space=vmem, size = 0x400, scoped, tag = 'input window, operand 4, single buffered']
    #allocation8 [shape = 's32[1]{0}', space=sflag, size = 0x4, scoped, tag = 'scoped memory for generator_forward.2']
    #allocation9 [shape = 'u8[8192]{0}', space=vmem, size = 0x2000, scoped, tag = 'input window, operand 5, single buffered']
    #allocation10 [shape = 'u8[10240]{0}', space=vmem, size = 0x2800, scoped, tag = 'input window, operand 6, single buffered']
    #allocation11 [shape = 's32[1]{0}', space=sflag, size = 0x4, scoped, tag = 'scoped memory for generator_forward.2']
    #allocation12 [shape = 'u8[10240]{0}', space=vmem, size = 0x2800, scoped, tag = 'input window, operand 7, single buffered']
    #allocation13 [shape = 'u8[512]{0}', space=vmem, size = 0x400, scoped, tag = 'input window, operand 8, single buffered']
    #allocation14 [shape = 's32[1]{0}', space=sflag, size = 0x4, scoped, tag = 'scoped memory for generator_forward.2']
    #allocation15 [shape = 'u8[512]{0}', space=vmem, size = 0x400, scoped, tag = 'input window, operand 9, single buffered']
    #allocation16 [shape = 'u8[512]{0}', space=vmem, size = 0x400, scoped, tag = 'input window, operand 10, single buffered']
    #allocation17 [shape = 's32[1]{0}', space=sflag, size = 0x4, scoped, tag = 'scoped memory for generator_forward.2']
    #allocation18 [shape = 'u8[65536]{0}', space=vmem, size = 0x10000, scoped, tag = 'input window, operand 11, single buffered']
    #allocation19 [shape = 'u8[4096]{0}', space=vmem, size = 0x1000, scoped, tag = 'input window, operand 12, single buffered']
    #allocation20 [shape = 's32[1]{0}', space=sflag, size = 0x4, scoped, tag = 'scoped memory for generator_forward.2']
    #allocation21 [shape = 'u8[4096]{0}', space=vmem, size = 0x1000, scoped, tag = 'input window, operand 14, single buffered']
    #allocation22 [shape = 'u8[8192]{0}', space=vmem, size = 0x2000, scoped, tag = 'input window, operand 15, single buffered']
    #allocation23 [shape = 's32[1]{0}', space=sflag, size = 0x4, scoped, tag = 'scoped memory for generator_forward.2']
    #allocation24 [shape = 'u8[16384]{0}', space=vmem, size = 0x4000, scoped, tag = 'input window, operand 16, single buffered']
    #allocation25 [shape = 'u8[16384]{0}', space=vmem, size = 0x4000, scoped, tag = 'input window, operand 17, single buffered']
    #allocation26 [shape = 's32[1]{0}', space=sflag, size = 0x4, scoped, tag = 'scoped memory for generator_forward.2']
    #allocation27 [shape = 'u8[2048]{0}', space=vmem, size = 0x800, scoped, tag = 'input window, operand 18, single buffered']
    #allocation28 [shape = 'u8[16384]{0}', space=vmem, size = 0x4000, scoped, tag = 'input window, operand 20, single buffered']
    #allocation29 [shape = 's32[1]{0}', space=sflag, size = 0x4, scoped, tag = 'scoped memory for generator_forward.2']
    #allocation30 [shape = 'u8[1024]{0}', space=vmem, size = 0x400, scoped, tag = 'input window, operand 21, single buffered']
    %28 = vsyncpa [#allocation3], 0
    %29 = vsyncpa [#allocation5], 0
    %30 = vsyncpa [#allocation8], 0
    %31 = vsyncpa [#allocation11], 0
    %32 = vsyncpa [#allocation14], 0
    %33 = vsyncpa [#allocation17], 0
    %34 = vsyncpa [#allocation20], 0
    %35 = vsyncpa [#allocation23], 0
    %36 = vsyncpa [#allocation26], 0
    %37 = vsyncpa [#allocation29], 0
    loop: start=0, step=1, limit=4
    $region2: #{generator_forward.2} parent=1 // loop_pre_header
      _
    $region3: #{generator_forward.2} parent=1 // loop_header
      %s39 = sphi 0, %s43
      %p40 = scmp.ge.s32.totalorder %s39, 4
      %s49 = sphi 0, %s51
      %s52 = sphi 0, %s49
      %s53 = sphi 0, %s52
      %s69 = sphi 0, %s53
      %s73 = sphi 0, %s73
      %s75 = sphi 0, %s73
      %s76 = sphi 0, %s75
      %s90 = sphi 0, %s76
      %s94 = sphi 0, %s94
      %s96 = sphi 0, %s94
      %s97 = sphi 0, %s96
      %s111 = sphi 0, %s97
      %s115 = sphi 0, %s115
      %s117 = sphi 0, %s115
      %s118 = sphi 0, %s117
      %s132 = sphi 0, %s118
      %s136 = sphi 0, %s136
      %s138 = sphi 0, %s136
      %s139 = sphi 0, %s138
      %s153 = sphi 0, %s139
      %s157 = sphi 0, %s157
      %s159 = sphi 0, %s157
      %s160 = sphi 0, %s159
      %s174 = sphi 0, %s160
      %s178 = sphi 0, %s178
      %s180 = sphi 0, %s178
      %s181 = sphi 0, %s180
      %s195 = sphi 0, %s181
      %s199 = sphi 0, %s199
      %s201 = sphi 0, %s199
      %s202 = sphi 0, %s201
      %s216 = sphi 0, %s202
      %s220 = sphi 0, %s220
      %s222 = sphi 0, %s220
      %s223 = sphi 0, %s222
      %s237 = sphi 0, %s223
      %s241 = sphi 0, %s241
      %s243 = sphi 0, %s241
      %s244 = sphi 0, %s243
      %s258 = sphi 0, %s244
      %s262 = sphi 0, %s262
      %s264 = sphi 0, %s262
      %s265 = sphi 0, %s264
      %s279 = sphi 0, %s265
      %s283 = sphi 0, %s283
      %s285 = sphi 0, %s283
      %s286 = sphi 0, %s285
      %s300 = sphi 0, %s286
      %s304 = sphi 0, %s304
      %s306 = sphi 0, %s304
      %s307 = sphi 0, %s306
      %s321 = sphi 0, %s307
      %s325 = sphi 0, %s325
      %s327 = sphi 0, %s325
      %s328 = sphi 0, %s327
      %s342 = sphi 0, %s328
      %s346 = sphi 0, %s346
      %s348 = sphi 0, %s346
      %s349 = sphi 0, %s348
      %s363 = sphi 0, %s349
      %s367 = sphi 0, %s367
      %s369 = sphi 0, %s367
      %s370 = sphi 0, %s369
      %s384 = sphi 0, %s370
      %s388 = sphi 0, %s388
      %s390 = sphi 0, %s388
      %s391 = sphi 0, %s390
      %s405 = sphi 0, %s391
      %s409 = sphi 0, %s409
      %s411 = sphi 0, %s409
      %s412 = sphi 0, %s411
      %s426 = sphi 0, %s412
      %s430 = sphi 0, %s430
      %s432 = sphi 0, %s430
      %s433 = sphi 0, %s432
      %s447 = sphi 0, %s433
      %s451 = sphi 0, %s451
      %s453 = sphi 0, %s451
      %s454 = sphi 0, %s453
      %s468 = sphi 0, %s454
      %s472 = sphi 0, %s472
      %s474 = sphi 0, %s472
      %s475 = sphi 0, %s474
      %s489 = sphi 0, %s475
      %s493 = sphi 0, %s493
      %s495 = sphi 0, %s493
      %s496 = sphi 0, %s495
      %s510 = sphi 0, %s496
      %s514 = sphi 0, %s514
      %s516 = sphi 0, %s514
      %s517 = sphi 0, %s516
      %s531 = sphi 0, %s517
      %s537 = sphi 0, %s539
      %s540 = sphi 0, %s537
      %s541 = sphi 0, %s540
      %s557 = sphi 0, %s541
    $region4: #{generator_forward.2} parent=1 // loop_header_branch
      %42 = sbr.rel (%p40) target = $region8
    $region5: #{generator_forward.2} parent=1 // loop_body
      %s44 = ssub.s32 %s39, 1
      %s45 = ssub.s32 %s39, 2
      %s46 = sadd.s32 %s39, 1
      %s47 = ssub.s32 %s39, %s46
      %p48 = scmp.eq.s32.totalorder %s47, 0
      %s50 = sadd.s32 %s49, 1
      %s51 = scalar_select %p48, %s49, %s50
      %p54 = pneg %p48
      %p55 = scmp.eq.s32.totalorder %s39, 1
      %p56 = por %p54, %p55
      %p57 = scmp.ne.s32.totalorder %s49, %s52
      %p58 = scmp.eq.s32.totalorder %s39, 0
      %p59 = por %p57, %p58
      %p60 = scmp.ne.s32.totalorder %s49, %s52
      %p61 = scmp.eq.s32.totalorder %s44, 1
      %p62 = por %p60, %p61
      %p63 = scmp.ne.s32.totalorder %s52, %s53
      %p64 = scmp.eq.s32.totalorder %s44, 0
      %p65 = por %p63, %p64
      %p66 = scmp.ne.s32.totalorder %s52, %s53
      %p67 = scmp.eq.s32.totalorder %s45, 1
      %p68 = por %p66, %p67
      %p70 = scmp.ne.s32.totalorder %s53, %s69
      %p71 = scmp.eq.s32.totalorder %s45, 0
      %p72 = por %p70, %p71
      %s74 = sadd.s32 %s73, 1
      %p77 = scmp.eq.s32.totalorder %s39, 1
      %p78 = scmp.ne.s32.totalorder %s73, %s75
      %p79 = scmp.eq.s32.totalorder %s39, 0
      %p80 = por %p78, %p79
      %p81 = scmp.ne.s32.totalorder %s73, %s75
      %p82 = scmp.eq.s32.totalorder %s44, 1
      %p83 = por %p81, %p82
      %p84 = scmp.ne.s32.totalorder %s75, %s76
      %p85 = scmp.eq.s32.totalorder %s44, 0
      %p86 = por %p84, %p85
      %p87 = scmp.ne.s32.totalorder %s75, %s76
      %p88 = scmp.eq.s32.totalorder %s45, 1
      %p89 = por %p87, %p88
      %p91 = scmp.ne.s32.totalorder %s76, %s90
      %p92 = scmp.eq.s32.totalorder %s45, 0
      %p93 = por %p91, %p92
      %s95 = sadd.s32 %s94, 1
      %p98 = scmp.eq.s32.totalorder %s39, 1
      %p99 = scmp.ne.s32.totalorder %s94, %s96
      %p100 = scmp.eq.s32.totalorder %s39, 0
      %p101 = por %p99, %p100
      %p102 = scmp.ne.s32.totalorder %s94, %s96
      %p103 = scmp.eq.s32.totalorder %s44, 1
      %p104 = por %p102, %p103
      %p105 = scmp.ne.s32.totalorder %s96, %s97
      %p106 = scmp.eq.s32.totalorder %s44, 0
      %p107 = por %p105, %p106
      %p108 = scmp.ne.s32.totalorder %s96, %s97
      %p109 = scmp.eq.s32.totalorder %s45, 1
      %p110 = por %p108, %p109
      %p112 = scmp.ne.s32.totalorder %s97, %s111
      %p113 = scmp.eq.s32.totalorder %s45, 0
      %p114 = por %p112, %p113
      %s116 = sadd.s32 %s115, 1
      %p119 = scmp.eq.s32.totalorder %s39, 1
      %p120 = scmp.ne.s32.totalorder %s115, %s117
      %p121 = scmp.eq.s32.totalorder %s39, 0
      %p122 = por %p120, %p121
      %p123 = scmp.ne.s32.totalorder %s115, %s117
      %p124 = scmp.eq.s32.totalorder %s44, 1
      %p125 = por %p123, %p124
      %p126 = scmp.ne.s32.totalorder %s117, %s118
      %p127 = scmp.eq.s32.totalorder %s44, 0
      %p128 = por %p126, %p127
      %p129 = scmp.ne.s32.totalorder %s117, %s118
      %p130 = scmp.eq.s32.totalorder %s45, 1
      %p131 = por %p129, %p130
      %p133 = scmp.ne.s32.totalorder %s118, %s132
      %p134 = scmp.eq.s32.totalorder %s45, 0
      %p135 = por %p133, %p134
      %s137 = sadd.s32 %s136, 1
      %p140 = scmp.eq.s32.totalorder %s39, 1
      %p141 = scmp.ne.s32.totalorder %s136, %s138
      %p142 = scmp.eq.s32.totalorder %s39, 0
      %p143 = por %p141, %p142
      %p144 = scmp.ne.s32.totalorder %s136, %s138
      %p145 = scmp.eq.s32.totalorder %s44, 1
      %p146 = por %p144, %p145
      %p147 = scmp.ne.s32.totalorder %s138, %s139
      %p148 = scmp.eq.s32.totalorder %s44, 0
      %p149 = por %p147, %p148
      %p150 = scmp.ne.s32.totalorder %s138, %s139
      %p151 = scmp.eq.s32.totalorder %s45, 1
      %p152 = por %p150, %p151
      %p154 = scmp.ne.s32.totalorder %s139, %s153
      %p155 = scmp.eq.s32.totalorder %s45, 0
      %p156 = por %p154, %p155
      %s158 = sadd.s32 %s157, 1
      %p161 = scmp.eq.s32.totalorder %s39, 1
      %p162 = scmp.ne.s32.totalorder %s157, %s159
      %p163 = scmp.eq.s32.totalorder %s39, 0
      %p164 = por %p162, %p163
      %p165 = scmp.ne.s32.totalorder %s157, %s159
      %p166 = scmp.eq.s32.totalorder %s44, 1
      %p167 = por %p165, %p166
      %p168 = scmp.ne.s32.totalorder %s159, %s160
      %p169 = scmp.eq.s32.totalorder %s44, 0
      %p170 = por %p168, %p169
      %p171 = scmp.ne.s32.totalorder %s159, %s160
      %p172 = scmp.eq.s32.totalorder %s45, 1
      %p173 = por %p171, %p172
      %p175 = scmp.ne.s32.totalorder %s160, %s174
      %p176 = scmp.eq.s32.totalorder %s45, 0
      %p177 = por %p175, %p176
      %s179 = sadd.s32 %s178, 1
      %p182 = scmp.eq.s32.totalorder %s39, 1
      %p183 = scmp.ne.s32.totalorder %s178, %s180
      %p184 = scmp.eq.s32.totalorder %s39, 0
      %p185 = por %p183, %p184
      %p186 = scmp.ne.s32.totalorder %s178, %s180
      %p187 = scmp.eq.s32.totalorder %s44, 1
      %p188 = por %p186, %p187
      %p189 = scmp.ne.s32.totalorder %s180, %s181
      %p190 = scmp.eq.s32.totalorder %s44, 0
      %p191 = por %p189, %p190
      %p192 = scmp.ne.s32.totalorder %s180, %s181
      %p193 = scmp.eq.s32.totalorder %s45, 1
      %p194 = por %p192, %p193
      %p196 = scmp.ne.s32.totalorder %s181, %s195
      %p197 = scmp.eq.s32.totalorder %s45, 0
      %p198 = por %p196, %p197
      %s200 = sadd.s32 %s199, 1
      %p203 = scmp.eq.s32.totalorder %s39, 1
      %p204 = scmp.ne.s32.totalorder %s199, %s201
      %p205 = scmp.eq.s32.totalorder %s39, 0
      %p206 = por %p204, %p205
      %p207 = scmp.ne.s32.totalorder %s199, %s201
      %p208 = scmp.eq.s32.totalorder %s44, 1
      %p209 = por %p207, %p208
      %p210 = scmp.ne.s32.totalorder %s201, %s202
      %p211 = scmp.eq.s32.totalorder %s44, 0
      %p212 = por %p210, %p211
      %p213 = scmp.ne.s32.totalorder %s201, %s202
      %p214 = scmp.eq.s32.totalorder %s45, 1
      %p215 = por %p213, %p214
      %p217 = scmp.ne.s32.totalorder %s202, %s216
      %p218 = scmp.eq.s32.totalorder %s45, 0
      %p219 = por %p217, %p218
      %s221 = sadd.s32 %s220, 1
      %p224 = scmp.eq.s32.totalorder %s39, 1
      %p225 = scmp.ne.s32.totalorder %s220, %s222
      %p226 = scmp.eq.s32.totalorder %s39, 0
      %p227 = por %p225, %p226
      %p228 = scmp.ne.s32.totalorder %s220, %s222
      %p229 = scmp.eq.s32.totalorder %s44, 1
      %p230 = por %p228, %p229
      %p231 = scmp.ne.s32.totalorder %s222, %s223
      %p232 = scmp.eq.s32.totalorder %s44, 0
      %p233 = por %p231, %p232
      %p234 = scmp.ne.s32.totalorder %s222, %s223
      %p235 = scmp.eq.s32.totalorder %s45, 1
      %p236 = por %p234, %p235
      %p238 = scmp.ne.s32.totalorder %s223, %s237
      %p239 = scmp.eq.s32.totalorder %s45, 0
      %p240 = por %p238, %p239
      %s242 = sadd.s32 %s241, 1
      %p245 = scmp.eq.s32.totalorder %s39, 1
      %p246 = scmp.ne.s32.totalorder %s241, %s243
      %p247 = scmp.eq.s32.totalorder %s39, 0
      %p248 = por %p246, %p247
      %p249 = scmp.ne.s32.totalorder %s241, %s243
      %p250 = scmp.eq.s32.totalorder %s44, 1
      %p251 = por %p249, %p250
      %p252 = scmp.ne.s32.totalorder %s243, %s244
      %p253 = scmp.eq.s32.totalorder %s44, 0
      %p254 = por %p252, %p253
      %p255 = scmp.ne.s32.totalorder %s243, %s244
      %p256 = scmp.eq.s32.totalorder %s45, 1
      %p257 = por %p255, %p256
      %p259 = scmp.ne.s32.totalorder %s244, %s258
      %p260 = scmp.eq.s32.totalorder %s45, 0
      %p261 = por %p259, %p260
      %s263 = sadd.s32 %s262, 1
      %p266 = scmp.eq.s32.totalorder %s39, 1
      %p267 = scmp.ne.s32.totalorder %s262, %s264
      %p268 = scmp.eq.s32.totalorder %s39, 0
      %p269 = por %p267, %p268
      %p270 = scmp.ne.s32.totalorder %s262, %s264
      %p271 = scmp.eq.s32.totalorder %s44, 1
      %p272 = por %p270, %p271
      %p273 = scmp.ne.s32.totalorder %s264, %s265
      %p274 = scmp.eq.s32.totalorder %s44, 0
      %p275 = por %p273, %p274
      %p276 = scmp.ne.s32.totalorder %s264, %s265
      %p277 = scmp.eq.s32.totalorder %s45, 1
      %p278 = por %p276, %p277
      %p280 = scmp.ne.s32.totalorder %s265, %s279
      %p281 = scmp.eq.s32.totalorder %s45, 0
      %p282 = por %p280, %p281
      %s284 = sadd.s32 %s283, 1
      %p287 = scmp.eq.s32.totalorder %s39, 1
      %p288 = scmp.ne.s32.totalorder %s283, %s285
      %p289 = scmp.eq.s32.totalorder %s39, 0
      %p290 = por %p288, %p289
      %p291 = scmp.ne.s32.totalorder %s283, %s285
      %p292 = scmp.eq.s32.totalorder %s44, 1
      %p293 = por %p291, %p292
      %p294 = scmp.ne.s32.totalorder %s285, %s286
      %p295 = scmp.eq.s32.totalorder %s44, 0
      %p296 = por %p294, %p295
      %p297 = scmp.ne.s32.totalorder %s285, %s286
      %p298 = scmp.eq.s32.totalorder %s45, 1
      %p299 = por %p297, %p298
      %p301 = scmp.ne.s32.totalorder %s286, %s300
      %p302 = scmp.eq.s32.totalorder %s45, 0
      %p303 = por %p301, %p302
      %s305 = sadd.s32 %s304, 1
      %p308 = scmp.eq.s32.totalorder %s39, 1
      %p309 = scmp.ne.s32.totalorder %s304, %s306
      %p310 = scmp.eq.s32.totalorder %s39, 0
      %p311 = por %p309, %p310
      %p312 = scmp.ne.s32.totalorder %s304, %s306
      %p313 = scmp.eq.s32.totalorder %s44, 1
      %p314 = por %p312, %p313
      %p315 = scmp.ne.s32.totalorder %s306, %s307
      %p316 = scmp.eq.s32.totalorder %s44, 0
      %p317 = por %p315, %p316
      %p318 = scmp.ne.s32.totalorder %s306, %s307
      %p319 = scmp.eq.s32.totalorder %s45, 1
      %p320 = por %p318, %p319
      %p322 = scmp.ne.s32.totalorder %s307, %s321
      %p323 = scmp.eq.s32.totalorder %s45, 0
      %p324 = por %p322, %p323
      %s326 = sadd.s32 %s325, 1
      %p329 = scmp.eq.s32.totalorder %s39, 1
      %p330 = scmp.ne.s32.totalorder %s325, %s327
      %p331 = scmp.eq.s32.totalorder %s39, 0
      %p332 = por %p330, %p331
      %p333 = scmp.ne.s32.totalorder %s325, %s327
      %p334 = scmp.eq.s32.totalorder %s44, 1
      %p335 = por %p333, %p334
      %p336 = scmp.ne.s32.totalorder %s327, %s328
      %p337 = scmp.eq.s32.totalorder %s44, 0
      %p338 = por %p336, %p337
      %p339 = scmp.ne.s32.totalorder %s327, %s328
      %p340 = scmp.eq.s32.totalorder %s45, 1
      %p341 = por %p339, %p340
      %p343 = scmp.ne.s32.totalorder %s328, %s342
      %p344 = scmp.eq.s32.totalorder %s45, 0
      %p345 = por %p343, %p344
      %s347 = sadd.s32 %s346, 1
      %p350 = scmp.eq.s32.totalorder %s39, 1
      %p351 = scmp.ne.s32.totalorder %s346, %s348
      %p352 = scmp.eq.s32.totalorder %s39, 0
      %p353 = por %p351, %p352
      %p354 = scmp.ne.s32.totalorder %s346, %s348
      %p355 = scmp.eq.s32.totalorder %s44, 1
      %p356 = por %p354, %p355
      %p357 = scmp.ne.s32.totalorder %s348, %s349
      %p358 = scmp.eq.s32.totalorder %s44, 0
      %p359 = por %p357, %p358
      %p360 = scmp.ne.s32.totalorder %s348, %s349
      %p361 = scmp.eq.s32.totalorder %s45, 1
      %p362 = por %p360, %p361
      %p364 = scmp.ne.s32.totalorder %s349, %s363
      %p365 = scmp.eq.s32.totalorder %s45, 0
      %p366 = por %p364, %p365
      %s368 = sadd.s32 %s367, 1
      %p371 = scmp.eq.s32.totalorder %s39, 1
      %p372 = scmp.ne.s32.totalorder %s367, %s369
      %p373 = scmp.eq.s32.totalorder %s39, 0
      %p374 = por %p372, %p373
      %p375 = scmp.ne.s32.totalorder %s367, %s369
      %p376 = scmp.eq.s32.totalorder %s44, 1
      %p377 = por %p375, %p376
      %p378 = scmp.ne.s32.totalorder %s369, %s370
      %p379 = scmp.eq.s32.totalorder %s44, 0
      %p380 = por %p378, %p379
      %p381 = scmp.ne.s32.totalorder %s369, %s370
      %p382 = scmp.eq.s32.totalorder %s45, 1
      %p383 = por %p381, %p382
      %p385 = scmp.ne.s32.totalorder %s370, %s384
      %p386 = scmp.eq.s32.totalorder %s45, 0
      %p387 = por %p385, %p386
      %s389 = sadd.s32 %s388, 1
      %p392 = scmp.eq.s32.totalorder %s39, 1
      %p393 = scmp.ne.s32.totalorder %s388, %s390
      %p394 = scmp.eq.s32.totalorder %s39, 0
      %p395 = por %p393, %p394
      %p396 = scmp.ne.s32.totalorder %s388, %s390
      %p397 = scmp.eq.s32.totalorder %s44, 1
      %p398 = por %p396, %p397
      %p399 = scmp.ne.s32.totalorder %s390, %s391
      %p400 = scmp.eq.s32.totalorder %s44, 0
      %p401 = por %p399, %p400
      %p402 = scmp.ne.s32.totalorder %s390, %s391
      %p403 = scmp.eq.s32.totalorder %s45, 1
      %p404 = por %p402, %p403
      %p406 = scmp.ne.s32.totalorder %s391, %s405
      %p407 = scmp.eq.s32.totalorder %s45, 0
      %p408 = por %p406, %p407
      %s410 = sadd.s32 %s409, 1
      %p413 = scmp.eq.s32.totalorder %s39, 1
      %p414 = scmp.ne.s32.totalorder %s409, %s411
      %p415 = scmp.eq.s32.totalorder %s39, 0
      %p416 = por %p414, %p415
      %p417 = scmp.ne.s32.totalorder %s409, %s411
      %p418 = scmp.eq.s32.totalorder %s44, 1
      %p419 = por %p417, %p418
      %p420 = scmp.ne.s32.totalorder %s411, %s412
      %p421 = scmp.eq.s32.totalorder %s44, 0
      %p422 = por %p420, %p421
      %p423 = scmp.ne.s32.totalorder %s411, %s412
      %p424 = scmp.eq.s32.totalorder %s45, 1
      %p425 = por %p423, %p424
      %p427 = scmp.ne.s32.totalorder %s412, %s426
      %p428 = scmp.eq.s32.totalorder %s45, 0
      %p429 = por %p427, %p428
      %s431 = sadd.s32 %s430, 1
      %p434 = scmp.eq.s32.totalorder %s39, 1
      %p435 = scmp.ne.s32.totalorder %s430, %s432
      %p436 = scmp.eq.s32.totalorder %s39, 0
      %p437 = por %p435, %p436
      %p438 = scmp.ne.s32.totalorder %s430, %s432
      %p439 = scmp.eq.s32.totalorder %s44, 1
      %p440 = por %p438, %p439
      %p441 = scmp.ne.s32.totalorder %s432, %s433
      %p442 = scmp.eq.s32.totalorder %s44, 0
      %p443 = por %p441, %p442
      %p444 = scmp.ne.s32.totalorder %s432, %s433
      %p445 = scmp.eq.s32.totalorder %s45, 1
      %p446 = por %p444, %p445
      %p448 = scmp.ne.s32.totalorder %s433, %s447
      %p449 = scmp.eq.s32.totalorder %s45, 0
      %p450 = por %p448, %p449
      %s452 = sadd.s32 %s451, 1
      %p455 = scmp.eq.s32.totalorder %s39, 1
      %p456 = scmp.ne.s32.totalorder %s451, %s453
      %p457 = scmp.eq.s32.totalorder %s39, 0
      %p458 = por %p456, %p457
      %p459 = scmp.ne.s32.totalorder %s451, %s453
      %p460 = scmp.eq.s32.totalorder %s44, 1
      %p461 = por %p459, %p460
      %p462 = scmp.ne.s32.totalorder %s453, %s454
      %p463 = scmp.eq.s32.totalorder %s44, 0
      %p464 = por %p462, %p463
      %p465 = scmp.ne.s32.totalorder %s453, %s454
      %p466 = scmp.eq.s32.totalorder %s45, 1
      %p467 = por %p465, %p466
      %p469 = scmp.ne.s32.totalorder %s454, %s468
      %p470 = scmp.eq.s32.totalorder %s45, 0
      %p471 = por %p469, %p470
      %s473 = sadd.s32 %s472, 1
      %p476 = scmp.eq.s32.totalorder %s39, 1
      %p477 = scmp.ne.s32.totalorder %s472, %s474
      %p478 = scmp.eq.s32.totalorder %s39, 0
      %p479 = por %p477, %p478
      %p480 = scmp.ne.s32.totalorder %s472, %s474
      %p481 = scmp.eq.s32.totalorder %s44, 1
      %p482 = por %p480, %p481
      %p483 = scmp.ne.s32.totalorder %s474, %s475
      %p484 = scmp.eq.s32.totalorder %s44, 0
      %p485 = por %p483, %p484
      %p486 = scmp.ne.s32.totalorder %s474, %s475
      %p487 = scmp.eq.s32.totalorder %s45, 1
      %p488 = por %p486, %p487
      %p490 = scmp.ne.s32.totalorder %s475, %s489
      %p491 = scmp.eq.s32.totalorder %s45, 0
      %p492 = por %p490, %p491
      %s494 = sadd.s32 %s493, 1
      %p497 = scmp.eq.s32.totalorder %s39, 1
      %p498 = scmp.ne.s32.totalorder %s493, %s495
      %p499 = scmp.eq.s32.totalorder %s39, 0
      %p500 = por %p498, %p499
      %p501 = scmp.ne.s32.totalorder %s493, %s495
      %p502 = scmp.eq.s32.totalorder %s44, 1
      %p503 = por %p501, %p502
      %p504 = scmp.ne.s32.totalorder %s495, %s496
      %p505 = scmp.eq.s32.totalorder %s44, 0
      %p506 = por %p504, %p505
      %p507 = scmp.ne.s32.totalorder %s495, %s496
      %p508 = scmp.eq.s32.totalorder %s45, 1
      %p509 = por %p507, %p508
      %p511 = scmp.ne.s32.totalorder %s496, %s510
      %p512 = scmp.eq.s32.totalorder %s45, 0
      %p513 = por %p511, %p512
      %s515 = sadd.s32 %s514, 1
      %p518 = scmp.eq.s32.totalorder %s39, 1
      %p519 = scmp.ne.s32.totalorder %s514, %s516
      %p520 = scmp.eq.s32.totalorder %s39, 0
      %p521 = por %p519, %p520
      %p522 = scmp.ne.s32.totalorder %s514, %s516
      %p523 = scmp.eq.s32.totalorder %s44, 1
      %p524 = por %p522, %p523
      %p525 = scmp.ne.s32.totalorder %s516, %s517
      %p526 = scmp.eq.s32.totalorder %s44, 0
      %p527 = por %p525, %p526
      %p528 = scmp.ne.s32.totalorder %s516, %s517
      %p529 = scmp.eq.s32.totalorder %s45, 1
      %p530 = por %p528, %p529
      %p532 = scmp.ne.s32.totalorder %s517, %s531
      %p533 = scmp.eq.s32.totalorder %s45, 0
      %p534 = por %p532, %p533
      %s535 = ssub.s32 %s39, %s46
      %p536 = scmp.eq.s32.totalorder %s535, 0
      %s538 = sadd.s32 %s537, 1
      %s539 = scalar_select %p536, %s537, %s538
      %p542 = pneg %p536
      %p543 = scmp.eq.s32.totalorder %s39, 1
      %p544 = por %p542, %p543
      %p545 = scmp.ne.s32.totalorder %s537, %s540
      %p546 = scmp.eq.s32.totalorder %s39, 0
      %p547 = por %p545, %p546
      %p548 = scmp.ne.s32.totalorder %s537, %s540
      %p549 = scmp.eq.s32.totalorder %s44, 1
      %p550 = por %p548, %p549
      %p551 = scmp.ne.s32.totalorder %s540, %s541
      %p552 = scmp.eq.s32.totalorder %s44, 0
      %p553 = por %p551, %p552
      %p554 = scmp.ne.s32.totalorder %s540, %s541
      %p555 = scmp.eq.s32.totalorder %s45, 1
      %p556 = por %p554, %p555
      %p558 = scmp.ne.s32.totalorder %s541, %s557
      %p559 = scmp.eq.s32.totalorder %s45, 0
      %p560 = por %p558, %p559
      %p561 = scmp.le.s32.totalorder 1, %s39
      %p562 = scmp.lt.s32.totalorder %s39, 3
      %p563 = pnand %p561, %p562
      %p564 = pneg %p563
      // Predicated region
      $region9: #{generator_forward.2} parent=5 // pred_check
        _
      $region10: #{generator_forward.2} parent=5 // pred_check_branch
        %566 = sbr.rel (%p563) target = $region12
      $region11: #{generator_forward.2} parent=5 // pred_region
        %s567 = ssub.s32 %s39, 1
        // Predicated region
        $region13: #{generator_forward.2} parent=11 // pred_check
          %p568 = pneg %p86
        $region14: #{generator_forward.2} parent=11 // pred_check_branch
          %570 = sbr.rel (%p568) target = $region16
        $region15: #{generator_forward.2} parent=11 // pred_region
          %572 = vsyncadd [#allocation3], 0
          %s573 = sshll.u32 %s1, 4
          %s574 = int_to_ptr.hbm [resolvable:$true] %s573
          %s575 = sshll.u32 [#allocation2], 4
          %s576 = int_to_ptr.vmem [resolvable:$true] %s575
          %581 = dma.hbm_to_vmem [thread:$0]  %s574, 192, %s576, [#allocation3], 64, 64, 4
        $region16: #{generator_forward.2} parent=11 // pred_fallthru
          _
        // Predicated region
        $region17: #{generator_forward.2} parent=11 // pred_check
          %p582 = pneg %p107
        $region18: #{generator_forward.2} parent=11 // pred_check_branch
          %584 = sbr.rel (%p582) target = $region20
        $region19: #{generator_forward.2} parent=11 // pred_region
          %586 = vsyncadd [#allocation5], 0
          %s588 = sshll.u32 %s2, 4
          %s589 = int_to_ptr.hbm [resolvable:$true] %s588
          %s590 = sshll.u32 [#allocation4], 4
          %s591 = int_to_ptr.vmem [resolvable:$true] %s590
          %593 = dma.hbm_to_vmem [thread:$0]  %s589, 16, %s591, [#allocation5]
        $region20: #{generator_forward.2} parent=11 // pred_fallthru
          _
        // Predicated region
        $region21: #{generator_forward.2} parent=11 // pred_check
          %p594 = pneg %p128
        $region22: #{generator_forward.2} parent=11 // pred_check_branch
          %596 = sbr.rel (%p594) target = $region24
        $region23: #{generator_forward.2} parent=11 // pred_region
          %598 = vsyncadd [#allocation5], 0
          %s599 = sshll.u32 %s3, 4
          %s600 = int_to_ptr.hbm [resolvable:$true] %s599
          %s601 = sshll.u32 [#allocation6], 4
          %s602 = int_to_ptr.vmem [resolvable:$true] %s601
          %607 = dma.hbm_to_vmem [thread:$0]  %s600, 1024, %s602, [#allocation5], 64, 64, 4
        $region24: #{generator_forward.2} parent=11 // pred_fallthru
          _
        // Predicated region
        $region25: #{generator_forward.2} parent=11 // pred_check
          %p608 = pneg %p149
        $region26: #{generator_forward.2} parent=11 // pred_check_branch
          %610 = sbr.rel (%p608) target = $region28
        $region27: #{generator_forward.2} parent=11 // pred_region
          %612 = vsyncadd [#allocation8], 0
          %s614 = sshll.u32 %s4, 4
          %s615 = int_to_ptr.hbm [resolvable:$true] %s614
          %s616 = sshll.u32 [#allocation7], 4
          %s617 = int_to_ptr.vmem [resolvable:$true] %s616
          %619 = dma.hbm_to_vmem [thread:$0]  %s615, 16, %s617, [#allocation8]
        $region28: #{generator_forward.2} parent=11 // pred_fallthru
          _
        // Predicated region
        $region29: #{generator_forward.2} parent=11 // pred_check
          %p620 = pneg %p170
        $region30: #{generator_forward.2} parent=11 // pred_check_branch
          %622 = sbr.rel (%p620) target = $region32
        $region31: #{generator_forward.2} parent=11 // pred_region
          %624 = vsyncadd [#allocation8], 0
          %s625 = sshll.u32 %s5, 4
          %s626 = int_to_ptr.hbm [resolvable:$true] %s625
          %s627 = sshll.u32 [#allocation9], 4
          %s628 = int_to_ptr.vmem [resolvable:$true] %s627
          %633 = dma.hbm_to_vmem [thread:$0]  %s626, 256, %s628, [#allocation8], 64, 64, 4
        $region32: #{generator_forward.2} parent=11 // pred_fallthru
          _
        // Predicated region
        $region33: #{generator_forward.2} parent=11 // pred_check
          %p634 = pneg %p191
        $region34: #{generator_forward.2} parent=11 // pred_check_branch
          %636 = sbr.rel (%p634) target = $region36
        $region35: #{generator_forward.2} parent=11 // pred_region
          %638 = vsyncadd [#allocation11], 0
          %s639 = sshll.u32 %s6, 4
          %s640 = int_to_ptr.hbm [resolvable:$true] %s639
          %s641 = sshll.u32 [#allocation10], 4
          %s642 = int_to_ptr.vmem [resolvable:$true] %s641
          %647 = dma.hbm_to_vmem [thread:$0]  %s640, 320, %s642, [#allocation11], 64, 64, 4
        $region36: #{generator_forward.2} parent=11 // pred_fallthru
          _
        // Predicated region
        $region37: #{generator_forward.2} parent=11 // pred_check
          %p648 = pneg %p212
        $region38: #{generator_forward.2} parent=11 // pred_check_branch
          %650 = sbr.rel (%p648) target = $region40
        $region39: #{generator_forward.2} parent=11 // pred_region
          %652 = vsyncadd [#allocation11], 0
          %s653 = sshll.u32 %s7, 4
          %s654 = int_to_ptr.hbm [resolvable:$true] %s653
          %s655 = sshll.u32 [#allocation12], 4
          %s656 = int_to_ptr.vmem [resolvable:$true] %s655
          %661 = dma.hbm_to_vmem [thread:$0]  %s654, 320, %s656, [#allocation11], 64, 64, 4
        $region40: #{generator_forward.2} parent=11 // pred_fallthru
          _
        // Predicated region
        $region41: #{generator_forward.2} parent=11 // pred_check
          %p662 = pneg %p233
        $region42: #{generator_forward.2} parent=11 // pred_check_branch
          %664 = sbr.rel (%p662) target = $region44
        $region43: #{generator_forward.2} parent=11 // pred_region
          %666 = vsyncadd [#allocation14], 0
          %s668 = sshll.u32 %s8, 4
          %s669 = int_to_ptr.hbm [resolvable:$true] %s668
          %s670 = sshll.u32 [#allocation13], 4
          %s671 = int_to_ptr.vmem [resolvable:$true] %s670
          %673 = dma.hbm_to_vmem [thread:$0]  %s669, 16, %s671, [#allocation14]
        $region44: #{generator_forward.2} parent=11 // pred_fallthru
          _
        // Predicated region
        $region45: #{generator_forward.2} parent=11 // pred_check
          %p674 = pneg %p254
        $region46: #{generator_forward.2} parent=11 // pred_check_branch
          %676 = sbr.rel (%p674) target = $region48
        $region47: #{generator_forward.2} parent=11 // pred_region
          %678 = vsyncadd [#allocation14], 0
          %s680 = sshll.u32 %s9, 4
          %s681 = int_to_ptr.hbm [resolvable:$true] %s680
          %s682 = sshll.u32 [#allocation15], 4
          %s683 = int_to_ptr.vmem [resolvable:$true] %s682
          %685 = dma.hbm_to_vmem [thread:$0]  %s681, 16, %s683, [#allocation14]
        $region48: #{generator_forward.2} parent=11 // pred_fallthru
          _
        // Predicated region
        $region49: #{generator_forward.2} parent=11 // pred_check
          %p686 = pneg %p275
        $region50: #{generator_forward.2} parent=11 // pred_check_branch
          %688 = sbr.rel (%p686) target = $region52
        $region51: #{generator_forward.2} parent=11 // pred_region
          %690 = vsyncadd [#allocation17], 0
          %s692 = sshll.u32 %s10, 4
          %s693 = int_to_ptr.hbm [resolvable:$true] %s692
          %s694 = sshll.u32 [#allocation16], 4
          %s695 = int_to_ptr.vmem [resolvable:$true] %s694
          %697 = dma.hbm_to_vmem [thread:$0]  %s693, 16, %s695, [#allocation17]
        $region52: #{generator_forward.2} parent=11 // pred_fallthru
          _
        // Predicated region
        $region53: #{generator_forward.2} parent=11 // pred_check
          %p698 = pneg %p296
        $region54: #{generator_forward.2} parent=11 // pred_check_branch
          %700 = sbr.rel (%p698) target = $region56
        $region55: #{generator_forward.2} parent=11 // pred_region
          %702 = vsyncadd [#allocation17], 0
          %s703 = sshll.u32 %s11, 4
          %s704 = int_to_ptr.hbm [resolvable:$true] %s703
          %s705 = sshll.u32 [#allocation18], 4
          %s706 = int_to_ptr.vmem [resolvable:$true] %s705
          %711 = dma.hbm_to_vmem [thread:$0]  %s704, 2048, %s706, [#allocation17], 64, 64, 4
        $region56: #{generator_forward.2} parent=11 // pred_fallthru
          _
        // Predicated region
        $region57: #{generator_forward.2} parent=11 // pred_check
          %p712 = pneg %p317
        $region58: #{generator_forward.2} parent=11 // pred_check_branch
          %714 = sbr.rel (%p712) target = $region60
        $region59: #{generator_forward.2} parent=11 // pred_region
          %716 = vsyncadd [#allocation20], 0
          %s717 = sshll.u32 %s12, 4
          %s718 = int_to_ptr.hbm [resolvable:$true] %s717
          %s719 = sshll.u32 [#allocation19], 4
          %s720 = int_to_ptr.vmem [resolvable:$true] %s719
          %725 = dma.hbm_to_vmem [thread:$0]  %s718, 128, %s720, [#allocation20], 16, 16, 1
        $region60: #{generator_forward.2} parent=11 // pred_fallthru
          _
        // Predicated region
        $region61: #{generator_forward.2} parent=11 // pred_check
          %p726 = pneg %p338
        $region62: #{generator_forward.2} parent=11 // pred_check_branch
          %728 = sbr.rel (%p726) target = $region64
        $region63: #{generator_forward.2} parent=11 // pred_region
          _
        $region64: #{generator_forward.2} parent=11 // pred_fallthru
          _
        // Predicated region
        $region65: #{generator_forward.2} parent=11 // pred_check
          %p729 = pneg %p359
        $region66: #{generator_forward.2} parent=11 // pred_check_branch
          %731 = sbr.rel (%p729) target = $region68
        $region67: #{generator_forward.2} parent=11 // pred_region
          %733 = vsyncadd [#allocation20], 0
          %s734 = sshll.u32 %s14, 4
          %s735 = int_to_ptr.hbm [resolvable:$true] %s734
          %s736 = sshll.u32 [#allocation21], 4
          %s737 = int_to_ptr.vmem [resolvable:$true] %s736
          %742 = dma.hbm_to_vmem [thread:$0]  %s735, 128, %s737, [#allocation20], 16, 16, 1
        $region68: #{generator_forward.2} parent=11 // pred_fallthru
          _
        // Predicated region
        $region69: #{generator_forward.2} parent=11 // pred_check
          %p743 = pneg %p380
        $region70: #{generator_forward.2} parent=11 // pred_check_branch
          %745 = sbr.rel (%p743) target = $region72
        $region71: #{generator_forward.2} parent=11 // pred_region
          %747 = vsyncadd [#allocation23], 0
          %s748 = sshll.u32 %s15, 4
          %s749 = int_to_ptr.hbm [resolvable:$true] %s748
          %s750 = sshll.u32 [#allocation22], 4
          %s751 = int_to_ptr.vmem [resolvable:$true] %s750
          %756 = dma.hbm_to_vmem [thread:$0]  %s749, 256, %s751, [#allocation23], 64, 64, 4
        $region72: #{generator_forward.2} parent=11 // pred_fallthru
          _
        // Predicated region
        $region73: #{generator_forward.2} parent=11 // pred_check
          %p757 = pneg %p401
        $region74: #{generator_forward.2} parent=11 // pred_check_branch
          %759 = sbr.rel (%p757) target = $region76
        $region75: #{generator_forward.2} parent=11 // pred_region
          %761 = vsyncadd [#allocation23], 0
          %s762 = sshll.u32 %s16, 4
          %s763 = int_to_ptr.hbm [resolvable:$true] %s762
          %s764 = sshll.u32 [#allocation24], 4
          %s765 = int_to_ptr.vmem [resolvable:$true] %s764
          %770 = dma.hbm_to_vmem [thread:$0]  %s763, 512, %s765, [#allocation23], 64, 64, 4
        $region76: #{generator_forward.2} parent=11 // pred_fallthru
          _
        // Predicated region
        $region77: #{generator_forward.2} parent=11 // pred_check
          %p771 = pneg %p422
        $region78: #{generator_forward.2} parent=11 // pred_check_branch
          %773 = sbr.rel (%p771) target = $region80
        $region79: #{generator_forward.2} parent=11 // pred_region
          %775 = vsyncadd [#allocation26], 0
          %s776 = sshll.u32 %s17, 4
          %s777 = int_to_ptr.hbm [resolvable:$true] %s776
          %s778 = sshll.u32 [#allocation25], 4
          %s779 = int_to_ptr.vmem [resolvable:$true] %s778
          %784 = dma.hbm_to_vmem [thread:$0]  %s777, 512, %s779, [#allocation26], 64, 64, 4
        $region80: #{generator_forward.2} parent=11 // pred_fallthru
          _
        // Predicated region
        $region81: #{generator_forward.2} parent=11 // pred_check
          %p785 = pneg %p443
        $region82: #{generator_forward.2} parent=11 // pred_check_branch
          %787 = sbr.rel (%p785) target = $region84
        $region83: #{generator_forward.2} parent=11 // pred_region
          %789 = vsyncadd [#allocation26], 0
          %s790 = sshll.u32 %s18, 4
          %s791 = int_to_ptr.hbm [resolvable:$true] %s790
          %s792 = sshll.u32 [#allocation27], 4
          %s793 = int_to_ptr.vmem [resolvable:$true] %s792
          %798 = dma.hbm_to_vmem [thread:$0]  %s791, 64, %s793, [#allocation26], 16, 16, 1
        $region84: #{generator_forward.2} parent=11 // pred_fallthru
          _
        // Predicated region
        $region85: #{generator_forward.2} parent=11 // pred_check
          %p799 = pneg %p464
        $region86: #{generator_forward.2} parent=11 // pred_check_branch
          %801 = sbr.rel (%p799) target = $region88
        $region87: #{generator_forward.2} parent=11 // pred_region
          _
        $region88: #{generator_forward.2} parent=11 // pred_fallthru
          _
        // Predicated region
        $region89: #{generator_forward.2} parent=11 // pred_check
          %p802 = pneg %p485
        $region90: #{generator_forward.2} parent=11 // pred_check_branch
          %804 = sbr.rel (%p802) target = $region92
        $region91: #{generator_forward.2} parent=11 // pred_region
          %806 = vsyncadd [#allocation29], 0
          %s807 = sshll.u32 %s20, 4
          %s808 = int_to_ptr.hbm [resolvable:$true] %s807
          %s809 = sshll.u32 [#allocation28], 4
          %s810 = int_to_ptr.vmem [resolvable:$true] %s809
          %815 = dma.hbm_to_vmem [thread:$0]  %s808, 512, %s810, [#allocation29], 128, 128, 8
        $region92: #{generator_forward.2} parent=11 // pred_fallthru
          _
        // Predicated region
        $region93: #{generator_forward.2} parent=11 // pred_check
          %p816 = pneg %p506
        $region94: #{generator_forward.2} parent=11 // pred_check_branch
          %818 = sbr.rel (%p816) target = $region96
        $region95: #{generator_forward.2} parent=11 // pred_region
          %820 = vsyncadd [#allocation29], 0
          %s822 = sshll.u32 %s21, 4
          %s823 = int_to_ptr.hbm [resolvable:$true] %s822
          %s824 = sshll.u32 [#allocation30], 4
          %s825 = int_to_ptr.vmem [resolvable:$true] %s824
          %827 = dma.hbm_to_vmem [thread:$0]  %s823, 32, %s825, [#allocation29]
        $region96: #{generator_forward.2} parent=11 // pred_fallthru
          _
        // Predicated region
        $region97: #{generator_forward.2} parent=11 // pred_check
          %p828 = pneg %p527
        $region98: #{generator_forward.2} parent=11 // pred_check_branch
          %830 = sbr.rel (%p828) target = $region100
        $region99: #{generator_forward.2} parent=11 // pred_region
          _
        $region100: #{generator_forward.2} parent=11 // pred_fallthru
          _
      $region12: #{generator_forward.2} parent=5 // pred_fallthru
        _
      %p831 = scmp.lt.s32.totalorder %s39, 2
      // Predicated region
      $region101: #{generator_forward.2} parent=5 // pred_check
        %p832 = pneg %p831
      $region102: #{generator_forward.2} parent=5 // pred_check_branch
        %834 = sbr.rel (%p832) target = $region104
      $region103: #{generator_forward.2} parent=5 // pred_region
        // Predicated region
        $region105: #{generator_forward.2} parent=103 // pred_check
          %p835 = pneg %p59
        $region106: #{generator_forward.2} parent=103 // pred_check_branch
          %837 = sbr.rel (%p835) target = $region108
        $region107: #{generator_forward.2} parent=103 // pred_region
          %p838 = scmp.lt.s32.totalorder %s39, 1
          %s839 = scalar_select %p838, %s39, 1
          %s840 = smul.addr %s839, 8
          %s841 = smul.addr %s840, 8
          %s842 = scalar_lea.vmem %s0, %s841
        $region108: #{generator_forward.2} parent=103 // pred_fallthru
          _
      $region104: #{generator_forward.2} parent=5 // pred_fallthru
        _
      %p843 = scmp.le.s32.totalorder 1, %s39
      %p844 = scmp.lt.s32.totalorder %s39, 3
      %p845 = pnand %p843, %p844
      %p846 = pneg %p845
      // Predicated region
      $region109: #{generator_forward.2} parent=5 // pred_check
        _
      $region110: #{generator_forward.2} parent=5 // pred_check_branch
        %848 = sbr.rel (%p845) target = $region112
      $region111: #{generator_forward.2} parent=5 // pred_region
        %s849 = ssub.s32 %s39, 1
        // Predicated region
        $region113: #{generator_forward.2} parent=111 // pred_check
          %p850 = pneg %p86
        $region114: #{generator_forward.2} parent=111 // pred_check_branch
          %852 = sbr.rel (%p850) target = $region116
        $region115: #{generator_forward.2} parent=111 // pred_region
          %854 = dma.done [#allocation3], 192
        $region116: #{generator_forward.2} parent=111 // pred_fallthru
          _
        // Predicated region
        $region117: #{generator_forward.2} parent=111 // pred_check
          %p855 = pneg %p107
        $region118: #{generator_forward.2} parent=111 // pred_check_branch
          %857 = sbr.rel (%p855) target = $region120
        $region119: #{generator_forward.2} parent=111 // pred_region
          %859 = dma.done [#allocation5], 16
        $region120: #{generator_forward.2} parent=111 // pred_fallthru
          _
        // Predicated region
        $region121: #{generator_forward.2} parent=111 // pred_check
          %p860 = pneg %p128
        $region122: #{generator_forward.2} parent=111 // pred_check_branch
          %862 = sbr.rel (%p860) target = $region124
        $region123: #{generator_forward.2} parent=111 // pred_region
          %864 = dma.done [#allocation5], 1024
        $region124: #{generator_forward.2} parent=111 // pred_fallthru
          _
        // Predicated region
        $region125: #{generator_forward.2} parent=111 // pred_check
          %p865 = pneg %p149
        $region126: #{generator_forward.2} parent=111 // pred_check_branch
          %867 = sbr.rel (%p865) target = $region128
        $region127: #{generator_forward.2} parent=111 // pred_region
          %869 = dma.done [#allocation8], 16
        $region128: #{generator_forward.2} parent=111 // pred_fallthru
          _
        // Predicated region
        $region129: #{generator_forward.2} parent=111 // pred_check
          %p870 = pneg %p170
        $region130: #{generator_forward.2} parent=111 // pred_check_branch
          %872 = sbr.rel (%p870) target = $region132
        $region131: #{generator_forward.2} parent=111 // pred_region
          %874 = dma.done [#allocation8], 256
        $region132: #{generator_forward.2} parent=111 // pred_fallthru
          _
        // Predicated region
        $region133: #{generator_forward.2} parent=111 // pred_check
          %p875 = pneg %p191
        $region134: #{generator_forward.2} parent=111 // pred_check_branch
          %877 = sbr.rel (%p875) target = $region136
        $region135: #{generator_forward.2} parent=111 // pred_region
          %879 = dma.done [#allocation11], 320
        $region136: #{generator_forward.2} parent=111 // pred_fallthru
          _
        // Predicated region
        $region137: #{generator_forward.2} parent=111 // pred_check
          %p880 = pneg %p212
        $region138: #{generator_forward.2} parent=111 // pred_check_branch
          %882 = sbr.rel (%p880) target = $region140
        $region139: #{generator_forward.2} parent=111 // pred_region
          %884 = dma.done [#allocation11], 320
        $region140: #{generator_forward.2} parent=111 // pred_fallthru
          _
        // Predicated region
        $region141: #{generator_forward.2} parent=111 // pred_check
          %p885 = pneg %p233
        $region142: #{generator_forward.2} parent=111 // pred_check_branch
          %887 = sbr.rel (%p885) target = $region144
        $region143: #{generator_forward.2} parent=111 // pred_region
          %889 = dma.done [#allocation14], 16
        $region144: #{generator_forward.2} parent=111 // pred_fallthru
          _
        // Predicated region
        $region145: #{generator_forward.2} parent=111 // pred_check
          %p890 = pneg %p254
        $region146: #{generator_forward.2} parent=111 // pred_check_branch
          %892 = sbr.rel (%p890) target = $region148
        $region147: #{generator_forward.2} parent=111 // pred_region
          %894 = dma.done [#allocation14], 16
        $region148: #{generator_forward.2} parent=111 // pred_fallthru
          _
        // Predicated region
        $region149: #{generator_forward.2} parent=111 // pred_check
          %p895 = pneg %p275
        $region150: #{generator_forward.2} parent=111 // pred_check_branch
          %897 = sbr.rel (%p895) target = $region152
        $region151: #{generator_forward.2} parent=111 // pred_region
          %899 = dma.done [#allocation17], 16
        $region152: #{generator_forward.2} parent=111 // pred_fallthru
          _
        // Predicated region
        $region153: #{generator_forward.2} parent=111 // pred_check
          %p900 = pneg %p296
        $region154: #{generator_forward.2} parent=111 // pred_check_branch
          %902 = sbr.rel (%p900) target = $region156
        $region155: #{generator_forward.2} parent=111 // pred_region
          %904 = dma.done [#allocation17], 2048
        $region156: #{generator_forward.2} parent=111 // pred_fallthru
          _
        // Predicated region
        $region157: #{generator_forward.2} parent=111 // pred_check
          %p905 = pneg %p317
        $region158: #{generator_forward.2} parent=111 // pred_check_branch
          %907 = sbr.rel (%p905) target = $region160
        $region159: #{generator_forward.2} parent=111 // pred_region
          %909 = dma.done [#allocation20], 128
        $region160: #{generator_forward.2} parent=111 // pred_fallthru
          _
        // Predicated region
        $region161: #{generator_forward.2} parent=111 // pred_check
          %p910 = pneg %p359
        $region162: #{generator_forward.2} parent=111 // pred_check_branch
          %912 = sbr.rel (%p910) target = $region164
        $region163: #{generator_forward.2} parent=111 // pred_region
          %914 = dma.done [#allocation20], 128
        $region164: #{generator_forward.2} parent=111 // pred_fallthru
          _
        // Predicated region
        $region165: #{generator_forward.2} parent=111 // pred_check
          %p915 = pneg %p380
        $region166: #{generator_forward.2} parent=111 // pred_check_branch
          %917 = sbr.rel (%p915) target = $region168
        $region167: #{generator_forward.2} parent=111 // pred_region
          %919 = dma.done [#allocation23], 256
        $region168: #{generator_forward.2} parent=111 // pred_fallthru
          _
        // Predicated region
        $region169: #{generator_forward.2} parent=111 // pred_check
          %p920 = pneg %p401
        $region170: #{generator_forward.2} parent=111 // pred_check_branch
          %922 = sbr.rel (%p920) target = $region172
        $region171: #{generator_forward.2} parent=111 // pred_region
          %924 = dma.done [#allocation23], 512
        $region172: #{generator_forward.2} parent=111 // pred_fallthru
          _
        // Predicated region
        $region173: #{generator_forward.2} parent=111 // pred_check
          %p925 = pneg %p422
        $region174: #{generator_forward.2} parent=111 // pred_check_branch
          %927 = sbr.rel (%p925) target = $region176
        $region175: #{generator_forward.2} parent=111 // pred_region
          %929 = dma.done [#allocation26], 512
        $region176: #{generator_forward.2} parent=111 // pred_fallthru
          _
        // Predicated region
        $region177: #{generator_forward.2} parent=111 // pred_check
          %p930 = pneg %p443
        $region178: #{generator_forward.2} parent=111 // pred_check_branch
          %932 = sbr.rel (%p930) target = $region180
        $region179: #{generator_forward.2} parent=111 // pred_region
          %934 = dma.done [#allocation26], 64
        $region180: #{generator_forward.2} parent=111 // pred_fallthru
          _
        // Predicated region
        $region181: #{generator_forward.2} parent=111 // pred_check
          %p935 = pneg %p485
        $region182: #{generator_forward.2} parent=111 // pred_check_branch
          %937 = sbr.rel (%p935) target = $region184
        $region183: #{generator_forward.2} parent=111 // pred_region
          %939 = dma.done [#allocation29], 512
        $region184: #{generator_forward.2} parent=111 // pred_fallthru
          _
        // Predicated region
        $region185: #{generator_forward.2} parent=111 // pred_check
          %p940 = pneg %p506
        $region186: #{generator_forward.2} parent=111 // pred_check_branch
          %942 = sbr.rel (%p940) target = $region188
        $region187: #{generator_forward.2} parent=111 // pred_region
          %944 = dma.done [#allocation29], 32
        $region188: #{generator_forward.2} parent=111 // pred_fallthru
          _
        %p945 = scmp.lt.s32.totalorder %s44, 1
        %s946 = scalar_select %p945, %s44, 1
        %s947 = smul.addr %s946, 8
        %s948 = smul.addr %s947, 8
        %s949 = scalar_lea.vmem %s0, %s948
        %p950 = pneg %p65
        %p951 = pneg %p62
        %p952 = pneg %p86
        %p953 = pneg %p83
        %p954 = pneg %p107
        %p955 = pneg %p104
        %p956 = pneg %p128
        %p957 = pneg %p125
        %p958 = pneg %p149
        %p959 = pneg %p146
        %p960 = pneg %p170
        %p961 = pneg %p167
        %p962 = pneg %p191
        %p963 = pneg %p188
        %p964 = pneg %p212
        %p965 = pneg %p209
        %p966 = pneg %p233
        %p967 = pneg %p230
        %p968 = pneg %p254
        %p969 = pneg %p251
        %p970 = pneg %p275
        %p971 = pneg %p272
        %p972 = pneg %p296
        %p973 = pneg %p293
        %p974 = pneg %p317
        %p975 = pneg %p314
        %p976 = pneg %p338
        %p977 = pneg %p335
        %p978 = pneg %p359
        %p979 = pneg %p356
        %p980 = pneg %p380
        %p981 = pneg %p377
        %p982 = pneg %p401
        %p983 = pneg %p398
        %p984 = pneg %p422
        %p985 = pneg %p419
        %p986 = pneg %p443
        %p987 = pneg %p440
        %p988 = pneg %p464
        %p989 = pneg %p461
        %p990 = pneg %p485
        %p991 = pneg %p482
        %p992 = pneg %p506
        %p993 = pneg %p503
        %p994 = pneg %p527
        %p995 = pneg %p524
        %p996 = pneg %p553
        %p997 = pneg %p550
        %p998 = scmp.lt.s32.totalorder %s44, 1
        %s999 = scalar_select %p998, %s44, 1
        %s1000 = smul.addr %s999, 8
        %s1001 = smul.addr %s1000, 4
        %s1002 = scalar_lea.vmem %s23, %s1001
        %p1003 = scmp.lt.s32.totalorder %s44, 1
        %s1004 = scalar_select %p1003, %s44, 1
        %s1005 = smul.addr %s1004, 8
        %s1006 = smul.addr %s1005, 8
        %s1007 = scalar_lea.vmem %s0, %s1006
        %p1008 = scmp.lt.s32.totalorder %s44, 1
        %s1009 = scalar_select %p1008, %s44, 1
        %s1010 = smul.addr %s1009, 8
        %s1011 = smul.addr %s1010, 4
        %s1012 = scalar_lea.vmem %s23, %s1011
        %v1014 = vld [vmem:[%s1007] sm:$0xff]
        %v1015 = vld [vmem:[%s1007 + $0x8] sm:$0xff]
        %v1016 = vld [vmem:[%s1007 + $0x10] sm:$0xff]
        %v1017 = vld [vmem:[%s1007 + $0x18] sm:$0xff]
        %v1018 = vld [vmem:[%s1007 + $0x20] sm:$0xff]
        %v1019 = vld [vmem:[%s1007 + $0x28] sm:$0xff]
        %v1020 = vld [vmem:[%s1007 + $0x30] sm:$0xff]
        %v1021 = vld [vmem:[%s1007 + $0x38] sm:$0xff]
        %v1022 = vpack.c.bf16 %v1015, %v1014
        %v1023 = vpack.c.bf16 %v1017, %v1016
        %v1024 = vpack.c.bf16 %v1019, %v1018
        %v1025 = vpack.c.bf16 %v1021, %v1020
        %v1026 = vld [vmem:[#allocation2] sm:$0xf]
        %v1027 = vld [vmem:[#allocation2 + $0x4] sm:$0xf]
        %v1028 = vld [vmem:[#allocation2 + $0x8] sm:$0x3]
        %v1029 = vld [vmem:[#allocation4] sm:$0x1]
        %v1031 = vperm.slane %v1029, 0
        %v1036 = vunpack.c.l.b16 %v1026
        %v1037 = vunpack.c.l.b16 %v1027
        %v1038 = vunpack.c.l.b16 %v1028
        %v1039 = vpack.c.b16 %v1037, %v1036
        %v1040 = vpack.c.b16 %v1038, %v1038
        %vm1042 = vcmask 162816
        %v1044 = vsel %vm1042, %v1022, 0
        %v1047 = vsel %vm1042, %v1023, 0
        %v1050 = vsel %vm1042, %v1024, 0
        %v1053 = vsel %vm1042, %v1025, 0
        %vm1055 = vcmask 1041408
        %v1057 = vsel %vm1055, %v1040, 0
        %1059 = vmatpush.bf16.msra.mxu0 0
        %1060 = vmatpush.bf16.msra.mxu0 0
        %1061 = vmatpush.bf16.msra.mxu0 0
        %1062 = vmatpush.bf16.msra.mxu0 0
        %1063 = vmatpush.bf16.msra.mxu0 0
        %1064 = vmatpush.bf16.msra.mxu0 0
        %1065 = vmatpush.bf16.msra.mxu0 %v1057
        %1066 = vmatpush.bf16.msra.mxu0 %v1039
        %1067 = vmatmul.bf16.gmra.mxu0 %v1044
        %v1068 = vpop.f32.mrf.mxu0
        %v1069 = vadd.f32 %v1031, %v1068
        %v1070 = vpop.f32.mrf.mxu0
        %v1071 = vadd.f32 %v1031, %v1070
        %1072 = vmatmul.bf16.gmra.mxu0 %v1047
        %v1073 = vpop.f32.mrf.mxu0
        %v1074 = vadd.f32 %v1031, %v1073
        %v1075 = vpop.f32.mrf.mxu0
        %v1076 = vadd.f32 %v1031, %v1075
        %1077 = vmatmul.bf16.gmra.mxu0 %v1050
        %v1078 = vpop.f32.mrf.mxu0
        %v1079 = vadd.f32 %v1031, %v1078
        %v1080 = vpop.f32.mrf.mxu0
        %v1081 = vadd.f32 %v1031, %v1080
        %1082 = vmatmul.bf16.gmra.mxu0 %v1053
        %v1083 = vpop.f32.mrf.mxu0
        %v1084 = vadd.f32 %v1031, %v1083
        %v1085 = vpop.f32.mrf.mxu0
        %v1086 = vadd.f32 %v1031, %v1085
        %1087 = vdwg.mxu0
        %v1088 = vtanh.pop %v1069
        %v1089 = vtanh.pop %v1071
        %v1090 = vtanh.pop %v1074
        %v1091 = vtanh.pop %v1076
        %v1092 = vtanh.pop %v1079
        %v1093 = vtanh.pop %v1081
        %v1094 = vtanh.pop %v1084
        %v1095 = vtanh.pop %v1086
        %v1096 = vpack.c.bf16 %v1089, %v1088
        %v1097 = vpack.c.bf16 %v1091, %v1090
        %v1098 = vpack.c.bf16 %v1093, %v1092
        %v1099 = vpack.c.bf16 %v1095, %v1094
        %v1100 = vld [vmem:[#allocation6] sm:$0xf]
        %v1101 = vld [vmem:[#allocation6 + $0x4] sm:$0xf]
        %v1102 = vld [vmem:[#allocation6 + $0x8] sm:$0xf]
        %v1103 = vld [vmem:[#allocation6 + $0xc] sm:$0xf]
        %v1104 = vld [vmem:[#allocation6 + $0x10] sm:$0xf]
        %v1105 = vld [vmem:[#allocation6 + $0x14] sm:$0xf]
        %v1106 = vld [vmem:[#allocation6 + $0x18] sm:$0xf]
        %v1107 = vld [vmem:[#allocation6 + $0x1c] sm:$0xf]
        %v1108 = vld [vmem:[#allocation6 + $0x20] sm:$0xf]
        %v1109 = vld [vmem:[#allocation6 + $0x24] sm:$0xf]
        %v1110 = vld [vmem:[#allocation6 + $0x28] sm:$0xf]
        %v1111 = vld [vmem:[#allocation6 + $0x2c] sm:$0xf]
        %v1112 = vld [vmem:[#allocation6 + $0x30] sm:$0xf]
        %v1113 = vld [vmem:[#allocation6 + $0x34] sm:$0xf]
        %v1114 = vld [vmem:[#allocation6 + $0x38] sm:$0xf]
        %v1115 = vld [vmem:[#allocation6 + $0x3c] sm:$0xf]
        %v1116 = vld [vmem:[#allocation7] sm:$0x1]
        %v1118 = vperm.slane %v1116, 0
        %v1136 = vunpack.c.l.b16 %v1100
        %v1137 = vunpack.c.l.b16 %v1101
        %v1138 = vunpack.c.l.b16 %v1102
        %v1139 = vunpack.c.l.b16 %v1103
        %v1140 = vunpack.c.l.b16 %v1104
        %v1141 = vunpack.c.l.b16 %v1105
        %v1142 = vunpack.c.l.b16 %v1106
        %v1143 = vunpack.c.l.b16 %v1107
        %v1144 = vunpack.c.l.b16 %v1108
        %v1145 = vunpack.c.l.b16 %v1109
        %v1146 = vunpack.c.l.b16 %v1110
        %v1147 = vunpack.c.l.b16 %v1111
        %v1148 = vunpack.c.l.b16 %v1112
        %v1149 = vunpack.c.l.b16 %v1113
        %v1150 = vunpack.c.l.b16 %v1114
        %v1151 = vunpack.c.l.b16 %v1115
        %v1152 = vpack.c.b16 %v1137, %v1136
        %v1153 = vpack.c.b16 %v1139, %v1138
        %v1154 = vpack.c.b16 %v1141, %v1140
        %v1155 = vpack.c.b16 %v1143, %v1142
        %v1156 = vpack.c.b16 %v1145, %v1144
        %v1157 = vpack.c.b16 %v1147, %v1146
        %v1158 = vpack.c.b16 %v1149, %v1148
        %v1159 = vpack.c.b16 %v1151, %v1150
        %1168 = vmatpush.bf16.msra.mxu0 %v1159
        %1169 = vmatpush.bf16.msra.mxu0 %v1158
        %1170 = vmatpush.bf16.msra.mxu0 %v1157
        %1171 = vmatpush.bf16.msra.mxu0 %v1156
        %1172 = vmatpush.bf16.msra.mxu0 %v1155
        %1173 = vmatpush.bf16.msra.mxu0 %v1154
        %1174 = vmatpush.bf16.msra.mxu0 %v1153
        %1175 = vmatpush.bf16.msra.mxu0 %v1152
        %1176 = vmatmul.bf16.gmra.mxu0 %v1096
        %v1177 = vpop.f32.mrf.mxu0
        %v1178 = vadd.f32 %v1118, %v1177
        %v1179 = vpop.f32.mrf.mxu0
        %v1180 = vadd.f32 %v1118, %v1179
        %1181 = vmatmul.bf16.gmra.mxu0 %v1097
        %v1182 = vpop.f32.mrf.mxu0
        %v1183 = vadd.f32 %v1118, %v1182
        %v1184 = vpop.f32.mrf.mxu0
        %v1185 = vadd.f32 %v1118, %v1184
        %1186 = vmatmul.bf16.gmra.mxu0 %v1098
        %v1187 = vpop.f32.mrf.mxu0
        %v1188 = vadd.f32 %v1118, %v1187
        %v1189 = vpop.f32.mrf.mxu0
        %v1190 = vadd.f32 %v1118, %v1189
        %1191 = vmatmul.bf16.gmra.mxu0 %v1099
        %v1192 = vpop.f32.mrf.mxu0
        %v1193 = vadd.f32 %v1118, %v1192
        %v1194 = vpop.f32.mrf.mxu0
        %v1195 = vadd.f32 %v1118, %v1194
        %1196 = vdwg.mxu0
        %v1197 = vtanh.pop %v1178
        %v1198 = vtanh.pop %v1180
        %v1199 = vtanh.pop %v1183
        %v1200 = vtanh.pop %v1185
        %v1201 = vtanh.pop %v1188
        %v1202 = vtanh.pop %v1190
        %v1203 = vtanh.pop %v1193
        %v1204 = vtanh.pop %v1195
        %v1205 = vpack.c.bf16 %v1198, %v1197
        %v1206 = vpack.c.bf16 %v1200, %v1199
        %v1207 = vpack.c.bf16 %v1202, %v1201
        %v1208 = vpack.c.bf16 %v1204, %v1203
        %v1209 = vld [vmem:[#allocation9] sm:$0xf]
        %v1210 = vld [vmem:[#allocation9 + $0x4] sm:$0xf]
        %v1211 = vld [vmem:[#allocation9 + $0x8] sm:$0xf]
        %v1212 = vld [vmem:[#allocation9 + $0xc] sm:$0xf]
        %v1217 = vunpack.c.l.b16 %v1209
        %v1218 = vunpack.c.l.b16 %v1210
        %v1219 = vunpack.c.l.b16 %v1211
        %v1220 = vunpack.c.l.b16 %v1212
        %v1221 = vpack.c.b16 %v1218, %v1217
        %v1222 = vpack.c.b16 %v1220, %v1219
        %vm1225 = vcmask 261120
        %v1227 = vsel %vm1225, %v1205, 0
        %v1230 = vsel %vm1225, %v1206, 0
        %v1233 = vsel %vm1225, %v1207, 0
        %v1236 = vsel %vm1225, %v1208, 0
        %1238 = vmatpush.bf16.msra.mxu0 0
        %1239 = vmatpush.bf16.msra.mxu0 0
        %1240 = vmatpush.bf16.msra.mxu0 0
        %1241 = vmatpush.bf16.msra.mxu0 0
        %1242 = vmatpush.bf16.msra.mxu0 0
        %1243 = vmatpush.bf16.msra.mxu0 0
        %1244 = vmatpush.bf16.msra.mxu0 %v1222
        %1245 = vmatpush.bf16.msra.mxu0 %v1221
        %1246 = vmatmul.bf16.gmra.mxu0 %v1227
        %v1247 = vpop.f32.mrf.mxu0
        %v1248 = vadd.f32 0.0, %v1247
        %v1249 = vpop.f32.mrf.mxu0
        %v1250 = vadd.f32 0.0, %v1249
        %1251 = vmatmul.bf16.gmra.mxu0 %v1230
        %v1252 = vpop.f32.mrf.mxu0
        %v1253 = vadd.f32 0.0, %v1252
        %v1254 = vpop.f32.mrf.mxu0
        %v1255 = vadd.f32 0.0, %v1254
        %1256 = vmatmul.bf16.gmra.mxu0 %v1233
        %v1257 = vpop.f32.mrf.mxu0
        %v1258 = vadd.f32 0.0, %v1257
        %v1259 = vpop.f32.mrf.mxu0
        %v1260 = vadd.f32 0.0, %v1259
        %1261 = vmatmul.bf16.gmra.mxu0 %v1236
        %v1262 = vpop.f32.mrf.mxu0
        %v1263 = vadd.f32 0.0, %v1262
        %v1264 = vpop.f32.mrf.mxu0
        %v1265 = vadd.f32 0.0, %v1264
        %1266 = vdwg.mxu0
        %v1267 = vpack.c.bf16 %v1250, %v1248
        %v1268 = vpack.c.bf16 %v1255, %v1253
        %v1269 = vpack.c.bf16 %v1260, %v1258
        %v1270 = vpack.c.bf16 %v1265, %v1263
        %v1271 = vld [vmem:[#allocation10] sm:$0xf]
        %v1272 = vld [vmem:[#allocation10 + $0x4] sm:$0xf]
        %v1273 = vld [vmem:[#allocation10 + $0x8] sm:$0xf]
        %v1274 = vld [vmem:[#allocation10 + $0xc] sm:$0xf]
        %v1275 = vld [vmem:[#allocation10 + $0x10] sm:$0x1]
        %v1281 = vunpack.c.l.b16 %v1271
        %v1282 = vunpack.c.l.b16 %v1272
        %v1283 = vunpack.c.l.b16 %v1273
        %v1284 = vunpack.c.l.b16 %v1274
        %v1285 = vunpack.c.l.b16 %v1275
        %v1286 = vpack.c.b16 %v1282, %v1281
        %v1287 = vpack.c.b16 %v1284, %v1283
        %v1288 = vpack.c.b16 %v1285, %v1285
        %vm1289 = vcmask 523264
        %v1291 = vsel %vm1289, %v1286, 0
        %v1294 = vsel %vm1289, %v1287, 0
        %v1297 = vsel %vm1289, %v1288, 0
        %1299 = vmatpush.bf16.msra.mxu0 0
        %1300 = vmatpush.bf16.msra.mxu0 0
        %1301 = vmatpush.bf16.msra.mxu0 0
        %1302 = vmatpush.bf16.msra.mxu0 0
        %1303 = vmatpush.bf16.msra.mxu0 %v1270
        %1304 = vmatpush.bf16.msra.mxu0 %v1269
        %1305 = vmatpush.bf16.msra.mxu0 %v1268
        %1306 = vmatpush.bf16.msra.mxu0 %v1267
        %1307 = vmatmul.bf16.gmra.mxu0 %v1291
        %v1308 = vpop.f32.mrf.mxu0
        %v1309 = vadd.f32 0.0, %v1308
        %v1310 = vpop.f32.mrf.mxu0
        %v1311 = vadd.f32 0.0, %v1310
        %1312 = vmatmul.bf16.gmra.mxu0 %v1294
        %v1313 = vpop.f32.mrf.mxu0
        %v1314 = vadd.f32 0.0, %v1313
        %v1315 = vpop.f32.mrf.mxu0
        %v1316 = vadd.f32 0.0, %v1315
        %1317 = vmatmul.bf16.gmra.mxu0 %v1297
        %v1318 = vpop.f32.mrf.mxu0
        %v1319 = vadd.f32 0.0, %v1318
        %v1320 = vpop.f32.mrf.mxu0
        %1321 = vdwg.mxu0
        %v1322 = vld [vmem:[#allocation12] sm:$0xf]
        %v1323 = vld [vmem:[#allocation12 + $0x4] sm:$0xf]
        %v1324 = vld [vmem:[#allocation12 + $0x8] sm:$0xf]
        %v1325 = vld [vmem:[#allocation12 + $0xc] sm:$0xf]
        %v1326 = vld [vmem:[#allocation12 + $0x10] sm:$0x1]
        %v1332 = vunpack.c.l.b16 %v1322
        %v1333 = vunpack.c.l.b16 %v1323
        %v1334 = vunpack.c.l.b16 %v1324
        %v1335 = vunpack.c.l.b16 %v1325
        %v1336 = vunpack.c.l.b16 %v1326
        %v1337 = vpack.c.b16 %v1333, %v1332
        %v1338 = vpack.c.b16 %v1335, %v1334
        %v1339 = vpack.c.b16 %v1336, %v1336
        %v1341 = vsel %vm1289, %v1337, 0
        %v1344 = vsel %vm1289, %v1338, 0
        %v1347 = vsel %vm1289, %v1339, 0
        %1349 = vmatpush.bf16.msra.mxu0 0
        %1350 = vmatpush.bf16.msra.mxu0 0
        %1351 = vmatpush.bf16.msra.mxu0 0
        %1352 = vmatpush.bf16.msra.mxu0 0
        %1353 = vmatpush.bf16.msra.mxu0 %v1270
        %1354 = vmatpush.bf16.msra.mxu0 %v1269
        %1355 = vmatpush.bf16.msra.mxu0 %v1268
        %1356 = vmatpush.bf16.msra.mxu0 %v1267
        %1357 = vmatmul.bf16.gmra.mxu0 %v1341
        %v1358 = vpop.f32.mrf.mxu0
        %v1359 = vadd.f32 0.0, %v1358
        %v1360 = vpop.f32.mrf.mxu0
        %v1361 = vadd.f32 0.0, %v1360
        %1362 = vmatmul.bf16.gmra.mxu0 %v1344
        %v1363 = vpop.f32.mrf.mxu0
        %v1364 = vadd.f32 0.0, %v1363
        %v1365 = vpop.f32.mrf.mxu0
        %v1366 = vadd.f32 0.0, %v1365
        %1367 = vmatmul.bf16.gmra.mxu0 %v1347
        %v1368 = vpop.f32.mrf.mxu0
        %v1369 = vadd.f32 0.0, %v1368
        %v1370 = vpop.f32.mrf.mxu0
        %1371 = vdwg.mxu0
        %v1372 = vld [vmem:[#allocation13] sm:$0x1]
        %1374 = vset.pattern.permute.xlu0 0
        %1375 = vperm.xlu0 %1374, %v1309
        %v1376 = vpop.permute.xlu0 %1375
        %1379 = vset.pattern.permute.xlu0 0
        %1380 = vperm.xlu0 %1379, %v1311
        %v1381 = vpop.permute.xlu0 %1380
        %1384 = vset.pattern.permute.xlu0 0
        %1385 = vperm.xlu0 %1384, %v1314
        %v1386 = vpop.permute.xlu0 %1385
        %1389 = vset.pattern.permute.xlu0 0
        %1390 = vperm.xlu0 %1389, %v1316
        %v1391 = vpop.permute.xlu0 %1390
        %1394 = vset.pattern.permute.xlu0 0
        %1395 = vperm.xlu0 %1394, %v1319
        %v1396 = vpop.permute.xlu0 %1395
        %v1399 = vperm.slane %v1372, 0
        %v1401 = vmul.f32 %v1376, %v1399
        %v1402 = vmul.f32 %v1381, %v1399
        %v1403 = vmul.f32 %v1386, %v1399
        %v1404 = vmul.f32 %v1391, %v1399
        %v1405 = vmul.f32 %v1396, %v1399
        %v1406 = vld [vmem:[#allocation15] sm:$0x1]
        %1408 = vset.pattern.permute.xlu0 0
        %1409 = vperm.xlu0 %1408, %v1359
        %v1410 = vpop.permute.xlu0 %1409
        %1413 = vset.pattern.permute.xlu0 0
        %1414 = vperm.xlu0 %1413, %v1361
        %v1415 = vpop.permute.xlu0 %1414
        %1418 = vset.pattern.permute.xlu0 0
        %1419 = vperm.xlu0 %1418, %v1364
        %v1420 = vpop.permute.xlu0 %1419
        %1423 = vset.pattern.permute.xlu0 0
        %1424 = vperm.xlu0 %1423, %v1366
        %v1425 = vpop.permute.xlu0 %1424
        %1428 = vset.pattern.permute.xlu0 0
        %1429 = vperm.xlu0 %1428, %v1369
        %v1430 = vpop.permute.xlu0 %1429
        %v1433 = vperm.slane %v1406, 0
        %v1435 = vmul.f32 %v1410, %v1433
        %v1436 = vmul.f32 %v1415, %v1433
        %v1437 = vmul.f32 %v1420, %v1433
        %v1438 = vmul.f32 %v1425, %v1433
        %v1439 = vmul.f32 %v1430, %v1433
        %v1440 = vadd.f32 %v1401, %v1435
        %v1441 = vadd.f32 %v1402, %v1436
        %v1442 = vadd.f32 %v1403, %v1437
        %v1443 = vadd.f32 %v1404, %v1438
        %v1444 = vadd.f32 %v1405, %v1439
        %v1445 = vld [vmem:[#allocation16] sm:$0x1]
        %v1447 = vperm.slane %v1445, 0
        %v1449 = vadd.f32 %v1440, %v1447
        %v1450 = vadd.f32 %v1441, %v1447
        %v1451 = vadd.f32 %v1442, %v1447
        %v1452 = vadd.f32 %v1443, %v1447
        %v1453 = vadd.f32 %v1444, %v1447
        %v1454 = vtanh.pop %v1449
        %v1455 = vtanh.pop %v1450
        %v1456 = vtanh.pop %v1451
        %v1457 = vtanh.pop %v1452
        %v1458 = vtanh.pop %v1453
        %v1459 = vpack.c.bf16 %v1455, %v1454
        %v1460 = vpack.c.bf16 %v1457, %v1456
        %v1461 = vpack.c.bf16 %v1458, %v1458
        %v1462 = vld [vmem:[#allocation18] sm:$0xf]
        %v1463 = vld [vmem:[#allocation18 + $0x4] sm:$0xf]
        %v1464 = vld [vmem:[#allocation18 + $0x8] sm:$0xf]
        %v1465 = vld [vmem:[#allocation18 + $0xc] sm:$0xf]
        %v1466 = vld [vmem:[#allocation19] sm:$0x1]
        %v1468 = vperm.slane %v1466, 0
        %v1474 = vunpack.c.l.b16 %v1462
        %v1475 = vunpack.c.l.b16 %v1463
        %v1476 = vunpack.c.l.b16 %v1464
        %v1477 = vunpack.c.l.b16 %v1465
        %v1478 = vpack.c.b16 %v1475, %v1474
        %v1479 = vpack.c.b16 %v1477, %v1476
        %v1483 = vsel %vm1225, %v1459, 0
        %v1486 = vsel %vm1225, %v1460, 0
        %v1489 = vsel %vm1225, %v1461, 0
        %1491 = vmatpush.bf16.msra.mxu0 0
        %1492 = vmatpush.bf16.msra.mxu0 0
        %1493 = vmatpush.bf16.msra.mxu0 0
        %1494 = vmatpush.bf16.msra.mxu0 0
        %1495 = vmatpush.bf16.msra.mxu0 0
        %1496 = vmatpush.bf16.msra.mxu0 0
        %1497 = vmatpush.bf16.msra.mxu0 %v1479
        %1498 = vmatpush.bf16.msra.mxu0 %v1478
        %1499 = vmatmul.bf16.gmra.mxu0 %v1483
        %v1500 = vpop.f32.mrf.mxu0
        %v1501 = vadd.f32 %v1468, %v1500
        %v1502 = vpop.f32.mrf.mxu0
        %v1503 = vadd.f32 %v1468, %v1502
        %1504 = vmatmul.bf16.gmra.mxu0 %v1486
        %v1505 = vpop.f32.mrf.mxu0
        %v1506 = vadd.f32 %v1468, %v1505
        %v1507 = vpop.f32.mrf.mxu0
        %v1508 = vadd.f32 %v1468, %v1507
        %1509 = vmatmul.bf16.gmra.mxu0 %v1489
        %v1510 = vpop.f32.mrf.mxu0
        %v1511 = vadd.f32 %v1468, %v1510
        %v1512 = vpop.f32.mrf.mxu0
        %1513 = vdwg.mxu0
        %v1514 = vtanh.pop %v1501
        %v1515 = vtanh.pop %v1503
        %v1516 = vtanh.pop %v1506
        %v1517 = vtanh.pop %v1508
        %v1518 = vtanh.pop %v1511
        %v1519 = vpack.c.bf16 %v1515, %v1514
        %v1520 = vpack.c.bf16 %v1517, %v1516
        %v1521 = vpack.c.bf16 %v1518, %v1518
        %v1522 = vld [vmem:[%s13] sm:$0xf]
        %v1523 = vld [vmem:[%s13 + $0x4] sm:$0xf]
        %v1524 = vld [vmem:[%s13 + $0x8] sm:$0xf]
        %v1525 = vld [vmem:[%s13 + $0xc] sm:$0xf]
        %v1526 = vld [vmem:[#allocation21] sm:$0x1]
        %v1528 = vperm.slane %v1526, 0
        %v1534 = vunpack.c.l.b16 %v1522
        %v1535 = vunpack.c.l.b16 %v1523
        %v1536 = vunpack.c.l.b16 %v1524
        %v1537 = vunpack.c.l.b16 %v1525
        %v1538 = vpack.c.b16 %v1535, %v1534
        %v1539 = vpack.c.b16 %v1537, %v1536
        %v1543 = vsel %vm1225, %v1519, 0
        %v1546 = vsel %vm1225, %v1520, 0
        %v1549 = vsel %vm1225, %v1521, 0
        %1551 = vmatpush.bf16.msra.mxu0 0
        %1552 = vmatpush.bf16.msra.mxu0 0
        %1553 = vmatpush.bf16.msra.mxu0 0
        %1554 = vmatpush.bf16.msra.mxu0 0
        %1555 = vmatpush.bf16.msra.mxu0 0
        %1556 = vmatpush.bf16.msra.mxu0 0
        %1557 = vmatpush.bf16.msra.mxu0 %v1539
        %1558 = vmatpush.bf16.msra.mxu0 %v1538
        %1559 = vmatmul.bf16.gmra.mxu0 %v1543
        %v1560 = vpop.f32.mrf.mxu0
        %v1561 = vadd.f32 %v1528, %v1560
        %v1562 = vpop.f32.mrf.mxu0
        %v1563 = vadd.f32 %v1528, %v1562
        %1564 = vmatmul.bf16.gmra.mxu0 %v1546
        %v1565 = vpop.f32.mrf.mxu0
        %v1566 = vadd.f32 %v1528, %v1565
        %v1567 = vpop.f32.mrf.mxu0
        %v1568 = vadd.f32 %v1528, %v1567
        %1569 = vmatmul.bf16.gmra.mxu0 %v1549
        %v1570 = vpop.f32.mrf.mxu0
        %v1571 = vadd.f32 %v1528, %v1570
        %v1572 = vpop.f32.mrf.mxu0
        %1573 = vdwg.mxu0
        %v1574 = vadd.f32 %v1561, %v1454
        %v1575 = vadd.f32 %v1563, %v1455
        %v1576 = vadd.f32 %v1566, %v1456
        %v1577 = vadd.f32 %v1568, %v1457
        %v1578 = vadd.f32 %v1571, %v1458
        %v1579 = vtanh.pop %v1574
        %v1580 = vtanh.pop %v1575
        %v1581 = vtanh.pop %v1576
        %v1582 = vtanh.pop %v1577
        %v1583 = vtanh.pop %v1578
        %v1584 = vpack.c.bf16 %v1580, %v1579
        %v1585 = vpack.c.bf16 %v1582, %v1581
        %v1586 = vpack.c.bf16 %v1583, %v1583
        %s1587 = scalar_lea.vmem [#allocation18], 16
        %v1588 = vld [vmem:[%s1587] sm:$0xf]
        %v1589 = vld [vmem:[%s1587 + $0x4] sm:$0xf]
        %v1590 = vld [vmem:[%s1587 + $0x8] sm:$0xf]
        %v1591 = vld [vmem:[%s1587 + $0xc] sm:$0xf]
        %s1592 = scalar_lea.vmem [#allocation19], 1
        %v1593 = vld [vmem:[%s1592] sm:$0x1]
        %v1595 = vperm.slane %v1593, 0
        %v1601 = vunpack.c.l.b16 %v1588
        %v1602 = vunpack.c.l.b16 %v1589
        %v1603 = vunpack.c.l.b16 %v1590
        %v1604 = vunpack.c.l.b16 %v1591
        %v1605 = vpack.c.b16 %v1602, %v1601
        %v1606 = vpack.c.b16 %v1604, %v1603
        %v1610 = vsel %vm1225, %v1584, 0
        %v1613 = vsel %vm1225, %v1585, 0
        %v1616 = vsel %vm1225, %v1586, 0
        %1618 = vmatpush.bf16.msra.mxu0 0
        %1619 = vmatpush.bf16.msra.mxu0 0
        %1620 = vmatpush.bf16.msra.mxu0 0
        %1621 = vmatpush.bf16.msra.mxu0 0
        %1622 = vmatpush.bf16.msra.mxu0 0
        %1623 = vmatpush.bf16.msra.mxu0 0
        %1624 = vmatpush.bf16.msra.mxu0 %v1606
        %1625 = vmatpush.bf16.msra.mxu0 %v1605
        %1626 = vmatmul.bf16.gmra.mxu0 %v1610
        %v1627 = vpop.f32.mrf.mxu0
        %v1628 = vadd.f32 %v1595, %v1627
        %v1629 = vpop.f32.mrf.mxu0
        %v1630 = vadd.f32 %v1595, %v1629
        %1631 = vmatmul.bf16.gmra.mxu0 %v1613
        %v1632 = vpop.f32.mrf.mxu0
        %v1633 = vadd.f32 %v1595, %v1632
        %v1634 = vpop.f32.mrf.mxu0
        %v1635 = vadd.f32 %v1595, %v1634
        %1636 = vmatmul.bf16.gmra.mxu0 %v1616
        %v1637 = vpop.f32.mrf.mxu0
        %v1638 = vadd.f32 %v1595, %v1637
        %v1639 = vpop.f32.mrf.mxu0
        %1640 = vdwg.mxu0
        %v1641 = vtanh.pop %v1628
        %v1642 = vtanh.pop %v1630
        %v1643 = vtanh.pop %v1633
        %v1644 = vtanh.pop %v1635
        %v1645 = vtanh.pop %v1638
        %v1646 = vpack.c.bf16 %v1642, %v1641
        %v1647 = vpack.c.bf16 %v1644, %v1643
        %v1648 = vpack.c.bf16 %v1645, %v1645
        %s1649 = scalar_lea.vmem %s13, 16
        %v1650 = vld [vmem:[%s1649] sm:$0xf]
        %v1651 = vld [vmem:[%s1649 + $0x4] sm:$0xf]
        %v1652 = vld [vmem:[%s1649 + $0x8] sm:$0xf]
        %v1653 = vld [vmem:[%s1649 + $0xc] sm:$0xf]
        %s1654 = scalar_lea.vmem [#allocation21], 1
        %v1655 = vld [vmem:[%s1654] sm:$0x1]
        %v1657 = vperm.slane %v1655, 0
        %v1663 = vunpack.c.l.b16 %v1650
        %v1664 = vunpack.c.l.b16 %v1651
        %v1665 = vunpack.c.l.b16 %v1652
        %v1666 = vunpack.c.l.b16 %v1653
        %v1667 = vpack.c.b16 %v1664, %v1663
        %v1668 = vpack.c.b16 %v1666, %v1665
        %v1672 = vsel %vm1225, %v1646, 0
        %v1675 = vsel %vm1225, %v1647, 0
        %v1678 = vsel %vm1225, %v1648, 0
        %1680 = vmatpush.bf16.msra.mxu0 0
        %1681 = vmatpush.bf16.msra.mxu0 0
        %1682 = vmatpush.bf16.msra.mxu0 0
        %1683 = vmatpush.bf16.msra.mxu0 0
        %1684 = vmatpush.bf16.msra.mxu0 0
        %1685 = vmatpush.bf16.msra.mxu0 0
        %1686 = vmatpush.bf16.msra.mxu0 %v1668
        %1687 = vmatpush.bf16.msra.mxu0 %v1667
        %1688 = vmatmul.bf16.gmra.mxu0 %v1672
        %v1689 = vpop.f32.mrf.mxu0
        %v1690 = vadd.f32 %v1657, %v1689
        %v1691 = vpop.f32.mrf.mxu0
        %v1692 = vadd.f32 %v1657, %v1691
        %1693 = vmatmul.bf16.gmra.mxu0 %v1675
        %v1694 = vpop.f32.mrf.mxu0
        %v1695 = vadd.f32 %v1657, %v1694
        %v1696 = vpop.f32.mrf.mxu0
        %v1697 = vadd.f32 %v1657, %v1696
        %1698 = vmatmul.bf16.gmra.mxu0 %v1678
        %v1699 = vpop.f32.mrf.mxu0
        %v1700 = vadd.f32 %v1657, %v1699
        %v1701 = vpop.f32.mrf.mxu0
        %1702 = vdwg.mxu0
        %v1703 = vadd.f32 %v1690, %v1579
        %v1704 = vadd.f32 %v1692, %v1580
        %v1705 = vadd.f32 %v1695, %v1581
        %v1706 = vadd.f32 %v1697, %v1582
        %v1707 = vadd.f32 %v1700, %v1583
        %v1708 = vtanh.pop %v1703
        %v1709 = vtanh.pop %v1704
        %v1710 = vtanh.pop %v1705
        %v1711 = vtanh.pop %v1706
        %v1712 = vtanh.pop %v1707
        %v1713 = vpack.c.bf16 %v1709, %v1708
        %v1714 = vpack.c.bf16 %v1711, %v1710
        %v1715 = vpack.c.bf16 %v1712, %v1712
        %s1716 = scalar_lea.vmem [#allocation18], 32
        %v1717 = vld [vmem:[%s1716] sm:$0xf]
        %v1718 = vld [vmem:[%s1716 + $0x4] sm:$0xf]
        %v1719 = vld [vmem:[%s1716 + $0x8] sm:$0xf]
        %v1720 = vld [vmem:[%s1716 + $0xc] sm:$0xf]
        %s1721 = scalar_lea.vmem [#allocation19], 2
        %v1722 = vld [vmem:[%s1721] sm:$0x1]
        %v1724 = vperm.slane %v1722, 0
        %v1730 = vunpack.c.l.b16 %v1717
        %v1731 = vunpack.c.l.b16 %v1718
        %v1732 = vunpack.c.l.b16 %v1719
        %v1733 = vunpack.c.l.b16 %v1720
        %v1734 = vpack.c.b16 %v1731, %v1730
        %v1735 = vpack.c.b16 %v1733, %v1732
        %v1739 = vsel %vm1225, %v1713, 0
        %v1742 = vsel %vm1225, %v1714, 0
        %v1745 = vsel %vm1225, %v1715, 0
        %1747 = vmatpush.bf16.msra.mxu0 0
        %1748 = vmatpush.bf16.msra.mxu0 0
        %1749 = vmatpush.bf16.msra.mxu0 0
        %1750 = vmatpush.bf16.msra.mxu0 0
        %1751 = vmatpush.bf16.msra.mxu0 0
        %1752 = vmatpush.bf16.msra.mxu0 0
        %1753 = vmatpush.bf16.msra.mxu0 %v1735
        %1754 = vmatpush.bf16.msra.mxu0 %v1734
        %1755 = vmatmul.bf16.gmra.mxu0 %v1739
        %v1756 = vpop.f32.mrf.mxu0
        %v1757 = vadd.f32 %v1724, %v1756
        %v1758 = vpop.f32.mrf.mxu0
        %v1759 = vadd.f32 %v1724, %v1758
        %1760 = vmatmul.bf16.gmra.mxu0 %v1742
        %v1761 = vpop.f32.mrf.mxu0
        %v1762 = vadd.f32 %v1724, %v1761
        %v1763 = vpop.f32.mrf.mxu0
        %v1764 = vadd.f32 %v1724, %v1763
        %1765 = vmatmul.bf16.gmra.mxu0 %v1745
        %v1766 = vpop.f32.mrf.mxu0
        %v1767 = vadd.f32 %v1724, %v1766
        %v1768 = vpop.f32.mrf.mxu0
        %1769 = vdwg.mxu0
        %v1770 = vtanh.pop %v1757
        %v1771 = vtanh.pop %v1759
        %v1772 = vtanh.pop %v1762
        %v1773 = vtanh.pop %v1764
        %v1774 = vtanh.pop %v1767
        %v1775 = vpack.c.bf16 %v1771, %v1770
        %v1776 = vpack.c.bf16 %v1773, %v1772
        %v1777 = vpack.c.bf16 %v1774, %v1774
        %s1778 = scalar_lea.vmem %s13, 32
        %v1779 = vld [vmem:[%s1778] sm:$0xf]
        %v1780 = vld [vmem:[%s1778 + $0x4] sm:$0xf]
        %v1781 = vld [vmem:[%s1778 + $0x8] sm:$0xf]
        %v1782 = vld [vmem:[%s1778 + $0xc] sm:$0xf]
        %s1783 = scalar_lea.vmem [#allocation21], 2
        %v1784 = vld [vmem:[%s1783] sm:$0x1]
        %v1786 = vperm.slane %v1784, 0
        %v1792 = vunpack.c.l.b16 %v1779
        %v1793 = vunpack.c.l.b16 %v1780
        %v1794 = vunpack.c.l.b16 %v1781
        %v1795 = vunpack.c.l.b16 %v1782
        %v1796 = vpack.c.b16 %v1793, %v1792
        %v1797 = vpack.c.b16 %v1795, %v1794
        %v1801 = vsel %vm1225, %v1775, 0
        %v1804 = vsel %vm1225, %v1776, 0
        %v1807 = vsel %vm1225, %v1777, 0
        %1809 = vmatpush.bf16.msra.mxu0 0
        %1810 = vmatpush.bf16.msra.mxu0 0
        %1811 = vmatpush.bf16.msra.mxu0 0
        %1812 = vmatpush.bf16.msra.mxu0 0
        %1813 = vmatpush.bf16.msra.mxu0 0
        %1814 = vmatpush.bf16.msra.mxu0 0
        %1815 = vmatpush.bf16.msra.mxu0 %v1797
        %1816 = vmatpush.bf16.msra.mxu0 %v1796
        %1817 = vmatmul.bf16.gmra.mxu0 %v1801
        %v1818 = vpop.f32.mrf.mxu0
        %v1819 = vadd.f32 %v1786, %v1818
        %v1820 = vpop.f32.mrf.mxu0
        %v1821 = vadd.f32 %v1786, %v1820
        %1822 = vmatmul.bf16.gmra.mxu0 %v1804
        %v1823 = vpop.f32.mrf.mxu0
        %v1824 = vadd.f32 %v1786, %v1823
        %v1825 = vpop.f32.mrf.mxu0
        %v1826 = vadd.f32 %v1786, %v1825
        %1827 = vmatmul.bf16.gmra.mxu0 %v1807
        %v1828 = vpop.f32.mrf.mxu0
        %v1829 = vadd.f32 %v1786, %v1828
        %v1830 = vpop.f32.mrf.mxu0
        %1831 = vdwg.mxu0
        %v1832 = vadd.f32 %v1819, %v1708
        %v1833 = vadd.f32 %v1821, %v1709
        %v1834 = vadd.f32 %v1824, %v1710
        %v1835 = vadd.f32 %v1826, %v1711
        %v1836 = vadd.f32 %v1829, %v1712
        %v1837 = vtanh.pop %v1832
        %v1838 = vtanh.pop %v1833
        %v1839 = vtanh.pop %v1834
        %v1840 = vtanh.pop %v1835
        %v1841 = vtanh.pop %v1836
        %v1842 = vpack.c.bf16 %v1838, %v1837
        %v1843 = vpack.c.bf16 %v1840, %v1839
        %v1844 = vpack.c.bf16 %v1841, %v1841
        %s1845 = scalar_lea.vmem [#allocation18], 48
        %v1846 = vld [vmem:[%s1845] sm:$0xf]
        %v1847 = vld [vmem:[%s1845 + $0x4] sm:$0xf]
        %v1848 = vld [vmem:[%s1845 + $0x8] sm:$0xf]
        %v1849 = vld [vmem:[%s1845 + $0xc] sm:$0xf]
        %s1850 = scalar_lea.vmem [#allocation19], 3
        %v1851 = vld [vmem:[%s1850] sm:$0x1]
        %v1853 = vperm.slane %v1851, 0
        %v1859 = vunpack.c.l.b16 %v1846
        %v1860 = vunpack.c.l.b16 %v1847
        %v1861 = vunpack.c.l.b16 %v1848
        %v1862 = vunpack.c.l.b16 %v1849
        %v1863 = vpack.c.b16 %v1860, %v1859
        %v1864 = vpack.c.b16 %v1862, %v1861
        %v1868 = vsel %vm1225, %v1842, 0
        %v1871 = vsel %vm1225, %v1843, 0
        %v1874 = vsel %vm1225, %v1844, 0
        %1876 = vmatpush.bf16.msra.mxu0 0
        %1877 = vmatpush.bf16.msra.mxu0 0
        %1878 = vmatpush.bf16.msra.mxu0 0
        %1879 = vmatpush.bf16.msra.mxu0 0
        %1880 = vmatpush.bf16.msra.mxu0 0
        %1881 = vmatpush.bf16.msra.mxu0 0
        %1882 = vmatpush.bf16.msra.mxu0 %v1864
        %1883 = vmatpush.bf16.msra.mxu0 %v1863
        %1884 = vmatmul.bf16.gmra.mxu0 %v1868
        %v1885 = vpop.f32.mrf.mxu0
        %v1886 = vadd.f32 %v1853, %v1885
        %v1887 = vpop.f32.mrf.mxu0
        %v1888 = vadd.f32 %v1853, %v1887
        %1889 = vmatmul.bf16.gmra.mxu0 %v1871
        %v1890 = vpop.f32.mrf.mxu0
        %v1891 = vadd.f32 %v1853, %v1890
        %v1892 = vpop.f32.mrf.mxu0
        %v1893 = vadd.f32 %v1853, %v1892
        %1894 = vmatmul.bf16.gmra.mxu0 %v1874
        %v1895 = vpop.f32.mrf.mxu0
        %v1896 = vadd.f32 %v1853, %v1895
        %v1897 = vpop.f32.mrf.mxu0
        %1898 = vdwg.mxu0
        %v1899 = vtanh.pop %v1886
        %v1900 = vtanh.pop %v1888
        %v1901 = vtanh.pop %v1891
        %v1902 = vtanh.pop %v1893
        %v1903 = vtanh.pop %v1896
        %v1904 = vpack.c.bf16 %v1900, %v1899
        %v1905 = vpack.c.bf16 %v1902, %v1901
        %v1906 = vpack.c.bf16 %v1903, %v1903
        %s1907 = scalar_lea.vmem %s13, 48
        %v1908 = vld [vmem:[%s1907] sm:$0xf]
        %v1909 = vld [vmem:[%s1907 + $0x4] sm:$0xf]
        %v1910 = vld [vmem:[%s1907 + $0x8] sm:$0xf]
        %v1911 = vld [vmem:[%s1907 + $0xc] sm:$0xf]
        %s1912 = scalar_lea.vmem [#allocation21], 3
        %v1913 = vld [vmem:[%s1912] sm:$0x1]
        %v1915 = vperm.slane %v1913, 0
        %v1921 = vunpack.c.l.b16 %v1908
        %v1922 = vunpack.c.l.b16 %v1909
        %v1923 = vunpack.c.l.b16 %v1910
        %v1924 = vunpack.c.l.b16 %v1911
        %v1925 = vpack.c.b16 %v1922, %v1921
        %v1926 = vpack.c.b16 %v1924, %v1923
        %v1930 = vsel %vm1225, %v1904, 0
        %v1933 = vsel %vm1225, %v1905, 0
        %v1936 = vsel %vm1225, %v1906, 0
        %1938 = vmatpush.bf16.msra.mxu0 0
        %1939 = vmatpush.bf16.msra.mxu0 0
        %1940 = vmatpush.bf16.msra.mxu0 0
        %1941 = vmatpush.bf16.msra.mxu0 0
        %1942 = vmatpush.bf16.msra.mxu0 0
        %1943 = vmatpush.bf16.msra.mxu0 0
        %1944 = vmatpush.bf16.msra.mxu0 %v1926
        %1945 = vmatpush.bf16.msra.mxu0 %v1925
        %1946 = vmatmul.bf16.gmra.mxu0 %v1930
        %v1947 = vpop.f32.mrf.mxu0
        %v1948 = vadd.f32 %v1915, %v1947
        %v1949 = vpop.f32.mrf.mxu0
        %v1950 = vadd.f32 %v1915, %v1949
        %1951 = vmatmul.bf16.gmra.mxu0 %v1933
        %v1952 = vpop.f32.mrf.mxu0
        %v1953 = vadd.f32 %v1915, %v1952
        %v1954 = vpop.f32.mrf.mxu0
        %v1955 = vadd.f32 %v1915, %v1954
        %1956 = vmatmul.bf16.gmra.mxu0 %v1936
        %v1957 = vpop.f32.mrf.mxu0
        %v1958 = vadd.f32 %v1915, %v1957
        %v1959 = vpop.f32.mrf.mxu0
        %1960 = vdwg.mxu0
        %v1961 = vadd.f32 %v1948, %v1837
        %v1962 = vadd.f32 %v1950, %v1838
        %v1963 = vadd.f32 %v1953, %v1839
        %v1964 = vadd.f32 %v1955, %v1840
        %v1965 = vadd.f32 %v1958, %v1841
        %v1966 = vtanh.pop %v1961
        %v1967 = vtanh.pop %v1962
        %v1968 = vtanh.pop %v1963
        %v1969 = vtanh.pop %v1964
        %v1970 = vtanh.pop %v1965
        %v1971 = vpack.c.bf16 %v1967, %v1966
        %v1972 = vpack.c.bf16 %v1969, %v1968
        %v1973 = vpack.c.bf16 %v1970, %v1970
        %s1974 = scalar_lea.vmem [#allocation18], 64
        %v1975 = vld [vmem:[%s1974] sm:$0xf]
        %v1976 = vld [vmem:[%s1974 + $0x4] sm:$0xf]
        %v1977 = vld [vmem:[%s1974 + $0x8] sm:$0xf]
        %v1978 = vld [vmem:[%s1974 + $0xc] sm:$0xf]
        %s1979 = scalar_lea.vmem [#allocation19], 4
        %v1980 = vld [vmem:[%s1979] sm:$0x1]
        %v1982 = vperm.slane %v1980, 0
        %v1988 = vunpack.c.l.b16 %v1975
        %v1989 = vunpack.c.l.b16 %v1976
        %v1990 = vunpack.c.l.b16 %v1977
        %v1991 = vunpack.c.l.b16 %v1978
        %v1992 = vpack.c.b16 %v1989, %v1988
        %v1993 = vpack.c.b16 %v1991, %v1990
        %v1997 = vsel %vm1225, %v1971, 0
        %v2000 = vsel %vm1225, %v1972, 0
        %v2003 = vsel %vm1225, %v1973, 0
        %2005 = vmatpush.bf16.msra.mxu0 0
        %2006 = vmatpush.bf16.msra.mxu0 0
        %2007 = vmatpush.bf16.msra.mxu0 0
        %2008 = vmatpush.bf16.msra.mxu0 0
        %2009 = vmatpush.bf16.msra.mxu0 0
        %2010 = vmatpush.bf16.msra.mxu0 0
        %2011 = vmatpush.bf16.msra.mxu0 %v1993
        %2012 = vmatpush.bf16.msra.mxu0 %v1992
        %2013 = vmatmul.bf16.gmra.mxu0 %v1997
        %v2014 = vpop.f32.mrf.mxu0
        %v2015 = vadd.f32 %v1982, %v2014
        %v2016 = vpop.f32.mrf.mxu0
        %v2017 = vadd.f32 %v1982, %v2016
        %2018 = vmatmul.bf16.gmra.mxu0 %v2000
        %v2019 = vpop.f32.mrf.mxu0
        %v2020 = vadd.f32 %v1982, %v2019
        %v2021 = vpop.f32.mrf.mxu0
        %v2022 = vadd.f32 %v1982, %v2021
        %2023 = vmatmul.bf16.gmra.mxu0 %v2003
        %v2024 = vpop.f32.mrf.mxu0
        %v2025 = vadd.f32 %v1982, %v2024
        %v2026 = vpop.f32.mrf.mxu0
        %2027 = vdwg.mxu0
        %v2028 = vtanh.pop %v2015
        %v2029 = vtanh.pop %v2017
        %v2030 = vtanh.pop %v2020
        %v2031 = vtanh.pop %v2022
        %v2032 = vtanh.pop %v2025
        %v2033 = vpack.c.bf16 %v2029, %v2028
        %v2034 = vpack.c.bf16 %v2031, %v2030
        %v2035 = vpack.c.bf16 %v2032, %v2032
        %s2036 = scalar_lea.vmem %s13, 64
        %v2037 = vld [vmem:[%s2036] sm:$0xf]
        %v2038 = vld [vmem:[%s2036 + $0x4] sm:$0xf]
        %v2039 = vld [vmem:[%s2036 + $0x8] sm:$0xf]
        %v2040 = vld [vmem:[%s2036 + $0xc] sm:$0xf]
        %s2041 = scalar_lea.vmem [#allocation21], 4
        %v2042 = vld [vmem:[%s2041] sm:$0x1]
        %v2044 = vperm.slane %v2042, 0
        %v2050 = vunpack.c.l.b16 %v2037
        %v2051 = vunpack.c.l.b16 %v2038
        %v2052 = vunpack.c.l.b16 %v2039
        %v2053 = vunpack.c.l.b16 %v2040
        %v2054 = vpack.c.b16 %v2051, %v2050
        %v2055 = vpack.c.b16 %v2053, %v2052
        %v2059 = vsel %vm1225, %v2033, 0
        %v2062 = vsel %vm1225, %v2034, 0
        %v2065 = vsel %vm1225, %v2035, 0
        %2067 = vmatpush.bf16.msra.mxu0 0
        %2068 = vmatpush.bf16.msra.mxu0 0
        %2069 = vmatpush.bf16.msra.mxu0 0
        %2070 = vmatpush.bf16.msra.mxu0 0
        %2071 = vmatpush.bf16.msra.mxu0 0
        %2072 = vmatpush.bf16.msra.mxu0 0
        %2073 = vmatpush.bf16.msra.mxu0 %v2055
        %2074 = vmatpush.bf16.msra.mxu0 %v2054
        %2075 = vmatmul.bf16.gmra.mxu0 %v2059
        %v2076 = vpop.f32.mrf.mxu0
        %v2077 = vadd.f32 %v2044, %v2076
        %v2078 = vpop.f32.mrf.mxu0
        %v2079 = vadd.f32 %v2044, %v2078
        %2080 = vmatmul.bf16.gmra.mxu0 %v2062
        %v2081 = vpop.f32.mrf.mxu0
        %v2082 = vadd.f32 %v2044, %v2081
        %v2083 = vpop.f32.mrf.mxu0
        %v2084 = vadd.f32 %v2044, %v2083
        %2085 = vmatmul.bf16.gmra.mxu0 %v2065
        %v2086 = vpop.f32.mrf.mxu0
        %v2087 = vadd.f32 %v2044, %v2086
        %v2088 = vpop.f32.mrf.mxu0
        %2089 = vdwg.mxu0
        %v2090 = vadd.f32 %v2077, %v1966
        %v2091 = vadd.f32 %v2079, %v1967
        %v2092 = vadd.f32 %v2082, %v1968
        %v2093 = vadd.f32 %v2084, %v1969
        %v2094 = vadd.f32 %v2087, %v1970
        %v2095 = vtanh.pop %v2090
        %v2096 = vtanh.pop %v2091
        %v2097 = vtanh.pop %v2092
        %v2098 = vtanh.pop %v2093
        %v2099 = vtanh.pop %v2094
        %v2100 = vpack.c.bf16 %v2096, %v2095
        %v2101 = vpack.c.bf16 %v2098, %v2097
        %v2102 = vpack.c.bf16 %v2099, %v2099
        %s2103 = scalar_lea.vmem [#allocation18], 80
        %v2104 = vld [vmem:[%s2103] sm:$0xf]
        %v2105 = vld [vmem:[%s2103 + $0x4] sm:$0xf]
        %v2106 = vld [vmem:[%s2103 + $0x8] sm:$0xf]
        %v2107 = vld [vmem:[%s2103 + $0xc] sm:$0xf]
        %s2108 = scalar_lea.vmem [#allocation19], 5
        %v2109 = vld [vmem:[%s2108] sm:$0x1]
        %v2111 = vperm.slane %v2109, 0
        %v2117 = vunpack.c.l.b16 %v2104
        %v2118 = vunpack.c.l.b16 %v2105
        %v2119 = vunpack.c.l.b16 %v2106
        %v2120 = vunpack.c.l.b16 %v2107
        %v2121 = vpack.c.b16 %v2118, %v2117
        %v2122 = vpack.c.b16 %v2120, %v2119
        %v2126 = vsel %vm1225, %v2100, 0
        %v2129 = vsel %vm1225, %v2101, 0
        %v2132 = vsel %vm1225, %v2102, 0
        %2134 = vmatpush.bf16.msra.mxu0 0
        %2135 = vmatpush.bf16.msra.mxu0 0
        %2136 = vmatpush.bf16.msra.mxu0 0
        %2137 = vmatpush.bf16.msra.mxu0 0
        %2138 = vmatpush.bf16.msra.mxu0 0
        %2139 = vmatpush.bf16.msra.mxu0 0
        %2140 = vmatpush.bf16.msra.mxu0 %v2122
        %2141 = vmatpush.bf16.msra.mxu0 %v2121
        %2142 = vmatmul.bf16.gmra.mxu0 %v2126
        %v2143 = vpop.f32.mrf.mxu0
        %v2144 = vadd.f32 %v2111, %v2143
        %v2145 = vpop.f32.mrf.mxu0
        %v2146 = vadd.f32 %v2111, %v2145
        %2147 = vmatmul.bf16.gmra.mxu0 %v2129
        %v2148 = vpop.f32.mrf.mxu0
        %v2149 = vadd.f32 %v2111, %v2148
        %v2150 = vpop.f32.mrf.mxu0
        %v2151 = vadd.f32 %v2111, %v2150
        %2152 = vmatmul.bf16.gmra.mxu0 %v2132
        %v2153 = vpop.f32.mrf.mxu0
        %v2154 = vadd.f32 %v2111, %v2153
        %v2155 = vpop.f32.mrf.mxu0
        %2156 = vdwg.mxu0
        %v2157 = vtanh.pop %v2144
        %v2158 = vtanh.pop %v2146
        %v2159 = vtanh.pop %v2149
        %v2160 = vtanh.pop %v2151
        %v2161 = vtanh.pop %v2154
        %v2162 = vpack.c.bf16 %v2158, %v2157
        %v2163 = vpack.c.bf16 %v2160, %v2159
        %v2164 = vpack.c.bf16 %v2161, %v2161
        %s2165 = scalar_lea.vmem %s13, 80
        %v2166 = vld [vmem:[%s2165] sm:$0xf]
        %v2167 = vld [vmem:[%s2165 + $0x4] sm:$0xf]
        %v2168 = vld [vmem:[%s2165 + $0x8] sm:$0xf]
        %v2169 = vld [vmem:[%s2165 + $0xc] sm:$0xf]
        %s2170 = scalar_lea.vmem [#allocation21], 5
        %v2171 = vld [vmem:[%s2170] sm:$0x1]
        %v2173 = vperm.slane %v2171, 0
        %v2179 = vunpack.c.l.b16 %v2166
        %v2180 = vunpack.c.l.b16 %v2167
        %v2181 = vunpack.c.l.b16 %v2168
        %v2182 = vunpack.c.l.b16 %v2169
        %v2183 = vpack.c.b16 %v2180, %v2179
        %v2184 = vpack.c.b16 %v2182, %v2181
        %v2188 = vsel %vm1225, %v2162, 0
        %v2191 = vsel %vm1225, %v2163, 0
        %v2194 = vsel %vm1225, %v2164, 0
        %2196 = vmatpush.bf16.msra.mxu0 0
        %2197 = vmatpush.bf16.msra.mxu0 0
        %2198 = vmatpush.bf16.msra.mxu0 0
        %2199 = vmatpush.bf16.msra.mxu0 0
        %2200 = vmatpush.bf16.msra.mxu0 0
        %2201 = vmatpush.bf16.msra.mxu0 0
        %2202 = vmatpush.bf16.msra.mxu0 %v2184
        %2203 = vmatpush.bf16.msra.mxu0 %v2183
        %2204 = vmatmul.bf16.gmra.mxu0 %v2188
        %v2205 = vpop.f32.mrf.mxu0
        %v2206 = vadd.f32 %v2173, %v2205
        %v2207 = vpop.f32.mrf.mxu0
        %v2208 = vadd.f32 %v2173, %v2207
        %2209 = vmatmul.bf16.gmra.mxu0 %v2191
        %v2210 = vpop.f32.mrf.mxu0
        %v2211 = vadd.f32 %v2173, %v2210
        %v2212 = vpop.f32.mrf.mxu0
        %v2213 = vadd.f32 %v2173, %v2212
        %2214 = vmatmul.bf16.gmra.mxu0 %v2194
        %v2215 = vpop.f32.mrf.mxu0
        %v2216 = vadd.f32 %v2173, %v2215
        %v2217 = vpop.f32.mrf.mxu0
        %2218 = vdwg.mxu0
        %v2219 = vadd.f32 %v2206, %v2095
        %v2220 = vadd.f32 %v2208, %v2096
        %v2221 = vadd.f32 %v2211, %v2097
        %v2222 = vadd.f32 %v2213, %v2098
        %v2223 = vadd.f32 %v2216, %v2099
        %v2224 = vtanh.pop %v2219
        %v2225 = vtanh.pop %v2220
        %v2226 = vtanh.pop %v2221
        %v2227 = vtanh.pop %v2222
        %v2228 = vtanh.pop %v2223
        %v2229 = vpack.c.bf16 %v2225, %v2224
        %v2230 = vpack.c.bf16 %v2227, %v2226
        %v2231 = vpack.c.bf16 %v2228, %v2228
        %s2232 = scalar_lea.vmem [#allocation18], 96
        %v2233 = vld [vmem:[%s2232] sm:$0xf]
        %v2234 = vld [vmem:[%s2232 + $0x4] sm:$0xf]
        %v2235 = vld [vmem:[%s2232 + $0x8] sm:$0xf]
        %v2236 = vld [vmem:[%s2232 + $0xc] sm:$0xf]
        %s2237 = scalar_lea.vmem [#allocation19], 6
        %v2238 = vld [vmem:[%s2237] sm:$0x1]
        %v2240 = vperm.slane %v2238, 0
        %v2246 = vunpack.c.l.b16 %v2233
        %v2247 = vunpack.c.l.b16 %v2234
        %v2248 = vunpack.c.l.b16 %v2235
        %v2249 = vunpack.c.l.b16 %v2236
        %v2250 = vpack.c.b16 %v2247, %v2246
        %v2251 = vpack.c.b16 %v2249, %v2248
        %v2255 = vsel %vm1225, %v2229, 0
        %v2258 = vsel %vm1225, %v2230, 0
        %v2261 = vsel %vm1225, %v2231, 0
        %2263 = vmatpush.bf16.msra.mxu0 0
        %2264 = vmatpush.bf16.msra.mxu0 0
        %2265 = vmatpush.bf16.msra.mxu0 0
        %2266 = vmatpush.bf16.msra.mxu0 0
        %2267 = vmatpush.bf16.msra.mxu0 0
        %2268 = vmatpush.bf16.msra.mxu0 0
        %2269 = vmatpush.bf16.msra.mxu0 %v2251
        %2270 = vmatpush.bf16.msra.mxu0 %v2250
        %2271 = vmatmul.bf16.gmra.mxu0 %v2255
        %v2272 = vpop.f32.mrf.mxu0
        %v2273 = vadd.f32 %v2240, %v2272
        %v2274 = vpop.f32.mrf.mxu0
        %v2275 = vadd.f32 %v2240, %v2274
        %2276 = vmatmul.bf16.gmra.mxu0 %v2258
        %v2277 = vpop.f32.mrf.mxu0
        %v2278 = vadd.f32 %v2240, %v2277
        %v2279 = vpop.f32.mrf.mxu0
        %v2280 = vadd.f32 %v2240, %v2279
        %2281 = vmatmul.bf16.gmra.mxu0 %v2261
        %v2282 = vpop.f32.mrf.mxu0
        %v2283 = vadd.f32 %v2240, %v2282
        %v2284 = vpop.f32.mrf.mxu0
        %2285 = vdwg.mxu0
        %v2286 = vtanh.pop %v2273
        %v2287 = vtanh.pop %v2275
        %v2288 = vtanh.pop %v2278
        %v2289 = vtanh.pop %v2280
        %v2290 = vtanh.pop %v2283
        %v2291 = vpack.c.bf16 %v2287, %v2286
        %v2292 = vpack.c.bf16 %v2289, %v2288
        %v2293 = vpack.c.bf16 %v2290, %v2290
        %s2294 = scalar_lea.vmem %s13, 96
        %v2295 = vld [vmem:[%s2294] sm:$0xf]
        %v2296 = vld [vmem:[%s2294 + $0x4] sm:$0xf]
        %v2297 = vld [vmem:[%s2294 + $0x8] sm:$0xf]
        %v2298 = vld [vmem:[%s2294 + $0xc] sm:$0xf]
        %s2299 = scalar_lea.vmem [#allocation21], 6
        %v2300 = vld [vmem:[%s2299] sm:$0x1]
        %v2302 = vperm.slane %v2300, 0
        %v2308 = vunpack.c.l.b16 %v2295
        %v2309 = vunpack.c.l.b16 %v2296
        %v2310 = vunpack.c.l.b16 %v2297
        %v2311 = vunpack.c.l.b16 %v2298
        %v2312 = vpack.c.b16 %v2309, %v2308
        %v2313 = vpack.c.b16 %v2311, %v2310
        %v2317 = vsel %vm1225, %v2291, 0
        %v2320 = vsel %vm1225, %v2292, 0
        %v2323 = vsel %vm1225, %v2293, 0
        %2325 = vmatpush.bf16.msra.mxu0 0
        %2326 = vmatpush.bf16.msra.mxu0 0
        %2327 = vmatpush.bf16.msra.mxu0 0
        %2328 = vmatpush.bf16.msra.mxu0 0
        %2329 = vmatpush.bf16.msra.mxu0 0
        %2330 = vmatpush.bf16.msra.mxu0 0
        %2331 = vmatpush.bf16.msra.mxu0 %v2313
        %2332 = vmatpush.bf16.msra.mxu0 %v2312
        %2333 = vmatmul.bf16.gmra.mxu0 %v2317
        %v2334 = vpop.f32.mrf.mxu0
        %v2335 = vadd.f32 %v2302, %v2334
        %v2336 = vpop.f32.mrf.mxu0
        %v2337 = vadd.f32 %v2302, %v2336
        %2338 = vmatmul.bf16.gmra.mxu0 %v2320
        %v2339 = vpop.f32.mrf.mxu0
        %v2340 = vadd.f32 %v2302, %v2339
        %v2341 = vpop.f32.mrf.mxu0
        %v2342 = vadd.f32 %v2302, %v2341
        %2343 = vmatmul.bf16.gmra.mxu0 %v2323
        %v2344 = vpop.f32.mrf.mxu0
        %v2345 = vadd.f32 %v2302, %v2344
        %v2346 = vpop.f32.mrf.mxu0
        %2347 = vdwg.mxu0
        %v2348 = vadd.f32 %v2335, %v2224
        %v2349 = vadd.f32 %v2337, %v2225
        %v2350 = vadd.f32 %v2340, %v2226
        %v2351 = vadd.f32 %v2342, %v2227
        %v2352 = vadd.f32 %v2345, %v2228
        %v2353 = vtanh.pop %v2348
        %v2354 = vtanh.pop %v2349
        %v2355 = vtanh.pop %v2350
        %v2356 = vtanh.pop %v2351
        %v2357 = vtanh.pop %v2352
        %v2358 = vpack.c.bf16 %v2354, %v2353
        %v2359 = vpack.c.bf16 %v2356, %v2355
        %v2360 = vpack.c.bf16 %v2357, %v2357
        %s2361 = scalar_lea.vmem [#allocation18], 112
        %v2362 = vld [vmem:[%s2361] sm:$0xf]
        %v2363 = vld [vmem:[%s2361 + $0x4] sm:$0xf]
        %v2364 = vld [vmem:[%s2361 + $0x8] sm:$0xf]
        %v2365 = vld [vmem:[%s2361 + $0xc] sm:$0xf]
        %s2366 = scalar_lea.vmem [#allocation19], 7
        %v2367 = vld [vmem:[%s2366] sm:$0x1]
        %v2369 = vperm.slane %v2367, 0
        %v2375 = vunpack.c.l.b16 %v2362
        %v2376 = vunpack.c.l.b16 %v2363
        %v2377 = vunpack.c.l.b16 %v2364
        %v2378 = vunpack.c.l.b16 %v2365
        %v2379 = vpack.c.b16 %v2376, %v2375
        %v2380 = vpack.c.b16 %v2378, %v2377
        %v2384 = vsel %vm1225, %v2358, 0
        %v2387 = vsel %vm1225, %v2359, 0
        %v2390 = vsel %vm1225, %v2360, 0
        %2392 = vmatpush.bf16.msra.mxu0 0
        %2393 = vmatpush.bf16.msra.mxu0 0
        %2394 = vmatpush.bf16.msra.mxu0 0
        %2395 = vmatpush.bf16.msra.mxu0 0
        %2396 = vmatpush.bf16.msra.mxu0 0
        %2397 = vmatpush.bf16.msra.mxu0 0
        %2398 = vmatpush.bf16.msra.mxu0 %v2380
        %2399 = vmatpush.bf16.msra.mxu0 %v2379
        %2400 = vmatmul.bf16.gmra.mxu0 %v2384
        %v2401 = vpop.f32.mrf.mxu0
        %v2402 = vadd.f32 %v2369, %v2401
        %v2403 = vpop.f32.mrf.mxu0
        %v2404 = vadd.f32 %v2369, %v2403
        %2405 = vmatmul.bf16.gmra.mxu0 %v2387
        %v2406 = vpop.f32.mrf.mxu0
        %v2407 = vadd.f32 %v2369, %v2406
        %v2408 = vpop.f32.mrf.mxu0
        %v2409 = vadd.f32 %v2369, %v2408
        %2410 = vmatmul.bf16.gmra.mxu0 %v2390
        %v2411 = vpop.f32.mrf.mxu0
        %v2412 = vadd.f32 %v2369, %v2411
        %v2413 = vpop.f32.mrf.mxu0
        %2414 = vdwg.mxu0
        %v2415 = vtanh.pop %v2402
        %v2416 = vtanh.pop %v2404
        %v2417 = vtanh.pop %v2407
        %v2418 = vtanh.pop %v2409
        %v2419 = vtanh.pop %v2412
        %v2420 = vpack.c.bf16 %v2416, %v2415
        %v2421 = vpack.c.bf16 %v2418, %v2417
        %v2422 = vpack.c.bf16 %v2419, %v2419
        %s2423 = scalar_lea.vmem %s13, 112
        %v2424 = vld [vmem:[%s2423] sm:$0xf]
        %v2425 = vld [vmem:[%s2423 + $0x4] sm:$0xf]
        %v2426 = vld [vmem:[%s2423 + $0x8] sm:$0xf]
        %v2427 = vld [vmem:[%s2423 + $0xc] sm:$0xf]
        %s2428 = scalar_lea.vmem [#allocation21], 7
        %v2429 = vld [vmem:[%s2428] sm:$0x1]
        %v2431 = vperm.slane %v2429, 0
        %v2437 = vunpack.c.l.b16 %v2424
        %v2438 = vunpack.c.l.b16 %v2425
        %v2439 = vunpack.c.l.b16 %v2426
        %v2440 = vunpack.c.l.b16 %v2427
        %v2441 = vpack.c.b16 %v2438, %v2437
        %v2442 = vpack.c.b16 %v2440, %v2439
        %v2446 = vsel %vm1225, %v2420, 0
        %v2449 = vsel %vm1225, %v2421, 0
        %v2452 = vsel %vm1225, %v2422, 0
        %2454 = vmatpush.bf16.msra.mxu0 0
        %2455 = vmatpush.bf16.msra.mxu0 0
        %2456 = vmatpush.bf16.msra.mxu0 0
        %2457 = vmatpush.bf16.msra.mxu0 0
        %2458 = vmatpush.bf16.msra.mxu0 0
        %2459 = vmatpush.bf16.msra.mxu0 0
        %2460 = vmatpush.bf16.msra.mxu0 %v2442
        %2461 = vmatpush.bf16.msra.mxu0 %v2441
        %2462 = vmatmul.bf16.gmra.mxu0 %v2446
        %v2463 = vpop.f32.mrf.mxu0
        %v2464 = vadd.f32 %v2431, %v2463
        %v2465 = vpop.f32.mrf.mxu0
        %v2466 = vadd.f32 %v2431, %v2465
        %2467 = vmatmul.bf16.gmra.mxu0 %v2449
        %v2468 = vpop.f32.mrf.mxu0
        %v2469 = vadd.f32 %v2431, %v2468
        %v2470 = vpop.f32.mrf.mxu0
        %v2471 = vadd.f32 %v2431, %v2470
        %2472 = vmatmul.bf16.gmra.mxu0 %v2452
        %v2473 = vpop.f32.mrf.mxu0
        %v2474 = vadd.f32 %v2431, %v2473
        %v2475 = vpop.f32.mrf.mxu0
        %2476 = vdwg.mxu0
        %v2477 = vadd.f32 %v2464, %v2353
        %v2478 = vadd.f32 %v2466, %v2354
        %v2479 = vadd.f32 %v2469, %v2355
        %v2480 = vadd.f32 %v2471, %v2356
        %v2481 = vadd.f32 %v2474, %v2357
        %v2482 = vtanh.pop %v2477
        %v2483 = vtanh.pop %v2478
        %v2484 = vtanh.pop %v2479
        %v2485 = vtanh.pop %v2480
        %v2486 = vtanh.pop %v2481
        %v2487 = vpack.c.bf16 %v2483, %v2482
        %v2488 = vpack.c.bf16 %v2485, %v2484
        %v2489 = vpack.c.bf16 %v2486, %v2486
        %v2490 = vld [vmem:[#allocation22] sm:$0xf]
        %v2491 = vld [vmem:[#allocation22 + $0x4] sm:$0xf]
        %v2492 = vld [vmem:[#allocation22 + $0x8] sm:$0xf]
        %v2493 = vld [vmem:[#allocation22 + $0xc] sm:$0xf]
        %v2498 = vunpack.c.l.b16 %v2490
        %v2499 = vunpack.c.l.b16 %v2491
        %v2500 = vunpack.c.l.b16 %v2492
        %v2501 = vunpack.c.l.b16 %v2493
        %v2502 = vpack.c.b16 %v2499, %v2498
        %v2503 = vpack.c.b16 %v2501, %v2500
        %v2507 = vsel %vm1225, %v2487, 0
        %v2510 = vsel %vm1225, %v2488, 0
        %v2513 = vsel %vm1225, %v2489, 0
        %2515 = vmatpush.bf16.msra.mxu0 0
        %2516 = vmatpush.bf16.msra.mxu0 0
        %2517 = vmatpush.bf16.msra.mxu0 0
        %2518 = vmatpush.bf16.msra.mxu0 0
        %2519 = vmatpush.bf16.msra.mxu0 0
        %2520 = vmatpush.bf16.msra.mxu0 0
        %2521 = vmatpush.bf16.msra.mxu0 %v2503
        %2522 = vmatpush.bf16.msra.mxu0 %v2502
        %2523 = vmatmul.bf16.gmra.mxu0 %v2507
        %v2524 = vpop.f32.mrf.mxu0
        %v2525 = vadd.f32 0.0, %v2524
        %v2526 = vpop.f32.mrf.mxu0
        %v2527 = vadd.f32 0.0, %v2526
        %2528 = vmatmul.bf16.gmra.mxu0 %v2510
        %v2529 = vpop.f32.mrf.mxu0
        %v2530 = vadd.f32 0.0, %v2529
        %v2531 = vpop.f32.mrf.mxu0
        %v2532 = vadd.f32 0.0, %v2531
        %2533 = vmatmul.bf16.gmra.mxu0 %v2513
        %v2534 = vpop.f32.mrf.mxu0
        %v2535 = vadd.f32 0.0, %v2534
        %v2536 = vpop.f32.mrf.mxu0
        %2537 = vdwg.mxu0
        %v2538 = vpack.c.bf16 %v2527, %v2525
        %v2539 = vpack.c.bf16 %v2532, %v2530
        %v2540 = vpack.c.bf16 %v2535, %v2535
        %v2541 = vld [vmem:[#allocation24] sm:$0xf]
        %v2542 = vld [vmem:[#allocation24 + $0x4] sm:$0xf]
        %v2543 = vld [vmem:[#allocation24 + $0x8] sm:$0xf]
        %v2544 = vld [vmem:[#allocation24 + $0xc] sm:$0xf]
        %v2545 = vld [vmem:[#allocation24 + $0x10] sm:$0xf]
        %v2546 = vld [vmem:[#allocation24 + $0x14] sm:$0xf]
        %v2547 = vld [vmem:[#allocation24 + $0x18] sm:$0xf]
        %v2548 = vld [vmem:[#allocation24 + $0x1c] sm:$0xf]
        %v2549 = vld [vmem:[#allocation25] sm:$0xf]
        %v2550 = vld [vmem:[#allocation25 + $0x4] sm:$0xf]
        %v2551 = vld [vmem:[#allocation25 + $0x8] sm:$0xf]
        %v2552 = vld [vmem:[#allocation25 + $0xc] sm:$0xf]
        %v2553 = vld [vmem:[#allocation25 + $0x10] sm:$0xf]
        %v2554 = vld [vmem:[#allocation25 + $0x14] sm:$0xf]
        %v2555 = vld [vmem:[#allocation25 + $0x18] sm:$0xf]
        %v2556 = vld [vmem:[#allocation25 + $0x1c] sm:$0xf]
        %v2565 = vunpack.c.l.b16 %v2549
        %v2566 = vunpack.c.l.b16 %v2550
        %v2567 = vunpack.c.l.b16 %v2551
        %v2568 = vunpack.c.l.b16 %v2552
        %v2569 = vunpack.c.l.b16 %v2553
        %v2570 = vunpack.c.l.b16 %v2554
        %v2571 = vunpack.c.l.b16 %v2555
        %v2572 = vunpack.c.l.b16 %v2556
        %v2573 = vpack.c.b16 %v2566, %v2565
        %v2574 = vpack.c.b16 %v2568, %v2567
        %v2575 = vpack.c.b16 %v2570, %v2569
        %v2576 = vpack.c.b16 %v2572, %v2571
        %2580 = vrot.lane.b32.xlu0 %v2538, 127
        %v2581 = vpop.permute.xlu0 %2580
        %2582 = vrot.lane.b32.xlu0 %v2539, 127
        %v2583 = vpop.permute.xlu0 %2582
        %2584 = vrot.lane.b32.xlu0 %v2540, 127
        %v2585 = vpop.permute.xlu0 %2584
        %vm2588 = vcmask 269312
        %v2590 = vsel %vm2588, %v2573, 0
        %v2593 = vsel %vm2588, %v2574, 0
        %v2596 = vsel %vm2588, %v2575, 0
        %v2599 = vsel %vm2588, %v2576, 0
        %vm2601 = vcmask 1040384
        %v2602 = vsel 0, 4294967295, 65535
        %v2603 = vsel %vm2601, %v2602, 0
        %v2605 = vand.u32 %v2585, %v2603
        %2607 = vmatpush.bf16.msra.mxu0 0
        %2608 = vmatpush.bf16.msra.mxu0 0
        %2609 = vmatpush.bf16.msra.mxu0 0
        %2610 = vmatpush.bf16.msra.mxu0 0
        %2611 = vmatpush.bf16.msra.mxu0 0
        %2612 = vmatpush.bf16.msra.mxu0 %v2605
        %2613 = vmatpush.bf16.msra.mxu0 %v2583
        %2614 = vmatpush.bf16.msra.mxu0 %v2581
        %2615 = vmatmul.bf16.gmra.mxu0 %v2590
        %v2616 = vpop.f32.mrf.mxu0
        %v2617 = vadd.f32 0.0, %v2616
        %v2618 = vpop.f32.mrf.mxu0
        %v2619 = vadd.f32 0.0, %v2618
        %2620 = vmatmul.bf16.gmra.mxu0 %v2593
        %v2621 = vpop.f32.mrf.mxu0
        %v2622 = vadd.f32 0.0, %v2621
        %v2623 = vpop.f32.mrf.mxu0
        %v2624 = vadd.f32 0.0, %v2623
        %2625 = vmatmul.bf16.gmra.mxu0 %v2596
        %v2626 = vpop.f32.mrf.mxu0
        %v2627 = vadd.f32 0.0, %v2626
        %v2628 = vpop.f32.mrf.mxu0
        %v2629 = vadd.f32 0.0, %v2628
        %2630 = vmatmul.bf16.gmra.mxu0 %v2599
        %v2631 = vpop.f32.mrf.mxu0
        %v2632 = vadd.f32 0.0, %v2631
        %v2633 = vpop.f32.mrf.mxu0
        %v2634 = vadd.f32 0.0, %v2633
        %2635 = vdwg.mxu0
        %v2644 = vunpack.c.l.b16 %v2541
        %v2645 = vunpack.c.l.b16 %v2542
        %v2646 = vunpack.c.l.b16 %v2543
        %v2647 = vunpack.c.l.b16 %v2544
        %v2648 = vunpack.c.l.b16 %v2545
        %v2649 = vunpack.c.l.b16 %v2546
        %v2650 = vunpack.c.l.b16 %v2547
        %v2651 = vunpack.c.l.b16 %v2548
        %v2652 = vpack.c.b16 %v2645, %v2644
        %v2653 = vpack.c.b16 %v2647, %v2646
        %v2654 = vpack.c.b16 %v2649, %v2648
        %v2655 = vpack.c.b16 %v2651, %v2650
        %v2657 = vsel %vm2588, %v2652, 0
        %v2660 = vsel %vm2588, %v2653, 0
        %v2663 = vsel %vm2588, %v2654, 0
        %v2666 = vsel %vm2588, %v2655, 0
        %v2669 = vand.u32 %v2540, %v2603
        %2671 = vmatpush.bf16.msra.mxu0 0
        %2672 = vmatpush.bf16.msra.mxu0 0
        %2673 = vmatpush.bf16.msra.mxu0 0
        %2674 = vmatpush.bf16.msra.mxu0 0
        %2675 = vmatpush.bf16.msra.mxu0 0
        %2676 = vmatpush.bf16.msra.mxu0 %v2669
        %2677 = vmatpush.bf16.msra.mxu0 %v2539
        %2678 = vmatpush.bf16.msra.mxu0 %v2538
        %2679 = vmatmul.bf16.gmra.mxu0 %v2657
        %v2680 = vpop.f32.mrf.mxu0
        %v2681 = vadd.f32 %v2617, %v2680
        %v2682 = vpop.f32.mrf.mxu0
        %v2683 = vadd.f32 %v2619, %v2682
        %2684 = vmatmul.bf16.gmra.mxu0 %v2660
        %v2685 = vpop.f32.mrf.mxu0
        %v2686 = vadd.f32 %v2622, %v2685
        %v2687 = vpop.f32.mrf.mxu0
        %v2688 = vadd.f32 %v2624, %v2687
        %2689 = vmatmul.bf16.gmra.mxu0 %v2663
        %v2690 = vpop.f32.mrf.mxu0
        %v2691 = vadd.f32 %v2627, %v2690
        %v2692 = vpop.f32.mrf.mxu0
        %v2693 = vadd.f32 %v2629, %v2692
        %2694 = vmatmul.bf16.gmra.mxu0 %v2666
        %v2695 = vpop.f32.mrf.mxu0
        %v2696 = vadd.f32 %v2632, %v2695
        %v2697 = vpop.f32.mrf.mxu0
        %v2698 = vadd.f32 %v2634, %v2697
        %2699 = vdwg.mxu0
        %v2700 = vld [vmem:[#allocation27] sm:$0x1]
        %2702 = vset.pattern.permute.xlu0 0
        %2703 = vperm.xlu0 %2702, %v2681
        %v2704 = vpop.permute.xlu0 %2703
        %2707 = vset.pattern.permute.xlu0 0
        %2708 = vperm.xlu0 %2707, %v2683
        %v2709 = vpop.permute.xlu0 %2708
        %2712 = vset.pattern.permute.xlu0 0
        %2713 = vperm.xlu0 %2712, %v2686
        %v2714 = vpop.permute.xlu0 %2713
        %2717 = vset.pattern.permute.xlu0 0
        %2718 = vperm.xlu0 %2717, %v2688
        %v2719 = vpop.permute.xlu0 %2718
        %2722 = vset.pattern.permute.xlu0 0
        %2723 = vperm.xlu0 %2722, %v2691
        %v2724 = vpop.permute.xlu0 %2723
        %2727 = vset.pattern.permute.xlu0 0
        %2728 = vperm.xlu0 %2727, %v2693
        %v2729 = vpop.permute.xlu0 %2728
        %2732 = vset.pattern.permute.xlu0 0
        %2733 = vperm.xlu0 %2732, %v2696
        %v2734 = vpop.permute.xlu0 %2733
        %2737 = vset.pattern.permute.xlu0 0
        %2738 = vperm.xlu0 %2737, %v2698
        %v2739 = vpop.permute.xlu0 %2738
        %v2742 = vperm.slane %v2700, 0
        %v2744 = vmul.f32 %v2704, %v2742
        %v2745 = vmul.f32 %v2709, %v2742
        %v2746 = vmul.f32 %v2714, %v2742
        %v2747 = vmul.f32 %v2719, %v2742
        %v2748 = vmul.f32 %v2724, %v2742
        %v2749 = vmul.f32 %v2729, %v2742
        %v2750 = vmul.f32 %v2734, %v2742
        %v2751 = vmul.f32 %v2739, %v2742
        %v2752 = vld [vmem:[%s19] sm:$0x1]
        %v2754 = vperm.slane %v2752, 0
        %v2756 = vadd.f32 %v2744, %v2754
        %v2757 = vadd.f32 %v2745, %v2754
        %v2758 = vadd.f32 %v2746, %v2754
        %v2759 = vadd.f32 %v2747, %v2754
        %v2760 = vadd.f32 %v2748, %v2754
        %v2761 = vadd.f32 %v2749, %v2754
        %v2762 = vadd.f32 %v2750, %v2754
        %v2763 = vadd.f32 %v2751, %v2754
        %v2764 = vtanh.pop %v2756
        %v2765 = vtanh.pop %v2757
        %v2766 = vtanh.pop %v2758
        %v2767 = vtanh.pop %v2759
        %v2768 = vtanh.pop %v2760
        %v2769 = vtanh.pop %v2761
        %v2770 = vtanh.pop %v2762
        %v2771 = vtanh.pop %v2763
        %v2772 = vpack.c.bf16 %v2765, %v2764
        %v2773 = vpack.c.bf16 %v2767, %v2766
        %v2774 = vpack.c.bf16 %v2769, %v2768
        %v2775 = vpack.c.bf16 %v2771, %v2770
        %v2776 = vld [vmem:[#allocation28] sm:$0xff]
        %v2777 = vld [vmem:[#allocation28 + $0x8] sm:$0xff]
        %v2778 = vld [vmem:[#allocation28 + $0x10] sm:$0xff]
        %v2779 = vld [vmem:[#allocation28 + $0x18] sm:$0xff]
        %v2780 = vld [vmem:[#allocation30] sm:$0x3]
        %v2782 = vperm.slane %v2780, 0
        %v2783 = vperm.slane %v2780, 1
        %v2790 = vunpack.c.l.b16 %v2776
        %v2791 = vunpack.c.h.b16 %v2776
        %v2792 = vunpack.c.l.b16 %v2777
        %v2793 = vunpack.c.h.b16 %v2777
        %v2794 = vunpack.c.l.b16 %v2778
        %v2795 = vunpack.c.h.b16 %v2778
        %v2796 = vunpack.c.l.b16 %v2779
        %v2797 = vunpack.c.h.b16 %v2779
        %v2798 = vpack.c.b16 %v2792, %v2790
        %v2799 = vpack.c.b16 %v2793, %v2791
        %v2800 = vpack.c.b16 %v2796, %v2794
        %v2801 = vpack.c.b16 %v2797, %v2795
        %v2807 = vsel %vm1225, %v2772, 0
        %v2810 = vsel %vm1225, %v2773, 0
        %v2813 = vsel %vm1225, %v2774, 0
        %v2816 = vsel %vm1225, %v2775, 0
        %2818 = vmatpush.bf16.msra.mxu0 0
        %2819 = vmatpush.bf16.msra.mxu0 0
        %2820 = vmatpush.bf16.msra.mxu0 0
        %2821 = vmatpush.bf16.msra.mxu0 0
        %2822 = vmatpush.bf16.msra.mxu0 0
        %2823 = vmatpush.bf16.msra.mxu0 0
        %2824 = vmatpush.bf16.msra.mxu0 %v2800
        %2825 = vmatpush.bf16.msra.mxu0 %v2798
        %2826 = vmatmul.bf16.gmra.mxu0 %v2807
        %v2827 = vpop.f32.mrf.mxu0
        %v2828 = vadd.f32 %v2782, %v2827
        %v2829 = vpop.f32.mrf.mxu0
        %v2830 = vadd.f32 %v2782, %v2829
        %2831 = vmatmul.bf16.gmra.mxu0 %v2810
        %v2832 = vpop.f32.mrf.mxu0
        %v2833 = vadd.f32 %v2782, %v2832
        %v2834 = vpop.f32.mrf.mxu0
        %v2835 = vadd.f32 %v2782, %v2834
        %2836 = vmatmul.bf16.gmra.mxu0 %v2813
        %v2837 = vpop.f32.mrf.mxu0
        %v2838 = vadd.f32 %v2782, %v2837
        %v2839 = vpop.f32.mrf.mxu0
        %v2840 = vadd.f32 %v2782, %v2839
        %2841 = vmatmul.bf16.gmra.mxu0 %v2816
        %v2842 = vpop.f32.mrf.mxu0
        %v2843 = vadd.f32 %v2782, %v2842
        %v2844 = vpop.f32.mrf.mxu0
        %v2845 = vadd.f32 %v2782, %v2844
        %2846 = vdwg.mxu0
        %2847 = vmatpush.bf16.msra.mxu0 0
        %2848 = vmatpush.bf16.msra.mxu0 0
        %2849 = vmatpush.bf16.msra.mxu0 0
        %2850 = vmatpush.bf16.msra.mxu0 0
        %2851 = vmatpush.bf16.msra.mxu0 0
        %2852 = vmatpush.bf16.msra.mxu0 0
        %2853 = vmatpush.bf16.msra.mxu0 %v2801
        %2854 = vmatpush.bf16.msra.mxu0 %v2799
        %2855 = vmatmul.bf16.gmra.mxu0 %v2807
        %v2856 = vpop.f32.mrf.mxu0
        %v2857 = vadd.f32 %v2783, %v2856
        %v2858 = vpop.f32.mrf.mxu0
        %v2859 = vadd.f32 %v2783, %v2858
        %2860 = vmatmul.bf16.gmra.mxu0 %v2810
        %v2861 = vpop.f32.mrf.mxu0
        %v2862 = vadd.f32 %v2783, %v2861
        %v2863 = vpop.f32.mrf.mxu0
        %v2864 = vadd.f32 %v2783, %v2863
        %2865 = vmatmul.bf16.gmra.mxu0 %v2813
        %v2866 = vpop.f32.mrf.mxu0
        %v2867 = vadd.f32 %v2783, %v2866
        %v2868 = vpop.f32.mrf.mxu0
        %v2869 = vadd.f32 %v2783, %v2868
        %2870 = vmatmul.bf16.gmra.mxu0 %v2816
        %v2871 = vpop.f32.mrf.mxu0
        %v2872 = vadd.f32 %v2783, %v2871
        %v2873 = vpop.f32.mrf.mxu0
        %v2874 = vadd.f32 %v2783, %v2873
        %2875 = vdwg.mxu0
        %v2876 = vtanh.pop %v2828
        %v2877 = vtanh.pop %v2857
        %v2878 = vtanh.pop %v2830
        %v2879 = vtanh.pop %v2859
        %v2880 = vtanh.pop %v2833
        %v2881 = vtanh.pop %v2862
        %v2882 = vtanh.pop %v2835
        %v2883 = vtanh.pop %v2864
        %v2884 = vtanh.pop %v2838
        %v2885 = vtanh.pop %v2867
        %v2886 = vtanh.pop %v2840
        %v2887 = vtanh.pop %v2869
        %v2888 = vtanh.pop %v2843
        %v2889 = vtanh.pop %v2872
        %v2890 = vtanh.pop %v2845
        %v2891 = vtanh.pop %v2874
        %v2892 = vpack.c.bf16 %v2878, %v2876
        %v2893 = vpack.c.bf16 %v2879, %v2877
        %v2894 = vpack.c.bf16 %v2882, %v2880
        %v2895 = vpack.c.bf16 %v2883, %v2881
        %v2896 = vpack.c.bf16 %v2886, %v2884
        %v2897 = vpack.c.bf16 %v2887, %v2885
        %v2898 = vpack.c.bf16 %v2890, %v2888
        %v2899 = vpack.c.bf16 %v2891, %v2889
        %v2900 = vld [vmem:[%s22] sm:$0xf]
        %v2901 = vld [vmem:[%s22 + $0x4] sm:$0xf]
        %v2902 = vld [vmem:[%s22 + $0x8] sm:$0xf]
        %v2903 = vld [vmem:[%s22 + $0xc] sm:$0xf]
        %v2904 = vld [vmem:[%s22 + $0x10] sm:$0xf]
        %v2905 = vld [vmem:[%s22 + $0x14] sm:$0xf]
        %v2906 = vld [vmem:[%s22 + $0x18] sm:$0xf]
        %v2907 = vld [vmem:[%s22 + $0x1c] sm:$0xf]
        %v2908 = vld [vmem:[%s22 + $0x20] sm:$0xf]
        %v2909 = vld [vmem:[%s22 + $0x24] sm:$0xf]
        %v2910 = vld [vmem:[%s22 + $0x28] sm:$0xf]
        %v2911 = vld [vmem:[%s22 + $0x2c] sm:$0xf]
        %v2912 = vld [vmem:[%s22 + $0x30] sm:$0xf]
        %v2913 = vld [vmem:[%s22 + $0x34] sm:$0xf]
        %v2914 = vld [vmem:[%s22 + $0x38] sm:$0xf]
        %v2915 = vld [vmem:[%s22 + $0x3c] sm:$0xf]
        %v2916 = vld [vmem:[%s22 + $0x40] sm:$0xf]
        %v2917 = vld [vmem:[%s22 + $0x44] sm:$0xf]
        %v2918 = vld [vmem:[%s22 + $0x48] sm:$0xf]
        %v2919 = vld [vmem:[%s22 + $0x4c] sm:$0xf]
        %v2940 = vunpack.c.l.b16 %v2900
        %v2941 = vunpack.c.l.b16 %v2901
        %v2942 = vunpack.c.l.b16 %v2902
        %v2943 = vunpack.c.l.b16 %v2903
        %v2944 = vunpack.c.l.b16 %v2904
        %v2945 = vunpack.c.l.b16 %v2905
        %v2946 = vunpack.c.l.b16 %v2906
        %v2947 = vunpack.c.l.b16 %v2907
        %v2948 = vunpack.c.l.b16 %v2908
        %v2949 = vunpack.c.l.b16 %v2909
        %v2950 = vunpack.c.l.b16 %v2910
        %v2951 = vunpack.c.l.b16 %v2911
        %v2952 = vunpack.c.l.b16 %v2912
        %v2953 = vunpack.c.l.b16 %v2913
        %v2954 = vunpack.c.l.b16 %v2914
        %v2955 = vunpack.c.l.b16 %v2915
        %v2956 = vunpack.c.l.b16 %v2916
        %v2957 = vunpack.c.l.b16 %v2917
        %v2958 = vunpack.c.l.b16 %v2918
        %v2959 = vunpack.c.l.b16 %v2919
        %v2960 = vpack.c.b16 %v2941, %v2940
        %v2961 = vpack.c.b16 %v2943, %v2942
        %v2962 = vpack.c.b16 %v2945, %v2944
        %v2963 = vpack.c.b16 %v2947, %v2946
        %v2964 = vpack.c.b16 %v2949, %v2948
        %v2965 = vpack.c.b16 %v2951, %v2950
        %v2966 = vpack.c.b16 %v2953, %v2952
        %v2967 = vpack.c.b16 %v2955, %v2954
        %v2968 = vpack.c.b16 %v2957, %v2956
        %v2969 = vpack.c.b16 %v2959, %v2958
        %v2981 = vsel %vm1225, %v2893, 0
        %v2984 = vsel %vm1225, %v2895, 0
        %v2987 = vsel %vm1225, %v2897, 0
        %v2990 = vsel %vm1225, %v2899, 0
        %2992 = vmatpush.bf16.msra.mxu0 %v2967
        %2993 = vmatpush.bf16.msra.mxu0 %v2966
        %2994 = vmatpush.bf16.msra.mxu0 %v2965
        %2995 = vmatpush.bf16.msra.mxu0 %v2964
        %2996 = vmatpush.bf16.msra.mxu0 %v2963
        %2997 = vmatpush.bf16.msra.mxu0 %v2962
        %2998 = vmatpush.bf16.msra.mxu0 %v2961
        %2999 = vmatpush.bf16.msra.mxu0 %v2960
        %3000 = vmatmul.bf16.gmra.mxu0 %v2892
        %v3001 = vpop.f32.mrf.mxu0
        %v3002 = vadd.f32 0.0, %v3001
        %v3003 = vpop.f32.mrf.mxu0
        %v3004 = vadd.f32 0.0, %v3003
        %3005 = vmatmul.bf16.gmra.mxu0 %v2894
        %v3006 = vpop.f32.mrf.mxu0
        %v3007 = vadd.f32 0.0, %v3006
        %v3008 = vpop.f32.mrf.mxu0
        %v3009 = vadd.f32 0.0, %v3008
        %3010 = vmatmul.bf16.gmra.mxu0 %v2896
        %v3011 = vpop.f32.mrf.mxu0
        %v3012 = vadd.f32 0.0, %v3011
        %v3013 = vpop.f32.mrf.mxu0
        %v3014 = vadd.f32 0.0, %v3013
        %3015 = vmatmul.bf16.gmra.mxu0 %v2898
        %v3016 = vpop.f32.mrf.mxu0
        %v3017 = vadd.f32 0.0, %v3016
        %v3018 = vpop.f32.mrf.mxu0
        %v3019 = vadd.f32 0.0, %v3018
        %3020 = vdwg.mxu0
        %3021 = vmatpush.bf16.msra.mxu0 0
        %3022 = vmatpush.bf16.msra.mxu0 0
        %3023 = vmatpush.bf16.msra.mxu0 0
        %3024 = vmatpush.bf16.msra.mxu0 0
        %3025 = vmatpush.bf16.msra.mxu0 0
        %3026 = vmatpush.bf16.msra.mxu0 0
        %3027 = vmatpush.bf16.msra.mxu0 %v2969
        %3028 = vmatpush.bf16.msra.mxu0 %v2968
        %3029 = vmatmul.bf16.gmra.mxu0 %v2981
        %v3030 = vpop.f32.mrf.mxu0
        %v3031 = vadd.f32 %v3002, %v3030
        %v3032 = vpop.f32.mrf.mxu0
        %v3033 = vadd.f32 %v3004, %v3032
        %3034 = vmatmul.bf16.gmra.mxu0 %v2984
        %v3035 = vpop.f32.mrf.mxu0
        %v3036 = vadd.f32 %v3007, %v3035
        %v3037 = vpop.f32.mrf.mxu0
        %v3038 = vadd.f32 %v3009, %v3037
        %3039 = vmatmul.bf16.gmra.mxu0 %v2987
        %v3040 = vpop.f32.mrf.mxu0
        %v3041 = vadd.f32 %v3012, %v3040
        %v3042 = vpop.f32.mrf.mxu0
        %v3043 = vadd.f32 %v3014, %v3042
        %3044 = vmatmul.bf16.gmra.mxu0 %v2990
        %v3045 = vpop.f32.mrf.mxu0
        %v3046 = vadd.f32 %v3017, %v3045
        %v3047 = vpop.f32.mrf.mxu0
        %v3048 = vadd.f32 %v3019, %v3047
        %3049 = vdwg.mxu0
        %v3050 = vpack.c.bf16 %v3031, %v3031
        %v3051 = vpack.c.bf16 %v3033, %v3033
        %v3052 = vpack.c.bf16 %v3036, %v3036
        %v3053 = vpack.c.bf16 %v3038, %v3038
        %v3054 = vpack.c.bf16 %v3041, %v3041
        %v3055 = vpack.c.bf16 %v3043, %v3043
        %v3056 = vpack.c.bf16 %v3046, %v3046
        %v3057 = vpack.c.bf16 %v3048, %v3048
        %vm3058 = vcmask 35840
        %3059 = vst.msk [vmem:[%s1012] sm:$0xf] %vm3058, %v3050
        %3060 = vst.msk [vmem:[%s1012 + $0x4] sm:$0xf] %vm3058, %v3051
        %3061 = vst.msk [vmem:[%s1012 + $0x8] sm:$0xf] %vm3058, %v3052
        %3062 = vst.msk [vmem:[%s1012 + $0xc] sm:$0xf] %vm3058, %v3053
        %3063 = vst.msk [vmem:[%s1012 + $0x10] sm:$0xf] %vm3058, %v3054
        %3064 = vst.msk [vmem:[%s1012 + $0x14] sm:$0xf] %vm3058, %v3055
        %3065 = vst.msk [vmem:[%s1012 + $0x18] sm:$0xf] %vm3058, %v3056
        %3066 = vst.msk [vmem:[%s1012 + $0x1c] sm:$0xf] %vm3058, %v3057
        %s3067 = scalar_lea.vmem [#allocation27], 1
        %v3068 = vld [vmem:[%s3067] sm:$0x1]
        %v3070 = vperm.slane %v3068, 0
        %v3072 = vmul.f32 %v2704, %v3070
        %v3073 = vmul.f32 %v2709, %v3070
        %v3074 = vmul.f32 %v2714, %v3070
        %v3075 = vmul.f32 %v2719, %v3070
        %v3076 = vmul.f32 %v2724, %v3070
        %v3077 = vmul.f32 %v2729, %v3070
        %v3078 = vmul.f32 %v2734, %v3070
        %v3079 = vmul.f32 %v2739, %v3070
        %v3080 = vld [vmem:[%s19] sm:$0x1]
        %v3082 = vperm.slane %v3080, 0
        %v3084 = vadd.f32 %v3072, %v3082
        %v3085 = vadd.f32 %v3073, %v3082
        %v3086 = vadd.f32 %v3074, %v3082
        %v3087 = vadd.f32 %v3075, %v3082
        %v3088 = vadd.f32 %v3076, %v3082
        %v3089 = vadd.f32 %v3077, %v3082
        %v3090 = vadd.f32 %v3078, %v3082
        %v3091 = vadd.f32 %v3079, %v3082
        %v3092 = vtanh.pop %v3084
        %v3093 = vtanh.pop %v3085
        %v3094 = vtanh.pop %v3086
        %v3095 = vtanh.pop %v3087
        %v3096 = vtanh.pop %v3088
        %v3097 = vtanh.pop %v3089
        %v3098 = vtanh.pop %v3090
        %v3099 = vtanh.pop %v3091
        %v3100 = vpack.c.bf16 %v3093, %v3092
        %v3101 = vpack.c.bf16 %v3095, %v3094
        %v3102 = vpack.c.bf16 %v3097, %v3096
        %v3103 = vpack.c.bf16 %v3099, %v3098
        %v3104 = vld [vmem:[#allocation28] sm:$0xff]
        %v3105 = vld [vmem:[#allocation28 + $0x8] sm:$0xff]
        %v3106 = vld [vmem:[#allocation28 + $0x10] sm:$0xff]
        %v3107 = vld [vmem:[#allocation28 + $0x18] sm:$0xff]
        %v3108 = vld [vmem:[#allocation30] sm:$0x3]
        %v3110 = vperm.slane %v3108, 0
        %v3111 = vperm.slane %v3108, 1
        %v3118 = vunpack.c.l.b16 %v3104
        %v3119 = vunpack.c.h.b16 %v3104
        %v3120 = vunpack.c.l.b16 %v3105
        %v3121 = vunpack.c.h.b16 %v3105
        %v3122 = vunpack.c.l.b16 %v3106
        %v3123 = vunpack.c.h.b16 %v3106
        %v3124 = vunpack.c.l.b16 %v3107
        %v3125 = vunpack.c.h.b16 %v3107
        %v3126 = vpack.c.b16 %v3120, %v3118
        %v3127 = vpack.c.b16 %v3121, %v3119
        %v3128 = vpack.c.b16 %v3124, %v3122
        %v3129 = vpack.c.b16 %v3125, %v3123
        %v3135 = vsel %vm1225, %v3100, 0
        %v3138 = vsel %vm1225, %v3101, 0
        %v3141 = vsel %vm1225, %v3102, 0
        %v3144 = vsel %vm1225, %v3103, 0
        %3146 = vmatpush.bf16.msra.mxu0 0
        %3147 = vmatpush.bf16.msra.mxu0 0
        %3148 = vmatpush.bf16.msra.mxu0 0
        %3149 = vmatpush.bf16.msra.mxu0 0
        %3150 = vmatpush.bf16.msra.mxu0 0
        %3151 = vmatpush.bf16.msra.mxu0 0
        %3152 = vmatpush.bf16.msra.mxu0 %v3128
        %3153 = vmatpush.bf16.msra.mxu0 %v3126
        %3154 = vmatmul.bf16.gmra.mxu0 %v3135
        %v3155 = vpop.f32.mrf.mxu0
        %v3156 = vadd.f32 %v3110, %v3155
        %v3157 = vpop.f32.mrf.mxu0
        %v3158 = vadd.f32 %v3110, %v3157
        %3159 = vmatmul.bf16.gmra.mxu0 %v3138
        %v3160 = vpop.f32.mrf.mxu0
        %v3161 = vadd.f32 %v3110, %v3160
        %v3162 = vpop.f32.mrf.mxu0
        %v3163 = vadd.f32 %v3110, %v3162
        %3164 = vmatmul.bf16.gmra.mxu0 %v3141
        %v3165 = vpop.f32.mrf.mxu0
        %v3166 = vadd.f32 %v3110, %v3165
        %v3167 = vpop.f32.mrf.mxu0
        %v3168 = vadd.f32 %v3110, %v3167
        %3169 = vmatmul.bf16.gmra.mxu0 %v3144
        %v3170 = vpop.f32.mrf.mxu0
        %v3171 = vadd.f32 %v3110, %v3170
        %v3172 = vpop.f32.mrf.mxu0
        %v3173 = vadd.f32 %v3110, %v3172
        %3174 = vdwg.mxu0
        %3175 = vmatpush.bf16.msra.mxu0 0
        %3176 = vmatpush.bf16.msra.mxu0 0
        %3177 = vmatpush.bf16.msra.mxu0 0
        %3178 = vmatpush.bf16.msra.mxu0 0
        %3179 = vmatpush.bf16.msra.mxu0 0
        %3180 = vmatpush.bf16.msra.mxu0 0
        %3181 = vmatpush.bf16.msra.mxu0 %v3129
        %3182 = vmatpush.bf16.msra.mxu0 %v3127
        %3183 = vmatmul.bf16.gmra.mxu0 %v3135
        %v3184 = vpop.f32.mrf.mxu0
        %v3185 = vadd.f32 %v3111, %v3184
        %v3186 = vpop.f32.mrf.mxu0
        %v3187 = vadd.f32 %v3111, %v3186
        %3188 = vmatmul.bf16.gmra.mxu0 %v3138
        %v3189 = vpop.f32.mrf.mxu0
        %v3190 = vadd.f32 %v3111, %v3189
        %v3191 = vpop.f32.mrf.mxu0
        %v3192 = vadd.f32 %v3111, %v3191
        %3193 = vmatmul.bf16.gmra.mxu0 %v3141
        %v3194 = vpop.f32.mrf.mxu0
        %v3195 = vadd.f32 %v3111, %v3194
        %v3196 = vpop.f32.mrf.mxu0
        %v3197 = vadd.f32 %v3111, %v3196
        %3198 = vmatmul.bf16.gmra.mxu0 %v3144
        %v3199 = vpop.f32.mrf.mxu0
        %v3200 = vadd.f32 %v3111, %v3199
        %v3201 = vpop.f32.mrf.mxu0
        %v3202 = vadd.f32 %v3111, %v3201
        %3203 = vdwg.mxu0
        %v3204 = vtanh.pop %v3156
        %v3205 = vtanh.pop %v3185
        %v3206 = vtanh.pop %v3158
        %v3207 = vtanh.pop %v3187
        %v3208 = vtanh.pop %v3161
        %v3209 = vtanh.pop %v3190
        %v3210 = vtanh.pop %v3163
        %v3211 = vtanh.pop %v3192
        %v3212 = vtanh.pop %v3166
        %v3213 = vtanh.pop %v3195
        %v3214 = vtanh.pop %v3168
        %v3215 = vtanh.pop %v3197
        %v3216 = vtanh.pop %v3171
        %v3217 = vtanh.pop %v3200
        %v3218 = vtanh.pop %v3173
        %v3219 = vtanh.pop %v3202
        %v3220 = vpack.c.bf16 %v3206, %v3204
        %v3221 = vpack.c.bf16 %v3207, %v3205
        %v3222 = vpack.c.bf16 %v3210, %v3208
        %v3223 = vpack.c.bf16 %v3211, %v3209
        %v3224 = vpack.c.bf16 %v3214, %v3212
        %v3225 = vpack.c.bf16 %v3215, %v3213
        %v3226 = vpack.c.bf16 %v3218, %v3216
        %v3227 = vpack.c.bf16 %v3219, %v3217
        %v3228 = vld [vmem:[%s22] sm:$0xf]
        %v3229 = vld [vmem:[%s22 + $0x4] sm:$0xf]
        %v3230 = vld [vmem:[%s22 + $0x8] sm:$0xf]
        %v3231 = vld [vmem:[%s22 + $0xc] sm:$0xf]
        %v3232 = vld [vmem:[%s22 + $0x10] sm:$0xf]
        %v3233 = vld [vmem:[%s22 + $0x14] sm:$0xf]
        %v3234 = vld [vmem:[%s22 + $0x18] sm:$0xf]
        %v3235 = vld [vmem:[%s22 + $0x1c] sm:$0xf]
        %v3236 = vld [vmem:[%s22 + $0x20] sm:$0xf]
        %v3237 = vld [vmem:[%s22 + $0x24] sm:$0xf]
        %v3238 = vld [vmem:[%s22 + $0x28] sm:$0xf]
        %v3239 = vld [vmem:[%s22 + $0x2c] sm:$0xf]
        %v3240 = vld [vmem:[%s22 + $0x30] sm:$0xf]
        %v3241 = vld [vmem:[%s22 + $0x34] sm:$0xf]
        %v3242 = vld [vmem:[%s22 + $0x38] sm:$0xf]
        %v3243 = vld [vmem:[%s22 + $0x3c] sm:$0xf]
        %v3244 = vld [vmem:[%s22 + $0x40] sm:$0xf]
        %v3245 = vld [vmem:[%s22 + $0x44] sm:$0xf]
        %v3246 = vld [vmem:[%s22 + $0x48] sm:$0xf]
        %v3247 = vld [vmem:[%s22 + $0x4c] sm:$0xf]
        %v3268 = vunpack.c.l.b16 %v3228
        %v3269 = vunpack.c.l.b16 %v3229
        %v3270 = vunpack.c.l.b16 %v3230
        %v3271 = vunpack.c.l.b16 %v3231
        %v3272 = vunpack.c.l.b16 %v3232
        %v3273 = vunpack.c.l.b16 %v3233
        %v3274 = vunpack.c.l.b16 %v3234
        %v3275 = vunpack.c.l.b16 %v3235
        %v3276 = vunpack.c.l.b16 %v3236
        %v3277 = vunpack.c.l.b16 %v3237
        %v3278 = vunpack.c.l.b16 %v3238
        %v3279 = vunpack.c.l.b16 %v3239
        %v3280 = vunpack.c.l.b16 %v3240
        %v3281 = vunpack.c.l.b16 %v3241
        %v3282 = vunpack.c.l.b16 %v3242
        %v3283 = vunpack.c.l.b16 %v3243
        %v3284 = vunpack.c.l.b16 %v3244
        %v3285 = vunpack.c.l.b16 %v3245
        %v3286 = vunpack.c.l.b16 %v3246
        %v3287 = vunpack.c.l.b16 %v3247
        %v3288 = vpack.c.b16 %v3269, %v3268
        %v3289 = vpack.c.b16 %v3271, %v3270
        %v3290 = vpack.c.b16 %v3273, %v3272
        %v3291 = vpack.c.b16 %v3275, %v3274
        %v3292 = vpack.c.b16 %v3277, %v3276
        %v3293 = vpack.c.b16 %v3279, %v3278
        %v3294 = vpack.c.b16 %v3281, %v3280
        %v3295 = vpack.c.b16 %v3283, %v3282
        %v3296 = vpack.c.b16 %v3285, %v3284
        %v3297 = vpack.c.b16 %v3287, %v3286
        %v3309 = vsel %vm1225, %v3221, 0
        %v3312 = vsel %vm1225, %v3223, 0
        %v3315 = vsel %vm1225, %v3225, 0
        %v3318 = vsel %vm1225, %v3227, 0
        %3320 = vmatpush.bf16.msra.mxu0 %v3295
        %3321 = vmatpush.bf16.msra.mxu0 %v3294
        %3322 = vmatpush.bf16.msra.mxu0 %v3293
        %3323 = vmatpush.bf16.msra.mxu0 %v3292
        %3324 = vmatpush.bf16.msra.mxu0 %v3291
        %3325 = vmatpush.bf16.msra.mxu0 %v3290
        %3326 = vmatpush.bf16.msra.mxu0 %v3289
        %3327 = vmatpush.bf16.msra.mxu0 %v3288
        %3328 = vmatmul.bf16.gmra.mxu0 %v3220
        %v3329 = vpop.f32.mrf.mxu0
        %v3330 = vadd.f32 0.0, %v3329
        %v3331 = vpop.f32.mrf.mxu0
        %v3332 = vadd.f32 0.0, %v3331
        %3333 = vmatmul.bf16.gmra.mxu0 %v3222
        %v3334 = vpop.f32.mrf.mxu0
        %v3335 = vadd.f32 0.0, %v3334
        %v3336 = vpop.f32.mrf.mxu0
        %v3337 = vadd.f32 0.0, %v3336
        %3338 = vmatmul.bf16.gmra.mxu0 %v3224
        %v3339 = vpop.f32.mrf.mxu0
        %v3340 = vadd.f32 0.0, %v3339
        %v3341 = vpop.f32.mrf.mxu0
        %v3342 = vadd.f32 0.0, %v3341
        %3343 = vmatmul.bf16.gmra.mxu0 %v3226
        %v3344 = vpop.f32.mrf.mxu0
        %v3345 = vadd.f32 0.0, %v3344
        %v3346 = vpop.f32.mrf.mxu0
        %v3347 = vadd.f32 0.0, %v3346
        %3348 = vdwg.mxu0
        %3349 = vmatpush.bf16.msra.mxu0 0
        %3350 = vmatpush.bf16.msra.mxu0 0
        %3351 = vmatpush.bf16.msra.mxu0 0
        %3352 = vmatpush.bf16.msra.mxu0 0
        %3353 = vmatpush.bf16.msra.mxu0 0
        %3354 = vmatpush.bf16.msra.mxu0 0
        %3355 = vmatpush.bf16.msra.mxu0 %v3297
        %3356 = vmatpush.bf16.msra.mxu0 %v3296
        %3357 = vmatmul.bf16.gmra.mxu0 %v3309
        %v3358 = vpop.f32.mrf.mxu0
        %v3359 = vadd.f32 %v3330, %v3358
        %v3360 = vpop.f32.mrf.mxu0
        %v3361 = vadd.f32 %v3332, %v3360
        %3362 = vmatmul.bf16.gmra.mxu0 %v3312
        %v3363 = vpop.f32.mrf.mxu0
        %v3364 = vadd.f32 %v3335, %v3363
        %v3365 = vpop.f32.mrf.mxu0
        %v3366 = vadd.f32 %v3337, %v3365
        %3367 = vmatmul.bf16.gmra.mxu0 %v3315
        %v3368 = vpop.f32.mrf.mxu0
        %v3369 = vadd.f32 %v3340, %v3368
        %v3370 = vpop.f32.mrf.mxu0
        %v3371 = vadd.f32 %v3342, %v3370
        %3372 = vmatmul.bf16.gmra.mxu0 %v3318
        %v3373 = vpop.f32.mrf.mxu0
        %v3374 = vadd.f32 %v3345, %v3373
        %v3375 = vpop.f32.mrf.mxu0
        %v3376 = vadd.f32 %v3347, %v3375
        %3377 = vdwg.mxu0
        %v3378 = vpack.c.bf16 %v3359, %v3359
        %v3379 = vpack.c.bf16 %v3361, %v3361
        %v3380 = vpack.c.bf16 %v3364, %v3364
        %v3381 = vpack.c.bf16 %v3366, %v3366
        %v3382 = vpack.c.bf16 %v3369, %v3369
        %v3383 = vpack.c.bf16 %v3371, %v3371
        %v3384 = vpack.c.bf16 %v3374, %v3374
        %v3385 = vpack.c.bf16 %v3376, %v3376
        %3394 = vrot.lane.b32.xlu0 %v3378, 5
        %v3395 = vpop.permute.xlu0 %3394
        %3396 = vrot.lane.b32.xlu0 %v3379, 5
        %v3397 = vpop.permute.xlu0 %3396
        %3398 = vrot.lane.b32.xlu0 %v3380, 5
        %v3399 = vpop.permute.xlu0 %3398
        %3400 = vrot.lane.b32.xlu0 %v3381, 5
        %v3401 = vpop.permute.xlu0 %3400
        %3402 = vrot.lane.b32.xlu0 %v3382, 5
        %v3403 = vpop.permute.xlu0 %3402
        %3404 = vrot.lane.b32.xlu0 %v3383, 5
        %v3405 = vpop.permute.xlu0 %3404
        %3406 = vrot.lane.b32.xlu0 %v3384, 5
        %v3407 = vpop.permute.xlu0 %3406
        %3408 = vrot.lane.b32.xlu0 %v3385, 5
        %v3409 = vpop.permute.xlu0 %3408
        %vm3418 = vcmask 76840
        %3419 = vst.msk [vmem:[%s1012] sm:$0xf] %vm3418, %v3395
        %3420 = vst.msk [vmem:[%s1012 + $0x4] sm:$0xf] %vm3418, %v3397
        %3421 = vst.msk [vmem:[%s1012 + $0x8] sm:$0xf] %vm3418, %v3399
        %3422 = vst.msk [vmem:[%s1012 + $0xc] sm:$0xf] %vm3418, %v3401
        %3423 = vst.msk [vmem:[%s1012 + $0x10] sm:$0xf] %vm3418, %v3403
        %3424 = vst.msk [vmem:[%s1012 + $0x14] sm:$0xf] %vm3418, %v3405
        %3425 = vst.msk [vmem:[%s1012 + $0x18] sm:$0xf] %vm3418, %v3407
        %3426 = vst.msk [vmem:[%s1012 + $0x1c] sm:$0xf] %vm3418, %v3409
        %s3427 = scalar_lea.vmem [#allocation27], 2
        %v3428 = vld [vmem:[%s3427] sm:$0x1]
        %v3430 = vperm.slane %v3428, 0
        %v3432 = vmul.f32 %v2704, %v3430
        %v3433 = vmul.f32 %v2709, %v3430
        %v3434 = vmul.f32 %v2714, %v3430
        %v3435 = vmul.f32 %v2719, %v3430
        %v3436 = vmul.f32 %v2724, %v3430
        %v3437 = vmul.f32 %v2729, %v3430
        %v3438 = vmul.f32 %v2734, %v3430
        %v3439 = vmul.f32 %v2739, %v3430
        %v3440 = vld [vmem:[%s19] sm:$0x1]
        %v3442 = vperm.slane %v3440, 0
        %v3444 = vadd.f32 %v3432, %v3442
        %v3445 = vadd.f32 %v3433, %v3442
        %v3446 = vadd.f32 %v3434, %v3442
        %v3447 = vadd.f32 %v3435, %v3442
        %v3448 = vadd.f32 %v3436, %v3442
        %v3449 = vadd.f32 %v3437, %v3442
        %v3450 = vadd.f32 %v3438, %v3442
        %v3451 = vadd.f32 %v3439, %v3442
        %v3452 = vtanh.pop %v3444
        %v3453 = vtanh.pop %v3445
        %v3454 = vtanh.pop %v3446
        %v3455 = vtanh.pop %v3447
        %v3456 = vtanh.pop %v3448
        %v3457 = vtanh.pop %v3449
        %v3458 = vtanh.pop %v3450
        %v3459 = vtanh.pop %v3451
        %v3460 = vpack.c.bf16 %v3453, %v3452
        %v3461 = vpack.c.bf16 %v3455, %v3454
        %v3462 = vpack.c.bf16 %v3457, %v3456
        %v3463 = vpack.c.bf16 %v3459, %v3458
        %v3464 = vld [vmem:[#allocation28] sm:$0xff]
        %v3465 = vld [vmem:[#allocation28 + $0x8] sm:$0xff]
        %v3466 = vld [vmem:[#allocation28 + $0x10] sm:$0xff]
        %v3467 = vld [vmem:[#allocation28 + $0x18] sm:$0xff]
        %v3468 = vld [vmem:[#allocation30] sm:$0x3]
        %v3470 = vperm.slane %v3468, 0
        %v3471 = vperm.slane %v3468, 1
        %v3478 = vunpack.c.l.b16 %v3464
        %v3479 = vunpack.c.h.b16 %v3464
        %v3480 = vunpack.c.l.b16 %v3465
        %v3481 = vunpack.c.h.b16 %v3465
        %v3482 = vunpack.c.l.b16 %v3466
        %v3483 = vunpack.c.h.b16 %v3466
        %v3484 = vunpack.c.l.b16 %v3467
        %v3485 = vunpack.c.h.b16 %v3467
        %v3486 = vpack.c.b16 %v3480, %v3478
        %v3487 = vpack.c.b16 %v3481, %v3479
        %v3488 = vpack.c.b16 %v3484, %v3482
        %v3489 = vpack.c.b16 %v3485, %v3483
        %v3495 = vsel %vm1225, %v3460, 0
        %v3498 = vsel %vm1225, %v3461, 0
        %v3501 = vsel %vm1225, %v3462, 0
        %v3504 = vsel %vm1225, %v3463, 0
        %3506 = vmatpush.bf16.msra.mxu0 0
        %3507 = vmatpush.bf16.msra.mxu0 0
        %3508 = vmatpush.bf16.msra.mxu0 0
        %3509 = vmatpush.bf16.msra.mxu0 0
        %3510 = vmatpush.bf16.msra.mxu0 0
        %3511 = vmatpush.bf16.msra.mxu0 0
        %3512 = vmatpush.bf16.msra.mxu0 %v3488
        %3513 = vmatpush.bf16.msra.mxu0 %v3486
        %3514 = vmatmul.bf16.gmra.mxu0 %v3495
        %v3515 = vpop.f32.mrf.mxu0
        %v3516 = vadd.f32 %v3470, %v3515
        %v3517 = vpop.f32.mrf.mxu0
        %v3518 = vadd.f32 %v3470, %v3517
        %3519 = vmatmul.bf16.gmra.mxu0 %v3498
        %v3520 = vpop.f32.mrf.mxu0
        %v3521 = vadd.f32 %v3470, %v3520
        %v3522 = vpop.f32.mrf.mxu0
        %v3523 = vadd.f32 %v3470, %v3522
        %3524 = vmatmul.bf16.gmra.mxu0 %v3501
        %v3525 = vpop.f32.mrf.mxu0
        %v3526 = vadd.f32 %v3470, %v3525
        %v3527 = vpop.f32.mrf.mxu0
        %v3528 = vadd.f32 %v3470, %v3527
        %3529 = vmatmul.bf16.gmra.mxu0 %v3504
        %v3530 = vpop.f32.mrf.mxu0
        %v3531 = vadd.f32 %v3470, %v3530
        %v3532 = vpop.f32.mrf.mxu0
        %v3533 = vadd.f32 %v3470, %v3532
        %3534 = vdwg.mxu0
        %3535 = vmatpush.bf16.msra.mxu0 0
        %3536 = vmatpush.bf16.msra.mxu0 0
        %3537 = vmatpush.bf16.msra.mxu0 0
        %3538 = vmatpush.bf16.msra.mxu0 0
        %3539 = vmatpush.bf16.msra.mxu0 0
        %3540 = vmatpush.bf16.msra.mxu0 0
        %3541 = vmatpush.bf16.msra.mxu0 %v3489
        %3542 = vmatpush.bf16.msra.mxu0 %v3487
        %3543 = vmatmul.bf16.gmra.mxu0 %v3495
        %v3544 = vpop.f32.mrf.mxu0
        %v3545 = vadd.f32 %v3471, %v3544
        %v3546 = vpop.f32.mrf.mxu0
        %v3547 = vadd.f32 %v3471, %v3546
        %3548 = vmatmul.bf16.gmra.mxu0 %v3498
        %v3549 = vpop.f32.mrf.mxu0
        %v3550 = vadd.f32 %v3471, %v3549
        %v3551 = vpop.f32.mrf.mxu0
        %v3552 = vadd.f32 %v3471, %v3551
        %3553 = vmatmul.bf16.gmra.mxu0 %v3501
        %v3554 = vpop.f32.mrf.mxu0
        %v3555 = vadd.f32 %v3471, %v3554
        %v3556 = vpop.f32.mrf.mxu0
        %v3557 = vadd.f32 %v3471, %v3556
        %3558 = vmatmul.bf16.gmra.mxu0 %v3504
        %v3559 = vpop.f32.mrf.mxu0
        %v3560 = vadd.f32 %v3471, %v3559
        %v3561 = vpop.f32.mrf.mxu0
        %v3562 = vadd.f32 %v3471, %v3561
        %3563 = vdwg.mxu0
        %v3564 = vtanh.pop %v3516
        %v3565 = vtanh.pop %v3545
        %v3566 = vtanh.pop %v3518
        %v3567 = vtanh.pop %v3547
        %v3568 = vtanh.pop %v3521
        %v3569 = vtanh.pop %v3550
        %v3570 = vtanh.pop %v3523
        %v3571 = vtanh.pop %v3552
        %v3572 = vtanh.pop %v3526
        %v3573 = vtanh.pop %v3555
        %v3574 = vtanh.pop %v3528
        %v3575 = vtanh.pop %v3557
        %v3576 = vtanh.pop %v3531
        %v3577 = vtanh.pop %v3560
        %v3578 = vtanh.pop %v3533
        %v3579 = vtanh.pop %v3562
        %v3580 = vpack.c.bf16 %v3566, %v3564
        %v3581 = vpack.c.bf16 %v3567, %v3565
        %v3582 = vpack.c.bf16 %v3570, %v3568
        %v3583 = vpack.c.bf16 %v3571, %v3569
        %v3584 = vpack.c.bf16 %v3574, %v3572
        %v3585 = vpack.c.bf16 %v3575, %v3573
        %v3586 = vpack.c.bf16 %v3578, %v3576
        %v3587 = vpack.c.bf16 %v3579, %v3577
        %v3588 = vld [vmem:[%s22] sm:$0xf]
        %v3589 = vld [vmem:[%s22 + $0x4] sm:$0xf]
        %v3590 = vld [vmem:[%s22 + $0x8] sm:$0xf]
        %v3591 = vld [vmem:[%s22 + $0xc] sm:$0xf]
        %v3592 = vld [vmem:[%s22 + $0x10] sm:$0xf]
        %v3593 = vld [vmem:[%s22 + $0x14] sm:$0xf]
        %v3594 = vld [vmem:[%s22 + $0x18] sm:$0xf]
        %v3595 = vld [vmem:[%s22 + $0x1c] sm:$0xf]
        %v3596 = vld [vmem:[%s22 + $0x20] sm:$0xf]
        %v3597 = vld [vmem:[%s22 + $0x24] sm:$0xf]
        %v3598 = vld [vmem:[%s22 + $0x28] sm:$0xf]
        %v3599 = vld [vmem:[%s22 + $0x2c] sm:$0xf]
        %v3600 = vld [vmem:[%s22 + $0x30] sm:$0xf]
        %v3601 = vld [vmem:[%s22 + $0x34] sm:$0xf]
        %v3602 = vld [vmem:[%s22 + $0x38] sm:$0xf]
        %v3603 = vld [vmem:[%s22 + $0x3c] sm:$0xf]
        %v3604 = vld [vmem:[%s22 + $0x40] sm:$0xf]
        %v3605 = vld [vmem:[%s22 + $0x44] sm:$0xf]
        %v3606 = vld [vmem:[%s22 + $0x48] sm:$0xf]
        %v3607 = vld [vmem:[%s22 + $0x4c] sm:$0xf]
        %v3628 = vunpack.c.l.b16 %v3588
        %v3629 = vunpack.c.l.b16 %v3589
        %v3630 = vunpack.c.l.b16 %v3590
        %v3631 = vunpack.c.l.b16 %v3591
        %v3632 = vunpack.c.l.b16 %v3592
        %v3633 = vunpack.c.l.b16 %v3593
        %v3634 = vunpack.c.l.b16 %v3594
        %v3635 = vunpack.c.l.b16 %v3595
        %v3636 = vunpack.c.l.b16 %v3596
        %v3637 = vunpack.c.l.b16 %v3597
        %v3638 = vunpack.c.l.b16 %v3598
        %v3639 = vunpack.c.l.b16 %v3599
        %v3640 = vunpack.c.l.b16 %v3600
        %v3641 = vunpack.c.l.b16 %v3601
        %v3642 = vunpack.c.l.b16 %v3602
        %v3643 = vunpack.c.l.b16 %v3603
        %v3644 = vunpack.c.l.b16 %v3604
        %v3645 = vunpack.c.l.b16 %v3605
        %v3646 = vunpack.c.l.b16 %v3606
        %v3647 = vunpack.c.l.b16 %v3607
        %v3648 = vpack.c.b16 %v3629, %v3628
        %v3649 = vpack.c.b16 %v3631, %v3630
        %v3650 = vpack.c.b16 %v3633, %v3632
        %v3651 = vpack.c.b16 %v3635, %v3634
        %v3652 = vpack.c.b16 %v3637, %v3636
        %v3653 = vpack.c.b16 %v3639, %v3638
        %v3654 = vpack.c.b16 %v3641, %v3640
        %v3655 = vpack.c.b16 %v3643, %v3642
        %v3656 = vpack.c.b16 %v3645, %v3644
        %v3657 = vpack.c.b16 %v3647, %v3646
        %v3669 = vsel %vm1225, %v3581, 0
        %v3672 = vsel %vm1225, %v3583, 0
        %v3675 = vsel %vm1225, %v3585, 0
        %v3678 = vsel %vm1225, %v3587, 0
        %3680 = vmatpush.bf16.msra.mxu0 %v3655
        %3681 = vmatpush.bf16.msra.mxu0 %v3654
        %3682 = vmatpush.bf16.msra.mxu0 %v3653
        %3683 = vmatpush.bf16.msra.mxu0 %v3652
        %3684 = vmatpush.bf16.msra.mxu0 %v3651
        %3685 = vmatpush.bf16.msra.mxu0 %v3650
        %3686 = vmatpush.bf16.msra.mxu0 %v3649
        %3687 = vmatpush.bf16.msra.mxu0 %v3648
        %3688 = vmatmul.bf16.gmra.mxu0 %v3580
        %v3689 = vpop.f32.mrf.mxu0
        %v3690 = vadd.f32 0.0, %v3689
        %v3691 = vpop.f32.mrf.mxu0
        %v3692 = vadd.f32 0.0, %v3691
        %3693 = vmatmul.bf16.gmra.mxu0 %v3582
        %v3694 = vpop.f32.mrf.mxu0
        %v3695 = vadd.f32 0.0, %v3694
        %v3696 = vpop.f32.mrf.mxu0
        %v3697 = vadd.f32 0.0, %v3696
        %3698 = vmatmul.bf16.gmra.mxu0 %v3584
        %v3699 = vpop.f32.mrf.mxu0
        %v3700 = vadd.f32 0.0, %v3699
        %v3701 = vpop.f32.mrf.mxu0
        %v3702 = vadd.f32 0.0, %v3701
        %3703 = vmatmul.bf16.gmra.mxu0 %v3586
        %v3704 = vpop.f32.mrf.mxu0
        %v3705 = vadd.f32 0.0, %v3704
        %v3706 = vpop.f32.mrf.mxu0
        %v3707 = vadd.f32 0.0, %v3706
        %3708 = vdwg.mxu0
        %3709 = vmatpush.bf16.msra.mxu0 0
        %3710 = vmatpush.bf16.msra.mxu0 0
        %3711 = vmatpush.bf16.msra.mxu0 0
        %3712 = vmatpush.bf16.msra.mxu0 0
        %3713 = vmatpush.bf16.msra.mxu0 0
        %3714 = vmatpush.bf16.msra.mxu0 0
        %3715 = vmatpush.bf16.msra.mxu0 %v3657
        %3716 = vmatpush.bf16.msra.mxu0 %v3656
        %3717 = vmatmul.bf16.gmra.mxu0 %v3669
        %v3718 = vpop.f32.mrf.mxu0
        %v3719 = vadd.f32 %v3690, %v3718
        %v3720 = vpop.f32.mrf.mxu0
        %v3721 = vadd.f32 %v3692, %v3720
        %3722 = vmatmul.bf16.gmra.mxu0 %v3672
        %v3723 = vpop.f32.mrf.mxu0
        %v3724 = vadd.f32 %v3695, %v3723
        %v3725 = vpop.f32.mrf.mxu0
        %v3726 = vadd.f32 %v3697, %v3725
        %3727 = vmatmul.bf16.gmra.mxu0 %v3675
        %v3728 = vpop.f32.mrf.mxu0
        %v3729 = vadd.f32 %v3700, %v3728
        %v3730 = vpop.f32.mrf.mxu0
        %v3731 = vadd.f32 %v3702, %v3730
        %3732 = vmatmul.bf16.gmra.mxu0 %v3678
        %v3733 = vpop.f32.mrf.mxu0
        %v3734 = vadd.f32 %v3705, %v3733
        %v3735 = vpop.f32.mrf.mxu0
        %v3736 = vadd.f32 %v3707, %v3735
        %3737 = vdwg.mxu0
        %v3738 = vpack.c.bf16 %v3719, %v3719
        %v3739 = vpack.c.bf16 %v3721, %v3721
        %v3740 = vpack.c.bf16 %v3724, %v3724
        %v3741 = vpack.c.bf16 %v3726, %v3726
        %v3742 = vpack.c.bf16 %v3729, %v3729
        %v3743 = vpack.c.bf16 %v3731, %v3731
        %v3744 = vpack.c.bf16 %v3734, %v3734
        %v3745 = vpack.c.bf16 %v3736, %v3736
        %3754 = vrot.lane.b32.xlu0 %v3738, 10
        %v3755 = vpop.permute.xlu0 %3754
        %3756 = vrot.lane.b32.xlu0 %v3739, 10
        %v3757 = vpop.permute.xlu0 %3756
        %3758 = vrot.lane.b32.xlu0 %v3740, 10
        %v3759 = vpop.permute.xlu0 %3758
        %3760 = vrot.lane.b32.xlu0 %v3741, 10
        %v3761 = vpop.permute.xlu0 %3760
        %3762 = vrot.lane.b32.xlu0 %v3742, 10
        %v3763 = vpop.permute.xlu0 %3762
        %3764 = vrot.lane.b32.xlu0 %v3743, 10
        %v3765 = vpop.permute.xlu0 %3764
        %3766 = vrot.lane.b32.xlu0 %v3744, 10
        %v3767 = vpop.permute.xlu0 %3766
        %3768 = vrot.lane.b32.xlu0 %v3745, 10
        %v3769 = vpop.permute.xlu0 %3768
        %vm3778 = vcmask 117840
        %3779 = vst.msk [vmem:[%s1012] sm:$0xf] %vm3778, %v3755
        %3780 = vst.msk [vmem:[%s1012 + $0x4] sm:$0xf] %vm3778, %v3757
        %3781 = vst.msk [vmem:[%s1012 + $0x8] sm:$0xf] %vm3778, %v3759
        %3782 = vst.msk [vmem:[%s1012 + $0xc] sm:$0xf] %vm3778, %v3761
        %3783 = vst.msk [vmem:[%s1012 + $0x10] sm:$0xf] %vm3778, %v3763
        %3784 = vst.msk [vmem:[%s1012 + $0x14] sm:$0xf] %vm3778, %v3765
        %3785 = vst.msk [vmem:[%s1012 + $0x18] sm:$0xf] %vm3778, %v3767
        %3786 = vst.msk [vmem:[%s1012 + $0x1c] sm:$0xf] %vm3778, %v3769
        %s3787 = scalar_lea.vmem [#allocation27], 3
        %v3788 = vld [vmem:[%s3787] sm:$0x1]
        %v3790 = vperm.slane %v3788, 0
        %v3792 = vmul.f32 %v2704, %v3790
        %v3793 = vmul.f32 %v2709, %v3790
        %v3794 = vmul.f32 %v2714, %v3790
        %v3795 = vmul.f32 %v2719, %v3790
        %v3796 = vmul.f32 %v2724, %v3790
        %v3797 = vmul.f32 %v2729, %v3790
        %v3798 = vmul.f32 %v2734, %v3790
        %v3799 = vmul.f32 %v2739, %v3790
        %v3800 = vld [vmem:[%s19] sm:$0x1]
        %v3802 = vperm.slane %v3800, 0
        %v3804 = vadd.f32 %v3792, %v3802
        %v3805 = vadd.f32 %v3793, %v3802
        %v3806 = vadd.f32 %v3794, %v3802
        %v3807 = vadd.f32 %v3795, %v3802
        %v3808 = vadd.f32 %v3796, %v3802
        %v3809 = vadd.f32 %v3797, %v3802
        %v3810 = vadd.f32 %v3798, %v3802
        %v3811 = vadd.f32 %v3799, %v3802
        %v3812 = vtanh.pop %v3804
        %v3813 = vtanh.pop %v3805
        %v3814 = vtanh.pop %v3806
        %v3815 = vtanh.pop %v3807
        %v3816 = vtanh.pop %v3808
        %v3817 = vtanh.pop %v3809
        %v3818 = vtanh.pop %v3810
        %v3819 = vtanh.pop %v3811
        %v3820 = vpack.c.bf16 %v3813, %v3812
        %v3821 = vpack.c.bf16 %v3815, %v3814
        %v3822 = vpack.c.bf16 %v3817, %v3816
        %v3823 = vpack.c.bf16 %v3819, %v3818
        %v3824 = vld [vmem:[#allocation28] sm:$0xff]
        %v3825 = vld [vmem:[#allocation28 + $0x8] sm:$0xff]
        %v3826 = vld [vmem:[#allocation28 + $0x10] sm:$0xff]
        %v3827 = vld [vmem:[#allocation28 + $0x18] sm:$0xff]
        %v3828 = vld [vmem:[#allocation30] sm:$0x3]
        %v3830 = vperm.slane %v3828, 0
        %v3831 = vperm.slane %v3828, 1
        %v3838 = vunpack.c.l.b16 %v3824
        %v3839 = vunpack.c.h.b16 %v3824
        %v3840 = vunpack.c.l.b16 %v3825
        %v3841 = vunpack.c.h.b16 %v3825
        %v3842 = vunpack.c.l.b16 %v3826
        %v3843 = vunpack.c.h.b16 %v3826
        %v3844 = vunpack.c.l.b16 %v3827
        %v3845 = vunpack.c.h.b16 %v3827
        %v3846 = vpack.c.b16 %v3840, %v3838
        %v3847 = vpack.c.b16 %v3841, %v3839
        %v3848 = vpack.c.b16 %v3844, %v3842
        %v3849 = vpack.c.b16 %v3845, %v3843
        %v3855 = vsel %vm1225, %v3820, 0
        %v3858 = vsel %vm1225, %v3821, 0
        %v3861 = vsel %vm1225, %v3822, 0
        %v3864 = vsel %vm1225, %v3823, 0
        %3866 = vmatpush.bf16.msra.mxu0 0
        %3867 = vmatpush.bf16.msra.mxu0 0
        %3868 = vmatpush.bf16.msra.mxu0 0
        %3869 = vmatpush.bf16.msra.mxu0 0
        %3870 = vmatpush.bf16.msra.mxu0 0
        %3871 = vmatpush.bf16.msra.mxu0 0
        %3872 = vmatpush.bf16.msra.mxu0 %v3848
        %3873 = vmatpush.bf16.msra.mxu0 %v3846
        %3874 = vmatmul.bf16.gmra.mxu0 %v3855
        %v3875 = vpop.f32.mrf.mxu0
        %v3876 = vadd.f32 %v3830, %v3875
        %v3877 = vpop.f32.mrf.mxu0
        %v3878 = vadd.f32 %v3830, %v3877
        %3879 = vmatmul.bf16.gmra.mxu0 %v3858
        %v3880 = vpop.f32.mrf.mxu0
        %v3881 = vadd.f32 %v3830, %v3880
        %v3882 = vpop.f32.mrf.mxu0
        %v3883 = vadd.f32 %v3830, %v3882
        %3884 = vmatmul.bf16.gmra.mxu0 %v3861
        %v3885 = vpop.f32.mrf.mxu0
        %v3886 = vadd.f32 %v3830, %v3885
        %v3887 = vpop.f32.mrf.mxu0
        %v3888 = vadd.f32 %v3830, %v3887
        %3889 = vmatmul.bf16.gmra.mxu0 %v3864
        %v3890 = vpop.f32.mrf.mxu0
        %v3891 = vadd.f32 %v3830, %v3890
        %v3892 = vpop.f32.mrf.mxu0
        %v3893 = vadd.f32 %v3830, %v3892
        %3894 = vdwg.mxu0
        %3895 = vmatpush.bf16.msra.mxu0 0
        %3896 = vmatpush.bf16.msra.mxu0 0
        %3897 = vmatpush.bf16.msra.mxu0 0
        %3898 = vmatpush.bf16.msra.mxu0 0
        %3899 = vmatpush.bf16.msra.mxu0 0
        %3900 = vmatpush.bf16.msra.mxu0 0
        %3901 = vmatpush.bf16.msra.mxu0 %v3849
        %3902 = vmatpush.bf16.msra.mxu0 %v3847
        %3903 = vmatmul.bf16.gmra.mxu0 %v3855
        %v3904 = vpop.f32.mrf.mxu0
        %v3905 = vadd.f32 %v3831, %v3904
        %v3906 = vpop.f32.mrf.mxu0
        %v3907 = vadd.f32 %v3831, %v3906
        %3908 = vmatmul.bf16.gmra.mxu0 %v3858
        %v3909 = vpop.f32.mrf.mxu0
        %v3910 = vadd.f32 %v3831, %v3909
        %v3911 = vpop.f32.mrf.mxu0
        %v3912 = vadd.f32 %v3831, %v3911
        %3913 = vmatmul.bf16.gmra.mxu0 %v3861
        %v3914 = vpop.f32.mrf.mxu0
        %v3915 = vadd.f32 %v3831, %v3914
        %v3916 = vpop.f32.mrf.mxu0
        %v3917 = vadd.f32 %v3831, %v3916
        %3918 = vmatmul.bf16.gmra.mxu0 %v3864
        %v3919 = vpop.f32.mrf.mxu0
        %v3920 = vadd.f32 %v3831, %v3919
        %v3921 = vpop.f32.mrf.mxu0
        %v3922 = vadd.f32 %v3831, %v3921
        %3923 = vdwg.mxu0
        %v3924 = vtanh.pop %v3876
        %v3925 = vtanh.pop %v3905
        %v3926 = vtanh.pop %v3878
        %v3927 = vtanh.pop %v3907
        %v3928 = vtanh.pop %v3881
        %v3929 = vtanh.pop %v3910
        %v3930 = vtanh.pop %v3883
        %v3931 = vtanh.pop %v3912
        %v3932 = vtanh.pop %v3886
        %v3933 = vtanh.pop %v3915
        %v3934 = vtanh.pop %v3888
        %v3935 = vtanh.pop %v3917
        %v3936 = vtanh.pop %v3891
        %v3937 = vtanh.pop %v3920
        %v3938 = vtanh.pop %v3893
        %v3939 = vtanh.pop %v3922
        %v3940 = vpack.c.bf16 %v3926, %v3924
        %v3941 = vpack.c.bf16 %v3927, %v3925
        %v3942 = vpack.c.bf16 %v3930, %v3928
        %v3943 = vpack.c.bf16 %v3931, %v3929
        %v3944 = vpack.c.bf16 %v3934, %v3932
        %v3945 = vpack.c.bf16 %v3935, %v3933
        %v3946 = vpack.c.bf16 %v3938, %v3936
        %v3947 = vpack.c.bf16 %v3939, %v3937
        %v3948 = vld [vmem:[%s22] sm:$0xf]
        %v3949 = vld [vmem:[%s22 + $0x4] sm:$0xf]
        %v3950 = vld [vmem:[%s22 + $0x8] sm:$0xf]
        %v3951 = vld [vmem:[%s22 + $0xc] sm:$0xf]
        %v3952 = vld [vmem:[%s22 + $0x10] sm:$0xf]
        %v3953 = vld [vmem:[%s22 + $0x14] sm:$0xf]
        %v3954 = vld [vmem:[%s22 + $0x18] sm:$0xf]
        %v3955 = vld [vmem:[%s22 + $0x1c] sm:$0xf]
        %v3956 = vld [vmem:[%s22 + $0x20] sm:$0xf]
        %v3957 = vld [vmem:[%s22 + $0x24] sm:$0xf]
        %v3958 = vld [vmem:[%s22 + $0x28] sm:$0xf]
        %v3959 = vld [vmem:[%s22 + $0x2c] sm:$0xf]
        %v3960 = vld [vmem:[%s22 + $0x30] sm:$0xf]
        %v3961 = vld [vmem:[%s22 + $0x34] sm:$0xf]
        %v3962 = vld [vmem:[%s22 + $0x38] sm:$0xf]
        %v3963 = vld [vmem:[%s22 + $0x3c] sm:$0xf]
        %v3964 = vld [vmem:[%s22 + $0x40] sm:$0xf]
        %v3965 = vld [vmem:[%s22 + $0x44] sm:$0xf]
        %v3966 = vld [vmem:[%s22 + $0x48] sm:$0xf]
        %v3967 = vld [vmem:[%s22 + $0x4c] sm:$0xf]
        %v3988 = vunpack.c.l.b16 %v3948
        %v3989 = vunpack.c.l.b16 %v3949
        %v3990 = vunpack.c.l.b16 %v3950
        %v3991 = vunpack.c.l.b16 %v3951
        %v3992 = vunpack.c.l.b16 %v3952
        %v3993 = vunpack.c.l.b16 %v3953
        %v3994 = vunpack.c.l.b16 %v3954
        %v3995 = vunpack.c.l.b16 %v3955
        %v3996 = vunpack.c.l.b16 %v3956
        %v3997 = vunpack.c.l.b16 %v3957
        %v3998 = vunpack.c.l.b16 %v3958
        %v3999 = vunpack.c.l.b16 %v3959
        %v4000 = vunpack.c.l.b16 %v3960
        %v4001 = vunpack.c.l.b16 %v3961
        %v4002 = vunpack.c.l.b16 %v3962
        %v4003 = vunpack.c.l.b16 %v3963
        %v4004 = vunpack.c.l.b16 %v3964
        %v4005 = vunpack.c.l.b16 %v3965
        %v4006 = vunpack.c.l.b16 %v3966
        %v4007 = vunpack.c.l.b16 %v3967
        %v4008 = vpack.c.b16 %v3989, %v3988
        %v4009 = vpack.c.b16 %v3991, %v3990
        %v4010 = vpack.c.b16 %v3993, %v3992
        %v4011 = vpack.c.b16 %v3995, %v3994
        %v4012 = vpack.c.b16 %v3997, %v3996
        %v4013 = vpack.c.b16 %v3999, %v3998
        %v4014 = vpack.c.b16 %v4001, %v4000
        %v4015 = vpack.c.b16 %v4003, %v4002
        %v4016 = vpack.c.b16 %v4005, %v4004
        %v4017 = vpack.c.b16 %v4007, %v4006
        %v4029 = vsel %vm1225, %v3941, 0
        %v4032 = vsel %vm1225, %v3943, 0
        %v4035 = vsel %vm1225, %v3945, 0
        %v4038 = vsel %vm1225, %v3947, 0
        %4040 = vmatpush.bf16.msra.mxu0 %v4015
        %4041 = vmatpush.bf16.msra.mxu0 %v4014
        %4042 = vmatpush.bf16.msra.mxu0 %v4013
        %4043 = vmatpush.bf16.msra.mxu0 %v4012
        %4044 = vmatpush.bf16.msra.mxu0 %v4011
        %4045 = vmatpush.bf16.msra.mxu0 %v4010
        %4046 = vmatpush.bf16.msra.mxu0 %v4009
        %4047 = vmatpush.bf16.msra.mxu0 %v4008
        %4048 = vmatmul.bf16.gmra.mxu0 %v3940
        %v4049 = vpop.f32.mrf.mxu0
        %v4050 = vadd.f32 0.0, %v4049
        %v4051 = vpop.f32.mrf.mxu0
        %v4052 = vadd.f32 0.0, %v4051
        %4053 = vmatmul.bf16.gmra.mxu0 %v3942
        %v4054 = vpop.f32.mrf.mxu0
        %v4055 = vadd.f32 0.0, %v4054
        %v4056 = vpop.f32.mrf.mxu0
        %v4057 = vadd.f32 0.0, %v4056
        %4058 = vmatmul.bf16.gmra.mxu0 %v3944
        %v4059 = vpop.f32.mrf.mxu0
        %v4060 = vadd.f32 0.0, %v4059
        %v4061 = vpop.f32.mrf.mxu0
        %v4062 = vadd.f32 0.0, %v4061
        %4063 = vmatmul.bf16.gmra.mxu0 %v3946
        %v4064 = vpop.f32.mrf.mxu0
        %v4065 = vadd.f32 0.0, %v4064
        %v4066 = vpop.f32.mrf.mxu0
        %v4067 = vadd.f32 0.0, %v4066
        %4068 = vdwg.mxu0
        %4069 = vmatpush.bf16.msra.mxu0 0
        %4070 = vmatpush.bf16.msra.mxu0 0
        %4071 = vmatpush.bf16.msra.mxu0 0
        %4072 = vmatpush.bf16.msra.mxu0 0
        %4073 = vmatpush.bf16.msra.mxu0 0
        %4074 = vmatpush.bf16.msra.mxu0 0
        %4075 = vmatpush.bf16.msra.mxu0 %v4017
        %4076 = vmatpush.bf16.msra.mxu0 %v4016
        %4077 = vmatmul.bf16.gmra.mxu0 %v4029
        %v4078 = vpop.f32.mrf.mxu0
        %v4079 = vadd.f32 %v4050, %v4078
        %v4080 = vpop.f32.mrf.mxu0
        %v4081 = vadd.f32 %v4052, %v4080
        %4082 = vmatmul.bf16.gmra.mxu0 %v4032
        %v4083 = vpop.f32.mrf.mxu0
        %v4084 = vadd.f32 %v4055, %v4083
        %v4085 = vpop.f32.mrf.mxu0
        %v4086 = vadd.f32 %v4057, %v4085
        %4087 = vmatmul.bf16.gmra.mxu0 %v4035
        %v4088 = vpop.f32.mrf.mxu0
        %v4089 = vadd.f32 %v4060, %v4088
        %v4090 = vpop.f32.mrf.mxu0
        %v4091 = vadd.f32 %v4062, %v4090
        %4092 = vmatmul.bf16.gmra.mxu0 %v4038
        %v4093 = vpop.f32.mrf.mxu0
        %v4094 = vadd.f32 %v4065, %v4093
        %v4095 = vpop.f32.mrf.mxu0
        %v4096 = vadd.f32 %v4067, %v4095
        %4097 = vdwg.mxu0
        %v4098 = vpack.c.bf16 %v4079, %v4079
        %v4099 = vpack.c.bf16 %v4081, %v4081
        %v4100 = vpack.c.bf16 %v4084, %v4084
        %v4101 = vpack.c.bf16 %v4086, %v4086
        %v4102 = vpack.c.bf16 %v4089, %v4089
        %v4103 = vpack.c.bf16 %v4091, %v4091
        %v4104 = vpack.c.bf16 %v4094, %v4094
        %v4105 = vpack.c.bf16 %v4096, %v4096
        %4114 = vrot.lane.b32.xlu0 %v4098, 15
        %v4115 = vpop.permute.xlu0 %4114
        %4116 = vrot.lane.b32.xlu0 %v4099, 15
        %v4117 = vpop.permute.xlu0 %4116
        %4118 = vrot.lane.b32.xlu0 %v4100, 15
        %v4119 = vpop.permute.xlu0 %4118
        %4120 = vrot.lane.b32.xlu0 %v4101, 15
        %v4121 = vpop.permute.xlu0 %4120
        %4122 = vrot.lane.b32.xlu0 %v4102, 15
        %v4123 = vpop.permute.xlu0 %4122
        %4124 = vrot.lane.b32.xlu0 %v4103, 15
        %v4125 = vpop.permute.xlu0 %4124
        %4126 = vrot.lane.b32.xlu0 %v4104, 15
        %v4127 = vpop.permute.xlu0 %4126
        %4128 = vrot.lane.b32.xlu0 %v4105, 15
        %v4129 = vpop.permute.xlu0 %4128
        %vm4138 = vcmask 158840
        %4139 = vst.msk [vmem:[%s1012] sm:$0xf] %vm4138, %v4115
        %4140 = vst.msk [vmem:[%s1012 + $0x4] sm:$0xf] %vm4138, %v4117
        %4141 = vst.msk [vmem:[%s1012 + $0x8] sm:$0xf] %vm4138, %v4119
        %4142 = vst.msk [vmem:[%s1012 + $0xc] sm:$0xf] %vm4138, %v4121
        %4143 = vst.msk [vmem:[%s1012 + $0x10] sm:$0xf] %vm4138, %v4123
        %4144 = vst.msk [vmem:[%s1012 + $0x14] sm:$0xf] %vm4138, %v4125
        %4145 = vst.msk [vmem:[%s1012 + $0x18] sm:$0xf] %vm4138, %v4127
        %4146 = vst.msk [vmem:[%s1012 + $0x1c] sm:$0xf] %vm4138, %v4129
        %p4147 = scmp.lt.s32.totalorder %s44, 1
        %s4148 = scalar_select %p4147, %s44, 1
        %s4149 = smul.addr %s4148, 8
        %s4150 = smul.addr %s4149, 4
        %s4151 = scalar_lea.vmem %s23, %s4150
        // Predicated region
        $region189: #{generator_forward.2} parent=111 // pred_check
          %p4152 = pneg %p550
        $region190: #{generator_forward.2} parent=111 // pred_check_branch
          %4154 = sbr.rel (%p4152) target = $region192
        $region191: #{generator_forward.2} parent=111 // pred_region
          _
        $region192: #{generator_forward.2} parent=111 // pred_fallthru
          _
      $region112: #{generator_forward.2} parent=5 // pred_fallthru
        _
      %p4155 = scmp.le.s32.totalorder 2, %s39
      // Predicated region
      $region193: #{generator_forward.2} parent=5 // pred_check
        %p4156 = pneg %p4155
      $region194: #{generator_forward.2} parent=5 // pred_check_branch
        %4158 = sbr.rel (%p4156) target = $region196
      $region195: #{generator_forward.2} parent=5 // pred_region
        %s4159 = ssub.s32 %s39, 2
        // Predicated region
        $region197: #{generator_forward.2} parent=195 // pred_check
          %p4160 = pneg %p556
        $region198: #{generator_forward.2} parent=195 // pred_check_branch
          %4162 = sbr.rel (%p4160) target = $region200
        $region199: #{generator_forward.2} parent=195 // pred_region
          %p4163 = scmp.lt.s32.totalorder %s45, 1
          %s4164 = scalar_select %p4163, %s45, 1
          %s4165 = smul.addr %s4164, 8
          %s4166 = smul.addr %s4165, 4
          %s4167 = scalar_lea.vmem %s23, %s4166
        $region200: #{generator_forward.2} parent=195 // pred_fallthru
          _
      $region196: #{generator_forward.2} parent=5 // pred_fallthru
        _
    $region6: #{generator_forward.2} parent=1 // loop_footer
      %s43 = sadd.s32 1, %s39
    $region7: #{generator_forward.2} parent=1 // loop_footer_branch
      %38 = sbr.rel target = $region3
    $region8: #{generator_forward.2} parent=1 // loop_exit
      _
    %4168 = vsyncpa [#allocation3], 1
    %s4169 = scalar_lea.sflag [#allocation3], 1
    %4170 = vsyncpa %s4169, 1
    %4171 = vsyncpa [#allocation5], 1
    %4172 = vsyncpa [#allocation8], 1
    %4173 = vsyncpa [#allocation11], 1
    %4174 = vsyncpa [#allocation14], 1
    %4175 = vsyncpa [#allocation17], 1
    %4176 = vsyncpa [#allocation20], 1
    %4177 = vsyncpa [#allocation23], 1
    %4178 = vsyncpa [#allocation26], 1
    %4179 = vsyncpa [#allocation29], 1

</llo_original>
